<compile_context>
chip_gen: v7x
topology: tpu7x:2x2x1
jax: 0.10.0
libtpu: 0.0.40
codegen_flags: <defaults>
</compile_context>

<pallas_src>
import functools

import jax
import jax.numpy as jnp
from jax.experimental import pallas as pl
from jax.experimental.pallas import tpu as pltpu

HIDDEN = 512       # conv1_da output channels (fixed by the module)
_CHUNK = 128       # HIDDEN processed in 4 chunks of 128 inside the kernel
_LANE = 128


def _round_up(v, m):
    return (v + m - 1) // m * m


def _da_head_kernel(x_ref, w1_ref, b1_ref, w2_ref, b2_ref, o_ref):
    # x_ref:  (C, TM)   feature tile: channels on sublanes, pixels on lanes
    # w1_ref: (512, C)  conv1_da weight (bf16 by default), grid-resident
    # b1_ref: (512, 1)  conv1_da bias (f32)
    # w2_ref: (512, 1)  conv2_da weight (f32)
    # b2_ref: (1, 1)    conv2_da bias (SMEM scalar)
    # o_ref:  (1, TM)   lane-dense per-pixel domain-logit tile
    #
    # The 512-wide hidden activation is never fully materialized: HIDDEN is
    # split into 4 chunks of 128 so only a (128, TM) f32 intermediate lives in
    # VMEM, and the 512->1 second conv is a VPU multiply + sublane reduce fused
    # into each chunk (avoids a degenerate (1,512)x(512,TM) MXU matmul).
    x = x_ref[...].astype(w1_ref.dtype)                     # MXU operand dtype
    tm = x.shape[1]
    acc = jnp.zeros((1, tm), jnp.float32)
    for ck in range(HIDDEN // _CHUNK):                      # 4 unrolled chunks
        s = ck * _CHUNK
        t = jnp.dot(w1_ref[s:s + _CHUNK, :], x,
                    preferred_element_type=jnp.float32)     # (128, TM), f32 acc
        t = jnp.maximum(t + b1_ref[s:s + _CHUNK, :], 0.0)   # bias + ReLU (VPU)
        acc = acc + jnp.sum(t * w2_ref[s:s + _CHUNK, :],    # 128 -> 1 reduce
                            axis=0, keepdims=True)
    o_ref[...] = (acc + b2_ref[0, 0]).astype(o_ref.dtype)


def _spec(block_shape, index_map, buffer_count=None):
    """BlockSpec with an optional pipeline-depth hint (safe fallback)."""
    if buffer_count is not None and hasattr(pl, "Buffered"):
        try:
            return pl.BlockSpec(block_shape, index_map,
                                pipeline_mode=pl.Buffered(buffer_count))
        except TypeError:  # BlockSpec without pipeline_mode support
            pass
    return pl.BlockSpec(block_shape, index_map)


def _select_tile(hw, n, c, itemsize, w_item, vmem_cap, x_bufs, w_bufs):
    """Pick the pixel-tile width TM (multiple of 128, or the full tiny dim)."""
    if hw <= _LANE:
        return hw                                   # block == full spatial dim
    # Bytes per output lane (everything that scales with TM) and fixed bytes.
    per_lane = (x_bufs * c * itemsize               # pipelined input tiles
                + c * max(w_item, itemsize)         # in-kernel cast copy of x
                + 2 * _CHUNK * 4                    # (128, TM) f32 t + ReLU tmp
                + 4                                 # (1, TM) f32 accumulator
                + 2 * itemsize)                     # double-buffered out tile
    fixed = w_bufs * (HIDDEN * c * w_item + HIDDEN * 8) + (1 << 20)
    budget = min(vmem_cap // 4, 32 * 1024 * 1024)   # ~16 MiB on v7x, 32 MiB else
    tm_cap = max(_LANE,
                 min(4096, (max(budget - fixed, 0) // per_lane) // _LANE * _LANE))
    # Smallest split count whose 128-rounded tile fits the cap (<=127 pad lanes).
    k = pl.cdiv(_round_up(hw, _LANE), tm_cap)
    # Guarantee a few grid steps so both v7x TCs / the pipeline have work.
    k_max = pl.cdiv(hw, _LANE)
    while n * k < 4 and k < k_max:
        k += 1
    return min(tm_cap, _round_up(pl.cdiv(hw, k), _LANE))


@functools.partial(jax.jit,
                   static_argnames=("tm", "use_pipeline_hints", "precision_f32"))
def da_feature_head(feature, w1, b1, w2, b2, *,
                    tm=None, use_pipeline_hints=True, precision_f32=False):
    """DA_feature_Head forward.

    feature: (N, C, H, W)   (f32 or bf16 — bf16 input halves HBM traffic)
    w1: (512, C)   conv1_da weight (PyTorch (out,in,1,1) squeezed)
    b1: (512,)     conv1_da bias
    w2: (1, 512)   conv2_da weight
    b2: (1,)       conv2_da bias
    precision_f32: keep f32 MXU operands (exact PyTorch conv semantics);
                   default uses bf16 operands with f32 accumulation.
    returns (N, 1, H, W)
    """
    n, c, h, w = feature.shape
    hw = h * w
    itemsize = feature.dtype.itemsize
    w_item = 4 if precision_f32 else 2

    # Generation-aware VMEM budget (v7x: 64 MiB physical; v5e/v6e: 128 MiB).
    try:
        vmem_cap = int(pltpu.get_tpu_info().vmem_capacity_bytes)
    except Exception:
        vmem_cap = 128 * 1024 * 1024
    small_vmem = vmem_cap <= 64 * 1024 * 1024       # v7x-class part

    w_bufs = 1 if use_pipeline_hints else 2
    x_bufs_plan = 3 if (small_vmem and use_pipeline_hints) else 2
    if tm is not None:
        tm_eff = max(_LANE, min(int(tm), _round_up(hw, _LANE)) // _LANE * _LANE) \
            if hw > _LANE else hw
    else:
        tm_eff = _select_tile(hw, n, c, itemsize, w_item,
                              vmem_cap, x_bufs_plan, w_bufs)
    steps = pl.cdiv(hw, tm_eff)
    grid = (n, steps)

    # Extra pipeline depth on the streaming x tile only helps on v7x-class
    # parts (per-tile DMA ~ per-tile MXU time) and only with >=3 pixel steps.
    x_buffer_count = 3 if (small_vmem and use_pipeline_hints and steps >= 3) else None

    # NCHW -> (N, C, H*W): pure reshape (contiguous), no pad, no transpose.
    x3 = feature.reshape(n, c, hw)

    mxu_dtype = jnp.float32 if precision_f32 else jnp.bfloat16
    w1b = w1.astype(mxu_dtype)                        # (512, C) MXU operand
    b1c = b1.reshape(HIDDEN, 1).astype(jnp.float32)   # (512, 1)
    w2c = w2.reshape(HIDDEN, 1).astype(jnp.float32)   # (512, 1)
    b2c = b2.reshape(1, 1).astype(jnp.float32)        # (1, 1) -> SMEM scalar

    # VMEM accounting (incl. in-kernel cast copy of x and the chunk
    # intermediate) + 25% margin; always set the limit, capped for v7x headroom.
    x_bufs_used = x_buffer_count if x_buffer_count is not None else 2
    vmem_need = (x_bufs_used * c * tm_eff * itemsize
                 + c * tm_eff * max(w_item, itemsize)
                 + w_bufs * (HIDDEN * c * w_item + HIDDEN * 8)
                 + 2 * _CHUNK * tm_eff * 4
                 + tm_eff * 4
                 + 2 * tm_eff * itemsize)
    vmem_limit = int(min(vmem_cap * 3 // 4,
                         max(vmem_need * 5 // 4 + (1 << 20), 32 * 1024 * 1024)))

    weight_bc = 1 if use_pipeline_hints else None
    out = pl.pallas_call(
        _da_head_kernel,
        out_shape=jax.ShapeDtypeStruct((n, 1, hw), feature.dtype),
        grid=grid,
        in_specs=[
            # x tile: ragged last block is fine (strictly per-column op).
            _spec((None, c, tm_eff), lambda b, i: (b, 0, i),
                  buffer_count=x_buffer_count),
            _spec((HIDDEN, c), lambda b, i: (0, 0), buffer_count=weight_bc),
            _spec((HIDDEN, 1), lambda b, i: (0, 0), buffer_count=weight_bc),
            _spec((HIDDEN, 1), lambda b, i: (0, 0), buffer_count=weight_bc),
            pl.BlockSpec(memory_space=pltpu.MemorySpace.SMEM),       # b2 scalar
        ],
        out_specs=pl.BlockSpec((None, 1, tm_eff), lambda b, i: (b, 0, i)),
        compiler_params=pltpu.CompilerParams(
            dimension_semantics=("parallel", "parallel"),
            vmem_limit_bytes=vmem_limit),
        cost_estimate=pl.CostEstimate(
            flops=2 * n * hw * c * HIDDEN + 3 * n * hw * HIDDEN,
            transcendentals=0,
            bytes_accessed=(n * hw * c * itemsize + HIDDEN * c * w_item
                            + HIDDEN * 8 + n * hw * itemsize)),
    )(x3, w1b, b1c, w2c, b2c)

    return out.reshape(n, 1, h, w)


def init_params(key, in_channels):
    """Mirror PyTorch init: weights ~ Normal(0, 0.001), biases = 0."""
    k1, k2 = jax.random.split(key)
    w1 = jax.random.normal(k1, (HIDDEN, in_channels), jnp.float32) * 0.001
    b1 = jnp.zeros((HIDDEN,), jnp.float32)
    w2 = jax.random.normal(k2, (1, HIDDEN), jnp.float32) * 0.001
    b2 = jnp.zeros((1,), jnp.float32)
    return w1, b1, w2, b2


if __name__ == "__main__":
    key = jax.random.PRNGKey(0)
    k_feat, k_par = jax.random.split(key)

    N, C, H, W = 2, 4, 16, 16
    feature = jax.random.normal(k_feat, (N, C, H, W), jnp.float32)
    w1, b1, w2, b2 = init_params(k_par, C)

    try:
        out = jax.block_until_ready(da_feature_head(feature, w1, b1, w2, b2))
    except Exception:
        # Fallback: disable the optional pipeline-depth hints (Buffered(1/3))
        # if this jax/Mosaic build rejects them.
        out = jax.block_until_ready(
            da_feature_head(feature, w1, b1, w2, b2, use_pipeline_hints=False))
    assert out.shape == (N, 1, H, W)

    # Tight reference mirroring the kernel's bf16 MXU operands (f32 accumulate).
    xr = feature.astype(jnp.bfloat16).astype(jnp.float32)
    w1r = w1.astype(jnp.bfloat16).astype(jnp.float32)
    t_ref = jnp.maximum(jnp.einsum("oc,nchw->nohw", w1r, xr)
                        + b1[None, :, None, None], 0.0)
    y_ref = jnp.einsum("os,nshw->nohw", w2, t_ref) + b2[None, :, None, None]
    assert jnp.allclose(out, y_ref, atol=1e-6, rtol=1e-3)

    # Looser check against the pure-f32 module semantics (bf16 operand rounding).
    t32 = jnp.maximum(jnp.einsum("oc,nchw->nohw", w1, feature)
                      + b1[None, :, None, None], 0.0)
    y32 = jnp.einsum("os,nshw->nohw", w2, t32) + b2[None, :, None, None]
    assert jnp.allclose(out, y32, atol=1e-5, rtol=5e-2)

    print("KERNEL_OK")
</pallas_src>

<mosaic_0001>
module attributes {stable_mosaic.version = 11 : i64} {
  func.func @_da_head_kernel(%arg0: i32, %arg1: i32, %arg2: memref<1x4x128xf32, #tpu.memory_space<vmem>>, %arg3: memref<512x4xbf16, #tpu.memory_space<vmem>>, %arg4: memref<512x1xf32, #tpu.memory_space<vmem>>, %arg5: memref<512x1xf32, #tpu.memory_space<vmem>>, %arg6: memref<1x1xf32, #tpu.memory_space<smem>>, %arg7: memref<1x1x128xf32, #tpu.memory_space<vmem>>) attributes {dimension_semantics = [#tpu.dimension_semantics<parallel>, #tpu.dimension_semantics<parallel>], iteration_bounds = array<i64: 2, 2>, scalar_prefetch = 0 : i64, scratch_operands = 0 : i64, tpu.core_type = #tpu.core_type<tc>, window_params = [{transform_indices = @transform_0, window_bounds = array<i64: 1, 4, 128>}, {pipeline_mode = #tpu.pipeline_mode<synchronous>, transform_indices = @transform_1, window_bounds = array<i64: 512, 4>}, {pipeline_mode = #tpu.pipeline_mode<synchronous>, transform_indices = @transform_2, window_bounds = array<i64: 512, 1>}, {pipeline_mode = #tpu.pipeline_mode<synchronous>, transform_indices = @transform_3, window_bounds = array<i64: 512, 1>}, {transform_indices = @transform_4, window_bounds = array<i64: 1, 1>}, {transform_indices = @transform_5, window_bounds = array<i64: 1, 1, 128>}]} {
    %c0 = arith.constant 0 : index
    %c0_0 = arith.constant 0 : index
    %c0_1 = arith.constant 0 : index
    %0 = vector.load %arg2[%c0, %c0_0, %c0_1] : memref<1x4x128xf32, #tpu.memory_space<vmem>>, vector<1x4x128xf32>
    %1 = vector.shape_cast %0 : vector<1x4x128xf32> to vector<4x128xf32>
    %2 = arith.truncf %1 : vector<4x128xf32> to vector<4x128xbf16>
    %cst = arith.constant 0.000000e+00 : f32
    %3 = vector.broadcast %cst : f32 to vector<1x128xf32>
    %c0_2 = arith.constant 0 : index
    %c0_3 = arith.constant 0 : index
    %4 = vector.load %arg3[%c0_2, %c0_3] : memref<512x4xbf16, #tpu.memory_space<vmem>>, vector<128x4xbf16>
    %cst_4 = arith.constant dense<0.000000e+00> : vector<128x128xf32>
    %5 = tpu.matmul %4, %2, %cst_4 {dimension_numbers = #tpu.dot_dimension_numbers<[1], [0], [0], [1], [0, 0, 1, 1], [], []>} : vector<128x4xbf16>, vector<4x128xbf16>, vector<128x128xf32> -> vector<128x128xf32>
    %c0_5 = arith.constant 0 : index
    %c0_6 = arith.constant 0 : index
    %6 = vector.load %arg4[%c0_5, %c0_6] : memref<512x1xf32, #tpu.memory_space<vmem>>, vector<128x1xf32>
    %7 = vector.broadcast %6 : vector<128x1xf32> to vector<128x128xf32>
    %8 = arith.addf %5, %7 : vector<128x128xf32>
    %cst_7 = arith.constant 0.000000e+00 : f32
    %9 = vector.broadcast %cst_7 : f32 to vector<128x128xf32>
    %10 = arith.maximumf %8, %9 : vector<128x128xf32>
    %c0_8 = arith.constant 0 : index
    %c0_9 = arith.constant 0 : index
    %11 = vector.load %arg5[%c0_8, %c0_9] : memref<512x1xf32, #tpu.memory_space<vmem>>, vector<128x1xf32>
    %12 = vector.broadcast %11 : vector<128x1xf32> to vector<128x128xf32>
    %13 = arith.mulf %10, %12 : vector<128x128xf32>
    %cst_10 = arith.constant dense<0.000000e+00> : vector<128xf32>
    %14 = vector.multi_reduction <add>, %13, %cst_10 [0] : vector<128x128xf32> to vector<128xf32>
    %15 = vector.shape_cast %14 : vector<128xf32> to vector<1x128xf32>
    %16 = arith.addf %3, %15 : vector<1x128xf32>
    %c128 = arith.constant 128 : index
    %c0_11 = arith.constant 0 : index
    %17 = vector.load %arg3[%c128, %c0_11] : memref<512x4xbf16, #tpu.memory_space<vmem>>, vector<128x4xbf16>
    %cst_12 = arith.constant dense<0.000000e+00> : vector<128x128xf32>
    %18 = tpu.matmul %17, %2, %cst_12 {dimension_numbers = #tpu.dot_dimension_numbers<[1], [0], [0], [1], [0, 0, 1, 1], [], []>} : vector<128x4xbf16>, vector<4x128xbf16>, vector<128x128xf32> -> vector<128x128xf32>
    %c128_13 = arith.constant 128 : index
    %c0_14 = arith.constant 0 : index
    %19 = vector.load %arg4[%c128_13, %c0_14] : memref<512x1xf32, #tpu.memory_space<vmem>>, vector<128x1xf32>
    %20 = vector.broadcast %19 : vector<128x1xf32> to vector<128x128xf32>
    %21 = arith.addf %18, %20 : vector<128x128xf32>
    %cst_15 = arith.constant 0.000000e+00 : f32
    %22 = vector.broadcast %cst_15 : f32 to vector<128x128xf32>
    %23 = arith.maximumf %21, %22 : vector<128x128xf32>
    %c128_16 = arith.constant 128 : index
    %c0_17 = arith.constant 0 : index
    %24 = vector.load %arg5[%c128_16, %c0_17] : memref<512x1xf32, #tpu.memory_space<vmem>>, vector<128x1xf32>
    %25 = vector.broadcast %24 : vector<128x1xf32> to vector<128x128xf32>
    %26 = arith.mulf %23, %25 : vector<128x128xf32>
    %cst_18 = arith.constant dense<0.000000e+00> : vector<128xf32>
    %27 = vector.multi_reduction <add>, %26, %cst_18 [0] : vector<128x128xf32> to vector<128xf32>
    %28 = vector.shape_cast %27 : vector<128xf32> to vector<1x128xf32>
    %29 = arith.addf %16, %28 : vector<1x128xf32>
    %c256 = arith.constant 256 : index
    %c0_19 = arith.constant 0 : index
    %30 = vector.load %arg3[%c256, %c0_19] : memref<512x4xbf16, #tpu.memory_space<vmem>>, vector<128x4xbf16>
    %cst_20 = arith.constant dense<0.000000e+00> : vector<128x128xf32>
    %31 = tpu.matmul %30, %2, %cst_20 {dimension_numbers = #tpu.dot_dimension_numbers<[1], [0], [0], [1], [0, 0, 1, 1], [], []>} : vector<128x4xbf16>, vector<4x128xbf16>, vector<128x128xf32> -> vector<128x128xf32>
    %c256_21 = arith.constant 256 : index
    %c0_22 = arith.constant 0 : index
    %32 = vector.load %arg4[%c256_21, %c0_22] : memref<512x1xf32, #tpu.memory_space<vmem>>, vector<128x1xf32>
    %33 = vector.broadcast %32 : vector<128x1xf32> to vector<128x128xf32>
    %34 = arith.addf %31, %33 : vector<128x128xf32>
    %cst_23 = arith.constant 0.000000e+00 : f32
    %35 = vector.broadcast %cst_23 : f32 to vector<128x128xf32>
    %36 = arith.maximumf %34, %35 : vector<128x128xf32>
    %c256_24 = arith.constant 256 : index
    %c0_25 = arith.constant 0 : index
    %37 = vector.load %arg5[%c256_24, %c0_25] : memref<512x1xf32, #tpu.memory_space<vmem>>, vector<128x1xf32>
    %38 = vector.broadcast %37 : vector<128x1xf32> to vector<128x128xf32>
    %39 = arith.mulf %36, %38 : vector<128x128xf32>
    %cst_26 = arith.constant dense<0.000000e+00> : vector<128xf32>
    %40 = vector.multi_reduction <add>, %39, %cst_26 [0] : vector<128x128xf32> to vector<128xf32>
    %41 = vector.shape_cast %40 : vector<128xf32> to vector<1x128xf32>
    %42 = arith.addf %29, %41 : vector<1x128xf32>
    %c384 = arith.constant 384 : index
    %c0_27 = arith.constant 0 : index
    %43 = vector.load %arg3[%c384, %c0_27] : memref<512x4xbf16, #tpu.memory_space<vmem>>, vector<128x4xbf16>
    %cst_28 = arith.constant dense<0.000000e+00> : vector<128x128xf32>
    %44 = tpu.matmul %43, %2, %cst_28 {dimension_numbers = #tpu.dot_dimension_numbers<[1], [0], [0], [1], [0, 0, 1, 1], [], []>} : vector<128x4xbf16>, vector<4x128xbf16>, vector<128x128xf32> -> vector<128x128xf32>
    %c384_29 = arith.constant 384 : index
    %c0_30 = arith.constant 0 : index
    %45 = vector.load %arg4[%c384_29, %c0_30] : memref<512x1xf32, #tpu.memory_space<vmem>>, vector<128x1xf32>
    %46 = vector.broadcast %45 : vector<128x1xf32> to vector<128x128xf32>
    %47 = arith.addf %44, %46 : vector<128x128xf32>
    %cst_31 = arith.constant 0.000000e+00 : f32
    %48 = vector.broadcast %cst_31 : f32 to vector<128x128xf32>
    %49 = arith.maximumf %47, %48 : vector<128x128xf32>
    %c384_32 = arith.constant 384 : index
    %c0_33 = arith.constant 0 : index
    %50 = vector.load %arg5[%c384_32, %c0_33] : memref<512x1xf32, #tpu.memory_space<vmem>>, vector<128x1xf32>
    %51 = vector.broadcast %50 : vector<128x1xf32> to vector<128x128xf32>
    %52 = arith.mulf %49, %51 : vector<128x128xf32>
    %cst_34 = arith.constant dense<0.000000e+00> : vector<128xf32>
    %53 = vector.multi_reduction <add>, %52, %cst_34 [0] : vector<128x128xf32> to vector<128xf32>
    %54 = vector.shape_cast %53 : vector<128xf32> to vector<1x128xf32>
    %55 = arith.addf %42, %54 : vector<1x128xf32>
    %c0_35 = arith.constant 0 : index
    %c0_36 = arith.constant 0 : index
    %56 = memref.load %arg6[%c0_35, %c0_36] : memref<1x1xf32, #tpu.memory_space<smem>>
    %57 = vector.broadcast %56 : f32 to vector<1x128xf32>
    %58 = arith.addf %55, %57 : vector<1x128xf32>
    %c0_37 = arith.constant 0 : index
    %c0_38 = arith.constant 0 : index
    %c0_39 = arith.constant 0 : index
    %59 = vector.load %arg7[%c0_37, %c0_38, %c0_39] : memref<1x1x128xf32, #tpu.memory_space<vmem>>, vector<1x1x128xf32>
    %60 = vector.shape_cast %59 : vector<1x1x128xf32> to vector<1x128xf32>
    %61 = vector.shape_cast %58 : vector<1x128xf32> to vector<1x1x128xf32>
    tpu.vector_store %arg7[%c0_37, %c0_38, %c0_39], %61 {strides = array<i32>} : memref<1x1x128xf32, #tpu.memory_space<vmem>>, vector<1x1x128xf32>,
    return
  }
  func.func @transform_0(%arg0: i32, %arg1: i32) -> (i32, i32, i32) {
    %c0_i32 = arith.constant 0 : i32
    %c0_i32_0 = arith.constant 0 : i32
    return %arg0, %c0_i32, %arg1 : i32, i32, i32
  }
  func.func @transform_1(%arg0: i32, %arg1: i32) -> (i32, i32) {
    %c0_i32 = arith.constant 0 : i32
    %c0_i32_0 = arith.constant 0 : i32
    %c0_i32_1 = arith.constant 0 : i32
    return %c0_i32, %c0_i32_0 : i32, i32
  }
  func.func @transform_2(%arg0: i32, %arg1: i32) -> (i32, i32) {
    %c0_i32 = arith.constant 0 : i32
    %c0_i32_0 = arith.constant 0 : i32
    %c0_i32_1 = arith.constant 0 : i32
    return %c0_i32, %c0_i32_0 : i32, i32
  }
  func.func @transform_3(%arg0: i32, %arg1: i32) -> (i32, i32) {
    %c0_i32 = arith.constant 0 : i32
    %c0_i32_0 = arith.constant 0 : i32
    %c0_i32_1 = arith.constant 0 : i32
    return %c0_i32, %c0_i32_0 : i32, i32
  }
  func.func @transform_4(%arg0: i32, %arg1: i32) -> (i32, i32) {
    %c0_i32 = arith.constant 0 : i32
    %c0_i32_0 = arith.constant 0 : i32
    %c0_i32_1 = arith.constant 0 : i32
    return %c0_i32, %c0_i32_0 : i32, i32
  }
  func.func @transform_5(%arg0: i32, %arg1: i32) -> (i32, i32, i32) {
    %c0_i32 = arith.constant 0 : i32
    %c0_i32_0 = arith.constant 0 : i32
    return %arg0, %c0_i32, %arg1 : i32, i32, i32
  }
}

module attributes {stable_mosaic.version = 11 : i64} {
  func.func @_da_head_kernel(%arg0: i32, %arg1: i32, %arg2: memref<1x4x128xf32, #tpu.memory_space<vmem>>, %arg3: memref<512x4xbf16, #tpu.memory_space<vmem>>, %arg4: memref<512x1xf32, #tpu.memory_space<vmem>>, %arg5: memref<512x1xf32, #tpu.memory_space<vmem>>, %arg6: memref<1x1xf32, #tpu.memory_space<smem>>, %arg7: memref<1x1x128xf32, #tpu.memory_space<vmem>>) attributes {dimension_semantics = [#tpu.dimension_semantics<parallel>, #tpu.dimension_semantics<parallel>], iteration_bounds = array<i64: 2, 2>, scalar_prefetch = 0 : i64, scratch_operands = 0 : i64, tpu.core_type = #tpu.core_type<tc>, window_params = [{transform_indices = @transform_0, window_bounds = array<i64: 1, 4, 128>}, {pipeline_mode = #tpu.pipeline_mode<synchronous>, transform_indices = @transform_1, window_bounds = array<i64: 512, 4>}, {pipeline_mode = #tpu.pipeline_mode<synchronous>, transform_indices = @transform_2, window_bounds = array<i64: 512, 1>}, {pipeline_mode = #tpu.pipeline_mode<synchronous>, transform_indices = @transform_3, window_bounds = array<i64: 512, 1>}, {transform_indices = @transform_4, window_bounds = array<i64: 1, 1>}, {transform_indices = @transform_5, window_bounds = array<i64: 1, 1, 128>}]} {
    %c0 = arith.constant 0 : index
    %c0_0 = arith.constant 0 : index
    %c0_1 = arith.constant 0 : index
    %0 = vector.load %arg2[%c0, %c0_0, %c0_1] : memref<1x4x128xf32, #tpu.memory_space<vmem>>, vector<1x4x128xf32>
    %1 = vector.shape_cast %0 : vector<1x4x128xf32> to vector<4x128xf32>
    %2 = arith.truncf %1 : vector<4x128xf32> to vector<4x128xbf16>
    %cst = arith.constant 0.000000e+00 : f32
    %3 = vector.broadcast %cst : f32 to vector<1x128xf32>
    %c0_2 = arith.constant 0 : index
    %c0_3 = arith.constant 0 : index
    %4 = vector.load %arg3[%c0_2, %c0_3] : memref<512x4xbf16, #tpu.memory_space<vmem>>, vector<128x4xbf16>
    %cst_4 = arith.constant dense<0.000000e+00> : vector<128x128xf32>
    %5 = tpu.matmul %4, %2, %cst_4 {dimension_numbers = #tpu.dot_dimension_numbers<[1], [0], [0], [1], [0, 0, 1, 1], [], []>} : vector<128x4xbf16>, vector<4x128xbf16>, vector<128x128xf32> -> vector<128x128xf32>
    %c0_5 = arith.constant 0 : index
    %c0_6 = arith.constant 0 : index
    %6 = vector.load %arg4[%c0_5, %c0_6] : memref<512x1xf32, #tpu.memory_space<vmem>>, vector<128x1xf32>
    %7 = vector.broadcast %6 : vector<128x1xf32> to vector<128x128xf32>
    %8 = arith.addf %5, %7 : vector<128x128xf32>
    %cst_7 = arith.constant 0.000000e+00 : f32
    %9 = vector.broadcast %cst_7 : f32 to vector<128x128xf32>
    %10 = arith.maximumf %8, %9 : vector<128x128xf32>
    %c0_8 = arith.constant 0 : index
    %c0_9 = arith.constant 0 : index
    %11 = vector.load %arg5[%c0_8, %c0_9] : memref<512x1xf32, #tpu.memory_space<vmem>>, vector<128x1xf32>
    %12 = vector.broadcast %11 : vector<128x1xf32> to vector<128x128xf32>
    %13 = arith.mulf %10, %12 : vector<128x128xf32>
    %cst_10 = arith.constant dense<0.000000e+00> : vector<128xf32>
    %14 = vector.multi_reduction <add>, %13, %cst_10 [0] : vector<128x128xf32> to vector<128xf32>
    %15 = vector.shape_cast %14 : vector<128xf32> to vector<1x128xf32>
    %16 = arith.addf %3, %15 : vector<1x128xf32>
    %c128 = arith.constant 128 : index
    %c0_11 = arith.constant 0 : index
    %17 = vector.load %arg3[%c128, %c0_11] : memref<512x4xbf16, #tpu.memory_space<vmem>>, vector<128x4xbf16>
    %cst_12 = arith.constant dense<0.000000e+00> : vector<128x128xf32>
    %18 = tpu.matmul %17, %2, %cst_12 {dimension_numbers = #tpu.dot_dimension_numbers<[1], [0], [0], [1], [0, 0, 1, 1], [], []>} : vector<128x4xbf16>, vector<4x128xbf16>, vector<128x128xf32> -> vector<128x128xf32>
    %c128_13 = arith.constant 128 : index
    %c0_14 = arith.constant 0 : index
    %19 = vector.load %arg4[%c128_13, %c0_14] : memref<512x1xf32, #tpu.memory_space<vmem>>, vector<128x1xf32>
    %20 = vector.broadcast %19 : vector<128x1xf32> to vector<128x128xf32>
    %21 = arith.addf %18, %20 : vector<128x128xf32>
    %cst_15 = arith.constant 0.000000e+00 : f32
    %22 = vector.broadcast %cst_15 : f32 to vector<128x128xf32>
    %23 = arith.maximumf %21, %22 : vector<128x128xf32>
    %c128_16 = arith.constant 128 : index
    %c0_17 = arith.constant 0 : index
    %24 = vector.load %arg5[%c128_16, %c0_17] : memref<512x1xf32, #tpu.memory_space<vmem>>, vector<128x1xf32>
    %25 = vector.broadcast %24 : vector<128x1xf32> to vector<128x128xf32>
    %26 = arith.mulf %23, %25 : vector<128x128xf32>
    %cst_18 = arith.constant dense<0.000000e+00> : vector<128xf32>
    %27 = vector.multi_reduction <add>, %26, %cst_18 [0] : vector<128x128xf32> to vector<128xf32>
    %28 = vector.shape_cast %27 : vector<128xf32> to vector<1x128xf32>
    %29 = arith.addf %16, %28 : vector<1x128xf32>
    %c256 = arith.constant 256 : index
    %c0_19 = arith.constant 0 : index
    %30 = vector.load %arg3[%c256, %c0_19] : memref<512x4xbf16, #tpu.memory_space<vmem>>, vector<128x4xbf16>
    %cst_20 = arith.constant dense<0.000000e+00> : vector<128x128xf32>
    %31 = tpu.matmul %30, %2, %cst_20 {dimension_numbers = #tpu.dot_dimension_numbers<[1], [0], [0], [1], [0, 0, 1, 1], [], []>} : vector<128x4xbf16>, vector<4x128xbf16>, vector<128x128xf32> -> vector<128x128xf32>
    %c256_21 = arith.constant 256 : index
    %c0_22 = arith.constant 0 : index
    %32 = vector.load %arg4[%c256_21, %c0_22] : memref<512x1xf32, #tpu.memory_space<vmem>>, vector<128x1xf32>
    %33 = vector.broadcast %32 : vector<128x1xf32> to vector<128x128xf32>
    %34 = arith.addf %31, %33 : vector<128x128xf32>
    %cst_23 = arith.constant 0.000000e+00 : f32
    %35 = vector.broadcast %cst_23 : f32 to vector<128x128xf32>
    %36 = arith.maximumf %34, %35 : vector<128x128xf32>
    %c256_24 = arith.constant 256 : index
    %c0_25 = arith.constant 0 : index
    %37 = vector.load %arg5[%c256_24, %c0_25] : memref<512x1xf32, #tpu.memory_space<vmem>>, vector<128x1xf32>
    %38 = vector.broadcast %37 : vector<128x1xf32> to vector<128x128xf32>
    %39 = arith.mulf %36, %38 : vector<128x128xf32>
    %cst_26 = arith.constant dense<0.000000e+00> : vector<128xf32>
    %40 = vector.multi_reduction <add>, %39, %cst_26 [0] : vector<128x128xf32> to vector<128xf32>
    %41 = vector.shape_cast %40 : vector<128xf32> to vector<1x128xf32>
    %42 = arith.addf %29, %41 : vector<1x128xf32>
    %c384 = arith.constant 384 : index
    %c0_27 = arith.constant 0 : index
    %43 = vector.load %arg3[%c384, %c0_27] : memref<512x4xbf16, #tpu.memory_space<vmem>>, vector<128x4xbf16>
    %cst_28 = arith.constant dense<0.000000e+00> : vector<128x128xf32>
    %44 = tpu.matmul %43, %2, %cst_28 {dimension_numbers = #tpu.dot_dimension_numbers<[1], [0], [0], [1], [0, 0, 1, 1], [], []>} : vector<128x4xbf16>, vector<4x128xbf16>, vector<128x128xf32> -> vector<128x128xf32>
    %c384_29 = arith.constant 384 : index
    %c0_30 = arith.constant 0 : index
    %45 = vector.load %arg4[%c384_29, %c0_30] : memref<512x1xf32, #tpu.memory_space<vmem>>, vector<128x1xf32>
    %46 = vector.broadcast %45 : vector<128x1xf32> to vector<128x128xf32>
    %47 = arith.addf %44, %46 : vector<128x128xf32>
    %cst_31 = arith.constant 0.000000e+00 : f32
    %48 = vector.broadcast %cst_31 : f32 to vector<128x128xf32>
    %49 = arith.maximumf %47, %48 : vector<128x128xf32>
    %c384_32 = arith.constant 384 : index
    %c0_33 = arith.constant 0 : index
    %50 = vector.load %arg5[%c384_32, %c0_33] : memref<512x1xf32, #tpu.memory_space<vmem>>, vector<128x1xf32>
    %51 = vector.broadcast %50 : vector<128x1xf32> to vector<128x128xf32>
    %52 = arith.mulf %49, %51 : vector<128x128xf32>
    %cst_34 = arith.constant dense<0.000000e+00> : vector<128xf32>
    %53 = vector.multi_reduction <add>, %52, %cst_34 [0] : vector<128x128xf32> to vector<128xf32>
    %54 = vector.shape_cast %53 : vector<128xf32> to vector<1x128xf32>
    %55 = arith.addf %42, %54 : vector<1x128xf32>
    %c0_35 = arith.constant 0 : index
    %c0_36 = arith.constant 0 : index
    %56 = memref.load %arg6[%c0_35, %c0_36] : memref<1x1xf32, #tpu.memory_space<smem>>
    %57 = vector.broadcast %56 : f32 to vector<1x128xf32>
    %58 = arith.addf %55, %57 : vector<1x128xf32>
    %c0_37 = arith.constant 0 : index
    %c0_38 = arith.constant 0 : index
    %c0_39 = arith.constant 0 : index
    %59 = vector.load %arg7[%c0_37, %c0_38, %c0_39] : memref<1x1x128xf32, #tpu.memory_space<vmem>>, vector<1x1x128xf32>
    %60 = vector.shape_cast %59 : vector<1x1x128xf32> to vector<1x128xf32>
    %61 = vector.shape_cast %58 : vector<1x128xf32> to vector<1x1x128xf32>
    tpu.vector_store %arg7[%c0_37, %c0_38, %c0_39], %61 {strides = array<i32>} : memref<1x1x128xf32, #tpu.memory_space<vmem>>, vector<1x1x128xf32>,
    return
  }
  func.func @transform_0(%arg0: i32, %arg1: i32) -> (i32, i32, i32) {
    %c0_i32 = arith.constant 0 : i32
    %c0_i32_0 = arith.constant 0 : i32
    return %arg0, %c0_i32, %arg1 : i32, i32, i32
  }
  func.func @transform_1(%arg0: i32, %arg1: i32) -> (i32, i32) {
    %c0_i32 = arith.constant 0 : i32
    %c0_i32_0 = arith.constant 0 : i32
    %c0_i32_1 = arith.constant 0 : i32
    return %c0_i32, %c0_i32_0 : i32, i32
  }
  func.func @transform_2(%arg0: i32, %arg1: i32) -> (i32, i32) {
    %c0_i32 = arith.constant 0 : i32
    %c0_i32_0 = arith.constant 0 : i32
    %c0_i32_1 = arith.constant 0 : i32
    return %c0_i32, %c0_i32_0 : i32, i32
  }
  func.func @transform_3(%arg0: i32, %arg1: i32) -> (i32, i32) {
    %c0_i32 = arith.constant 0 : i32
    %c0_i32_0 = arith.constant 0 : i32
    %c0_i32_1 = arith.constant 0 : i32
    return %c0_i32, %c0_i32_0 : i32, i32
  }
  func.func @transform_4(%arg0: i32, %arg1: i32) -> (i32, i32) {
    %c0_i32 = arith.constant 0 : i32
    %c0_i32_0 = arith.constant 0 : i32
    %c0_i32_1 = arith.constant 0 : i32
    return %c0_i32, %c0_i32_0 : i32, i32
  }
  func.func @transform_5(%arg0: i32, %arg1: i32) -> (i32, i32, i32) {
    %c0_i32 = arith.constant 0 : i32
    %c0_i32_0 = arith.constant 0 : i32
    return %arg0, %c0_i32, %arg1 : i32, i32, i32
  }
}

</mosaic_0001>

<llo_original>
// kernel: da_feature_head.1
$region0: #{da_feature_head.1}
  #allocation0 [shape = 'u32[]', space=smem, size = 0x4, offset = 0x4, fixed_abs, tag = 'smem constant byte address 0x4 - core index']
  #allocation1 [shape = 'u32[144,128]{1,0:T(1,128)}', space=vmem, size = 0x12000, scoped, tag = 'internal scratch']
  #allocation2 [shape = 'f32[1,1]{1,0:T(1,128)S(6)}', space=smem, size = 0x200, scoped, tag = 'scoped memory for da_feature_head.1']
  %s0 = inlined_call_operand.vmem [shape: f32[2,4,256], index: 0, kind: input, shape index: {}]
  %s1 = inlined_call_operand.vmem [shape: bf16[512,4], index: 1, kind: input, shape index: {}]
  %s2 = inlined_call_operand.vmem [shape: f32[512,1], index: 2, kind: input, shape index: {}]
  %s3 = inlined_call_operand.vmem [shape: f32[512,1], index: 3, kind: input, shape index: {}]
  %s4 = inlined_call_operand.<no memory space> [shape: f32[1,1], index: 4, kind: input, shape index: {}]
  %s5 = inlined_call_operand.vmem [shape: f32[2,1,256], index: 5, kind: output, shape index: {}]
  %s6 = sld [smem:[#allocation0]]
  $region53: #{da_feature_head.1} parent=0
    _
  %s8 = ssub.s32 1, %s6
  %s9 = scalar_select 0, %s8, %s6
  %10 = sst [smem:[#allocation2]] %s4
  loop: start=0, step=1, limit=6
  $region2: #{da_feature_head.1} parent=0 // loop_pre_header
    _
  $region3: #{da_feature_head.1} parent=0 // loop_header
    %s12 = sphi 0, %s16
    %p13 = scmp.ge.s32.totalorder %s12, 6
    %s19 = sphi 0, %s31
    %s20 = sphi 0, %s27
    %s21 = sphi 0, %s19
    %s22 = sphi 0, %s20
    %s23 = sphi 0, %s21
    %s24 = sphi 0, %s22
    %s36 = sphi 0, %s38
    %s39 = sphi 0, %s36
    %s40 = sphi 0, %s39
    %s56 = sphi 0, %s40
    %s60 = sphi 0, %s60
    %s62 = sphi 0, %s60
    %s63 = sphi 0, %s62
    %s77 = sphi 0, %s63
    %s81 = sphi 0, %s81
    %s83 = sphi 0, %s81
    %s84 = sphi 0, %s83
    %s98 = sphi 0, %s84
    %s102 = sphi 0, %s102
    %s104 = sphi 0, %s102
    %s105 = sphi 0, %s104
    %s119 = sphi 0, %s105
    %s123 = sphi 0, %s123
    %s125 = sphi 0, %s123
    %s126 = sphi 0, %s125
    %s140 = sphi 0, %s126
    %s148 = sphi 0, %s150
    %s151 = sphi 0, %s148
    %s152 = sphi 0, %s151
    %s168 = sphi 0, %s152
  $region4: #{da_feature_head.1} parent=0 // loop_header_branch
    %15 = sbr.rel (%p13) target = $region8
  $region5: #{da_feature_head.1} parent=0 // loop_body
    %s17 = ssub.s32 %s12, 1
    %s18 = ssub.s32 %s12, 2
    %s25 = sadd.s32 1, %s20
    %p26 = scmp.ge.s32.totalorder %s25, 2
    %s27 = scalar_select %p26, 0, %s25
    %s28 = sadd.s32 1, %s19
    %s29 = scalar_select %p26, %s28, %s19
    %p30 = scmp.ge.s32.totalorder %s29, 2
    %s31 = scalar_select %p30, 0, %s29
    %s32 = ssub.s32 %s19, %s31
    %s33 = ssub.s32 %s20, %s27
    %s34 = sor.u32 %s32, %s33
    %p35 = scmp.eq.s32.totalorder %s34, 0
    %s37 = sadd.s32 %s36, 1
    %s38 = scalar_select %p35, %s36, %s37
    %p41 = pneg %p35
    %p42 = scmp.eq.s32.totalorder %s12, 3
    %p43 = por %p41, %p42
    %p44 = scmp.ne.s32.totalorder %s36, %s39
    %p45 = scmp.eq.s32.totalorder %s12, 0
    %p46 = por %p44, %p45
    %p47 = scmp.ne.s32.totalorder %s36, %s39
    %p48 = scmp.eq.s32.totalorder %s17, 3
    %p49 = por %p47, %p48
    %p50 = scmp.ne.s32.totalorder %s39, %s40
    %p51 = scmp.eq.s32.totalorder %s17, 0
    %p52 = por %p50, %p51
    %p53 = scmp.ne.s32.totalorder %s39, %s40
    %p54 = scmp.eq.s32.totalorder %s18, 3
    %p55 = por %p53, %p54
    %p57 = scmp.ne.s32.totalorder %s40, %s56
    %p58 = scmp.eq.s32.totalorder %s18, 0
    %p59 = por %p57, %p58
    %s61 = sadd.s32 %s60, 1
    %p64 = scmp.eq.s32.totalorder %s12, 3
    %p65 = scmp.ne.s32.totalorder %s60, %s62
    %p66 = scmp.eq.s32.totalorder %s12, 0
    %p67 = por %p65, %p66
    %p68 = scmp.ne.s32.totalorder %s60, %s62
    %p69 = scmp.eq.s32.totalorder %s17, 3
    %p70 = por %p68, %p69
    %p71 = scmp.ne.s32.totalorder %s62, %s63
    %p72 = scmp.eq.s32.totalorder %s17, 0
    %p73 = por %p71, %p72
    %p74 = scmp.ne.s32.totalorder %s62, %s63
    %p75 = scmp.eq.s32.totalorder %s18, 3
    %p76 = por %p74, %p75
    %p78 = scmp.ne.s32.totalorder %s63, %s77
    %p79 = scmp.eq.s32.totalorder %s18, 0
    %p80 = por %p78, %p79
    %s82 = sadd.s32 %s81, 1
    %p85 = scmp.eq.s32.totalorder %s12, 3
    %p86 = scmp.ne.s32.totalorder %s81, %s83
    %p87 = scmp.eq.s32.totalorder %s12, 0
    %p88 = por %p86, %p87
    %p89 = scmp.ne.s32.totalorder %s81, %s83
    %p90 = scmp.eq.s32.totalorder %s17, 3
    %p91 = por %p89, %p90
    %p92 = scmp.ne.s32.totalorder %s83, %s84
    %p93 = scmp.eq.s32.totalorder %s17, 0
    %p94 = por %p92, %p93
    %p95 = scmp.ne.s32.totalorder %s83, %s84
    %p96 = scmp.eq.s32.totalorder %s18, 3
    %p97 = por %p95, %p96
    %p99 = scmp.ne.s32.totalorder %s84, %s98
    %p100 = scmp.eq.s32.totalorder %s18, 0
    %p101 = por %p99, %p100
    %s103 = sadd.s32 %s102, 1
    %p106 = scmp.eq.s32.totalorder %s12, 3
    %p107 = scmp.ne.s32.totalorder %s102, %s104
    %p108 = scmp.eq.s32.totalorder %s12, 0
    %p109 = por %p107, %p108
    %p110 = scmp.ne.s32.totalorder %s102, %s104
    %p111 = scmp.eq.s32.totalorder %s17, 3
    %p112 = por %p110, %p111
    %p113 = scmp.ne.s32.totalorder %s104, %s105
    %p114 = scmp.eq.s32.totalorder %s17, 0
    %p115 = por %p113, %p114
    %p116 = scmp.ne.s32.totalorder %s104, %s105
    %p117 = scmp.eq.s32.totalorder %s18, 3
    %p118 = por %p116, %p117
    %p120 = scmp.ne.s32.totalorder %s105, %s119
    %p121 = scmp.eq.s32.totalorder %s18, 0
    %p122 = por %p120, %p121
    %s124 = sadd.s32 %s123, 1
    %p127 = scmp.eq.s32.totalorder %s12, 3
    %p128 = scmp.ne.s32.totalorder %s123, %s125
    %p129 = scmp.eq.s32.totalorder %s12, 0
    %p130 = por %p128, %p129
    %p131 = scmp.ne.s32.totalorder %s123, %s125
    %p132 = scmp.eq.s32.totalorder %s17, 3
    %p133 = por %p131, %p132
    %p134 = scmp.ne.s32.totalorder %s125, %s126
    %p135 = scmp.eq.s32.totalorder %s17, 0
    %p136 = por %p134, %p135
    %p137 = scmp.ne.s32.totalorder %s125, %s126
    %p138 = scmp.eq.s32.totalorder %s18, 3
    %p139 = por %p137, %p138
    %p141 = scmp.ne.s32.totalorder %s126, %s140
    %p142 = scmp.eq.s32.totalorder %s18, 0
    %p143 = por %p141, %p142
    %s144 = ssub.s32 %s19, %s31
    %s145 = ssub.s32 %s20, %s27
    %s146 = sor.u32 %s144, %s145
    %p147 = scmp.eq.s32.totalorder %s146, 0
    %s149 = sadd.s32 %s148, 1
    %s150 = scalar_select %p147, %s148, %s149
    %p153 = pneg %p147
    %p154 = scmp.eq.s32.totalorder %s12, 3
    %p155 = por %p153, %p154
    %p156 = scmp.ne.s32.totalorder %s148, %s151
    %p157 = scmp.eq.s32.totalorder %s12, 0
    %p158 = por %p156, %p157
    %p159 = scmp.ne.s32.totalorder %s148, %s151
    %p160 = scmp.eq.s32.totalorder %s17, 3
    %p161 = por %p159, %p160
    %p162 = scmp.ne.s32.totalorder %s151, %s152
    %p163 = scmp.eq.s32.totalorder %s17, 0
    %p164 = por %p162, %p163
    %p165 = scmp.ne.s32.totalorder %s151, %s152
    %p166 = scmp.eq.s32.totalorder %s18, 3
    %p167 = por %p165, %p166
    %p169 = scmp.ne.s32.totalorder %s152, %s168
    %p170 = scmp.eq.s32.totalorder %s18, 0
    %p171 = por %p169, %p170
    %p172 = scmp.le.s32.totalorder 1, %s12
    %p173 = scmp.lt.s32.totalorder %s12, 5
    %p174 = pnand %p172, %p173
    %p175 = pneg %p174
    // Predicated region
    $region9: #{da_feature_head.1} parent=5 // pred_check
      _
    $region10: #{da_feature_head.1} parent=5 // pred_check_branch
      %177 = sbr.rel (%p174) target = $region12
    $region11: #{da_feature_head.1} parent=5 // pred_region
      %s178 = ssub.s32 %s12, 1
      // Predicated region
      $region13: #{da_feature_head.1} parent=11 // pred_check
        %p179 = pneg %p73
      $region14: #{da_feature_head.1} parent=11 // pred_check_branch
        %181 = sbr.rel (%p179) target = $region16
      $region15: #{da_feature_head.1} parent=11 // pred_region
        _
      $region16: #{da_feature_head.1} parent=11 // pred_fallthru
        _
      // Predicated region
      $region17: #{da_feature_head.1} parent=11 // pred_check
        %p182 = pneg %p94
      $region18: #{da_feature_head.1} parent=11 // pred_check_branch
        %184 = sbr.rel (%p182) target = $region20
      $region19: #{da_feature_head.1} parent=11 // pred_region
        _
      $region20: #{da_feature_head.1} parent=11 // pred_fallthru
        _
      // Predicated region
      $region21: #{da_feature_head.1} parent=11 // pred_check
        %p185 = pneg %p115
      $region22: #{da_feature_head.1} parent=11 // pred_check_branch
        %187 = sbr.rel (%p185) target = $region24
      $region23: #{da_feature_head.1} parent=11 // pred_region
        _
      $region24: #{da_feature_head.1} parent=11 // pred_fallthru
        _
      // Predicated region
      $region25: #{da_feature_head.1} parent=11 // pred_check
        %p188 = pneg %p136
      $region26: #{da_feature_head.1} parent=11 // pred_check_branch
        %190 = sbr.rel (%p188) target = $region28
      $region27: #{da_feature_head.1} parent=11 // pred_region
        _
      $region28: #{da_feature_head.1} parent=11 // pred_fallthru
        _
    $region12: #{da_feature_head.1} parent=5 // pred_fallthru
      _
    %p191 = scmp.lt.s32.totalorder %s12, 4
    // Predicated region
    $region29: #{da_feature_head.1} parent=5 // pred_check
      %p192 = pneg %p191
    $region30: #{da_feature_head.1} parent=5 // pred_check_branch
      %194 = sbr.rel (%p192) target = $region32
    $region31: #{da_feature_head.1} parent=5 // pred_region
      // Predicated region
      $region33: #{da_feature_head.1} parent=31 // pred_check
        %p195 = pneg %p46
      $region34: #{da_feature_head.1} parent=31 // pred_check_branch
        %197 = sbr.rel (%p195) target = $region36
      $region35: #{da_feature_head.1} parent=31 // pred_region
        %p198 = scmp.lt.s32.totalorder %s19, 1
        %s199 = scalar_select %p198, %s19, 1
        %p200 = scmp.lt.s32.totalorder %s20, 1
        %s201 = scalar_select %p200, %s20, 1
        %s202 = smul.addr %s199, 2
        %s203 = sadd.s32 %s201, %s202
        %s204 = smul.addr %s203, 4
        %s205 = scalar_lea.vmem %s0, %s204
      $region36: #{da_feature_head.1} parent=31 // pred_fallthru
        _
    $region32: #{da_feature_head.1} parent=5 // pred_fallthru
      _
    %p206 = scmp.le.s32.totalorder 1, %s12
    %p207 = scmp.lt.s32.totalorder %s12, 5
    %p208 = pnand %p206, %p207
    %p209 = pneg %p208
    // Predicated region
    $region37: #{da_feature_head.1} parent=5 // pred_check
      _
    $region38: #{da_feature_head.1} parent=5 // pred_check_branch
      %211 = sbr.rel (%p208) target = $region40
    $region39: #{da_feature_head.1} parent=5 // pred_region
      %s212 = ssub.s32 %s12, 1
      %p213 = scmp.lt.s32.totalorder %s21, 1
      %s214 = scalar_select %p213, %s21, 1
      %p215 = scmp.lt.s32.totalorder %s22, 1
      %s216 = scalar_select %p215, %s22, 1
      %s217 = smul.addr %s214, 2
      %s218 = sadd.s32 %s216, %s217
      %s219 = smul.addr %s218, 4
      %s220 = scalar_lea.vmem %s0, %s219
      %p221 = pneg %p52
      %p222 = pneg %p49
      %p223 = pneg %p73
      %p224 = pneg %p70
      %p225 = pneg %p94
      %p226 = pneg %p91
      %p227 = pneg %p115
      %p228 = pneg %p112
      %p229 = pneg %p136
      %p230 = pneg %p133
      %p231 = pneg %p164
      %p232 = pneg %p161
      %p233 = scmp.lt.s32.totalorder %s21, 1
      %s234 = scalar_select %p233, %s21, 1
      %p235 = scmp.lt.s32.totalorder %s22, 1
      %s236 = scalar_select %p235, %s22, 1
      %s237 = smul.addr %s234, 2
      %s238 = sadd.s32 %s236, %s237
      %s239 = scalar_lea.vmem %s5, %s238
      %p240 = scmp.lt.s32.totalorder %s21, 1
      %s241 = scalar_select %p240, %s21, 1
      %p242 = scmp.lt.s32.totalorder %s22, 1
      %s243 = scalar_select %p242, %s22, 1
      %s244 = smul.addr %s241, 2
      %s245 = sadd.s32 %s243, %s244
      %s246 = smul.addr %s245, 4
      %s247 = scalar_lea.vmem %s0, %s246
      %p248 = scmp.lt.s32.totalorder %s21, 1
      %s249 = scalar_select %p248, %s21, 1
      %p250 = scmp.lt.s32.totalorder %s22, 1
      %s251 = scalar_select %p250, %s22, 1
      %s252 = smul.addr %s249, 2
      %s253 = sadd.s32 %s251, %s252
      %s254 = scalar_lea.vmem %s5, %s253
      %v256 = vld [vmem:[%s247] sm:$0xf]
      %v257 = vpack.c.bf16 %v256, %v256
      %v258 = vld [vmem:[%s1] sm:$0xf]
      %v259 = vld [vmem:[%s1 + $0x4] sm:$0xf]
      %v260 = vld [vmem:[%s1 + $0x8] sm:$0xf]
      %v261 = vld [vmem:[%s1 + $0xc] sm:$0xf]
      %v262 = vld [vmem:[%s1 + $0x10] sm:$0xf]
      %v263 = vld [vmem:[%s1 + $0x14] sm:$0xf]
      %v264 = vld [vmem:[%s1 + $0x18] sm:$0xf]
      %v265 = vld [vmem:[%s1 + $0x1c] sm:$0xf]
      %v266 = vld [vmem:[%s1 + $0x20] sm:$0xf]
      %v267 = vld [vmem:[%s1 + $0x24] sm:$0xf]
      %v268 = vld [vmem:[%s1 + $0x28] sm:$0xf]
      %v269 = vld [vmem:[%s1 + $0x2c] sm:$0xf]
      %v270 = vld [vmem:[%s1 + $0x30] sm:$0xf]
      %v271 = vld [vmem:[%s1 + $0x34] sm:$0xf]
      %v272 = vld [vmem:[%s1 + $0x38] sm:$0xf]
      %v273 = vld [vmem:[%s1 + $0x3c] sm:$0xf]
      %v274 = vld [vmem:[%s2] sm:$0xff]
      %v275 = vld [vmem:[%s2 + $0x8] sm:$0xff]
      %v276 = vld [vmem:[%s2 + $0x10] sm:$0xff]
      %v277 = vld [vmem:[%s2 + $0x18] sm:$0xff]
      %v278 = vld [vmem:[%s2 + $0x20] sm:$0xff]
      %v279 = vld [vmem:[%s2 + $0x28] sm:$0xff]
      %v280 = vld [vmem:[%s2 + $0x30] sm:$0xff]
      %v281 = vld [vmem:[%s2 + $0x38] sm:$0xff]
      %v282 = vld [vmem:[%s2 + $0x40] sm:$0xff]
      %v283 = vld [vmem:[%s2 + $0x48] sm:$0xff]
      %v284 = vld [vmem:[%s2 + $0x50] sm:$0xff]
      %v285 = vld [vmem:[%s2 + $0x58] sm:$0xff]
      %v286 = vld [vmem:[%s2 + $0x60] sm:$0xff]
      %v287 = vld [vmem:[%s2 + $0x68] sm:$0xff]
      %v288 = vld [vmem:[%s2 + $0x70] sm:$0xff]
      %v289 = vld [vmem:[%s2 + $0x78] sm:$0xff]
      %291 = vset.pattern.permute.xlu0 0
      %292 = vperm.xlu0 %291, %v274
      %v293 = vpop.permute.xlu0 %292
      %296 = vset.pattern.permute.xlu0 0
      %297 = vperm.xlu0 %296, %v275
      %v298 = vpop.permute.xlu0 %297
      %301 = vset.pattern.permute.xlu0 0
      %302 = vperm.xlu0 %301, %v276
      %v303 = vpop.permute.xlu0 %302
      %306 = vset.pattern.permute.xlu0 0
      %307 = vperm.xlu0 %306, %v277
      %v308 = vpop.permute.xlu0 %307
      %311 = vset.pattern.permute.xlu0 0
      %312 = vperm.xlu0 %311, %v278
      %v313 = vpop.permute.xlu0 %312
      %316 = vset.pattern.permute.xlu0 0
      %317 = vperm.xlu0 %316, %v279
      %v318 = vpop.permute.xlu0 %317
      %321 = vset.pattern.permute.xlu0 0
      %322 = vperm.xlu0 %321, %v280
      %v323 = vpop.permute.xlu0 %322
      %326 = vset.pattern.permute.xlu0 0
      %327 = vperm.xlu0 %326, %v281
      %v328 = vpop.permute.xlu0 %327
      %331 = vset.pattern.permute.xlu0 0
      %332 = vperm.xlu0 %331, %v282
      %v333 = vpop.permute.xlu0 %332
      %336 = vset.pattern.permute.xlu0 0
      %337 = vperm.xlu0 %336, %v283
      %v338 = vpop.permute.xlu0 %337
      %341 = vset.pattern.permute.xlu0 0
      %342 = vperm.xlu0 %341, %v284
      %v343 = vpop.permute.xlu0 %342
      %346 = vset.pattern.permute.xlu0 0
      %347 = vperm.xlu0 %346, %v285
      %v348 = vpop.permute.xlu0 %347
      %351 = vset.pattern.permute.xlu0 0
      %352 = vperm.xlu0 %351, %v286
      %v353 = vpop.permute.xlu0 %352
      %356 = vset.pattern.permute.xlu0 0
      %357 = vperm.xlu0 %356, %v287
      %v358 = vpop.permute.xlu0 %357
      %361 = vset.pattern.permute.xlu0 0
      %362 = vperm.xlu0 %361, %v288
      %v363 = vpop.permute.xlu0 %362
      %366 = vset.pattern.permute.xlu0 0
      %367 = vperm.xlu0 %366, %v289
      %v368 = vpop.permute.xlu0 %367
      %v386 = vunpack.c.l.b16 %v258
      %v387 = vunpack.c.l.b16 %v259
      %v388 = vunpack.c.l.b16 %v260
      %v389 = vunpack.c.l.b16 %v261
      %v390 = vunpack.c.l.b16 %v262
      %v391 = vunpack.c.l.b16 %v263
      %v392 = vunpack.c.l.b16 %v264
      %v393 = vunpack.c.l.b16 %v265
      %v394 = vunpack.c.l.b16 %v266
      %v395 = vunpack.c.l.b16 %v267
      %v396 = vunpack.c.l.b16 %v268
      %v397 = vunpack.c.l.b16 %v269
      %v398 = vunpack.c.l.b16 %v270
      %v399 = vunpack.c.l.b16 %v271
      %v400 = vunpack.c.l.b16 %v272
      %v401 = vunpack.c.l.b16 %v273
      %v402 = vpack.c.b16 %v387, %v386
      %v403 = vpack.c.b16 %v389, %v388
      %v404 = vpack.c.b16 %v391, %v390
      %v405 = vpack.c.b16 %v393, %v392
      %v406 = vpack.c.b16 %v395, %v394
      %v407 = vpack.c.b16 %v397, %v396
      %v408 = vpack.c.b16 %v399, %v398
      %v409 = vpack.c.b16 %v401, %v400
      %vm410 = vcmask 31744
      %v412 = vsel %vm410, %v402, 0
      %v415 = vsel %vm410, %v403, 0
      %v418 = vsel %vm410, %v404, 0
      %v421 = vsel %vm410, %v405, 0
      %v424 = vsel %vm410, %v406, 0
      %v427 = vsel %vm410, %v407, 0
      %v430 = vsel %vm410, %v408, 0
      %v433 = vsel %vm410, %v409, 0
      %vm435 = vcmask 1041408
      %v437 = vsel %vm435, %v257, 0
      %439 = vmatprep.subr.bf16.mxu0 0
      %440 = vmatpush1.bf16.msra.mxu0 %v437
      %441 = vmatprep.subr.bf16.mxu0 0
      %442 = vmatpush1.bf16.msra.mxu0 0
      %443 = vmatprep.subr.bf16.mxu0 0
      %444 = vmatpush1.bf16.msra.mxu0 0
      %445 = vmatprep.subr.bf16.mxu0 0
      %446 = vmatpush1.bf16.msra.mxu0 0
      %447 = vmatprep.subr.bf16.mxu0 0
      %448 = vmatpush1.bf16.msra.mxu0 0
      %449 = vmatprep.subr.bf16.mxu0 0
      %450 = vmatpush1.bf16.msra.mxu0 0
      %451 = vmatprep.subr.bf16.mxu0 0
      %452 = vmatpush1.bf16.msra.mxu0 0
      %453 = vmatprep.subr.bf16.mxu0 0
      %454 = vmatpush1.bf16.msra.mxu0 0
      %455 = vmatprep.subr.bf16.mxu0 0
      %456 = vmatpush1.bf16.msra.mxu0 0
      %457 = vmatprep.subr.bf16.mxu0 0
      %458 = vmatpush1.bf16.msra.mxu0 0
      %459 = vmatprep.subr.bf16.mxu0 0
      %460 = vmatpush1.bf16.msra.mxu0 0
      %461 = vmatprep.subr.bf16.mxu0 0
      %462 = vmatpush1.bf16.msra.mxu0 0
      %463 = vmatprep.subr.bf16.mxu0 0
      %464 = vmatpush1.bf16.msra.mxu0 0
      %465 = vmatprep.subr.bf16.mxu0 0
      %466 = vmatpush1.bf16.msra.mxu0 0
      %467 = vmatprep.subr.bf16.mxu0 0
      %468 = vmatpush1.bf16.msra.mxu0 0
      %469 = vmatprep.subr.bf16.mxu0 0
      %470 = vmatpush1.bf16.msra.mxu0 0
      %471 = vmatprep.mubr.bf16.mxu0 0
      %472 = vmatmul.mubr.bf16.gmra.mrb[0].mxu0 %v412
      %v473 = vpop.f32.mrb[0].mxu0
      %v474 = vadd.f32 %v293, %v473
      %v475 = vpop.f32.mrb[0].mxu0
      %v476 = vpop.f32.mrb[0].mxu0
      %v477 = vadd.f32 %v298, %v476
      %v478 = vpop.f32.mrb[0].mxu0
      %479 = vmatprep.mubr.bf16.mxu0 0
      %480 = vmatmul.mubr.bf16.gmra.mrb[0].mxu0 %v415
      %v481 = vpop.f32.mrb[0].mxu0
      %v482 = vadd.f32 %v303, %v481
      %v483 = vpop.f32.mrb[0].mxu0
      %v484 = vpop.f32.mrb[0].mxu0
      %v485 = vadd.f32 %v308, %v484
      %v486 = vpop.f32.mrb[0].mxu0
      %487 = vmatprep.mubr.bf16.mxu0 0
      %488 = vmatmul.mubr.bf16.gmra.mrb[0].mxu0 %v418
      %v489 = vpop.f32.mrb[0].mxu0
      %v490 = vadd.f32 %v313, %v489
      %v491 = vpop.f32.mrb[0].mxu0
      %v492 = vpop.f32.mrb[0].mxu0
      %v493 = vadd.f32 %v318, %v492
      %v494 = vpop.f32.mrb[0].mxu0
      %495 = vmatprep.mubr.bf16.mxu0 0
      %496 = vmatmul.mubr.bf16.gmra.mrb[0].mxu0 %v421
      %v497 = vpop.f32.mrb[0].mxu0
      %v498 = vadd.f32 %v323, %v497
      %v499 = vpop.f32.mrb[0].mxu0
      %v500 = vpop.f32.mrb[0].mxu0
      %v501 = vadd.f32 %v328, %v500
      %v502 = vpop.f32.mrb[0].mxu0
      %503 = vmatprep.mubr.bf16.mxu0 0
      %504 = vmatmul.mubr.bf16.gmra.mrb[0].mxu0 %v424
      %v505 = vpop.f32.mrb[0].mxu0
      %v506 = vadd.f32 %v333, %v505
      %v507 = vpop.f32.mrb[0].mxu0
      %v508 = vpop.f32.mrb[0].mxu0
      %v509 = vadd.f32 %v338, %v508
      %v510 = vpop.f32.mrb[0].mxu0
      %511 = vmatprep.mubr.bf16.mxu0 0
      %512 = vmatmul.mubr.bf16.gmra.mrb[0].mxu0 %v427
      %v513 = vpop.f32.mrb[0].mxu0
      %v514 = vadd.f32 %v343, %v513
      %v515 = vpop.f32.mrb[0].mxu0
      %v516 = vpop.f32.mrb[0].mxu0
      %v517 = vadd.f32 %v348, %v516
      %v518 = vpop.f32.mrb[0].mxu0
      %519 = vmatprep.mubr.bf16.mxu0 0
      %520 = vmatmul.mubr.bf16.gmra.mrb[0].mxu0 %v430
      %v521 = vpop.f32.mrb[0].mxu0
      %v522 = vadd.f32 %v353, %v521
      %v523 = vpop.f32.mrb[0].mxu0
      %v524 = vpop.f32.mrb[0].mxu0
      %v525 = vadd.f32 %v358, %v524
      %v526 = vpop.f32.mrb[0].mxu0
      %527 = vmatprep.mubr.bf16.mxu0 0
      %528 = vmatmul.mubr.bf16.gmra.mrb[0].mxu0 %v433
      %v529 = vpop.f32.mrb[0].mxu0
      %v530 = vadd.f32 %v363, %v529
      %v531 = vpop.f32.mrb[0].mxu0
      %v532 = vpop.f32.mrb[0].mxu0
      %v533 = vadd.f32 %v368, %v532
      %v534 = vpop.f32.mrb[0].mxu0
      %535 = vdwg.mxu0
      %v536 = vmax.f32 %v474, 0.0
      %v537 = vmax.f32 %v477, 0.0
      %v538 = vmax.f32 %v482, 0.0
      %v539 = vmax.f32 %v485, 0.0
      %v540 = vmax.f32 %v490, 0.0
      %v541 = vmax.f32 %v493, 0.0
      %v542 = vmax.f32 %v498, 0.0
      %v543 = vmax.f32 %v501, 0.0
      %v544 = vmax.f32 %v506, 0.0
      %v545 = vmax.f32 %v509, 0.0
      %v546 = vmax.f32 %v514, 0.0
      %v547 = vmax.f32 %v517, 0.0
      %v548 = vmax.f32 %v522, 0.0
      %v549 = vmax.f32 %v525, 0.0
      %v550 = vmax.f32 %v530, 0.0
      %v551 = vmax.f32 %v533, 0.0
      %v552 = vld [vmem:[%s3] sm:$0xff]
      %v553 = vld [vmem:[%s3 + $0x8] sm:$0xff]
      %v554 = vld [vmem:[%s3 + $0x10] sm:$0xff]
      %v555 = vld [vmem:[%s3 + $0x18] sm:$0xff]
      %v556 = vld [vmem:[%s3 + $0x20] sm:$0xff]
      %v557 = vld [vmem:[%s3 + $0x28] sm:$0xff]
      %v558 = vld [vmem:[%s3 + $0x30] sm:$0xff]
      %v559 = vld [vmem:[%s3 + $0x38] sm:$0xff]
      %v560 = vld [vmem:[%s3 + $0x40] sm:$0xff]
      %v561 = vld [vmem:[%s3 + $0x48] sm:$0xff]
      %v562 = vld [vmem:[%s3 + $0x50] sm:$0xff]
      %v563 = vld [vmem:[%s3 + $0x58] sm:$0xff]
      %v564 = vld [vmem:[%s3 + $0x60] sm:$0xff]
      %v565 = vld [vmem:[%s3 + $0x68] sm:$0xff]
      %v566 = vld [vmem:[%s3 + $0x70] sm:$0xff]
      %v567 = vld [vmem:[%s3 + $0x78] sm:$0xff]
      %569 = vset.pattern.permute.xlu0 0
      %570 = vperm.xlu0 %569, %v552
      %v571 = vpop.permute.xlu0 %570
      %574 = vset.pattern.permute.xlu0 0
      %575 = vperm.xlu0 %574, %v553
      %v576 = vpop.permute.xlu0 %575
      %579 = vset.pattern.permute.xlu0 0
      %580 = vperm.xlu0 %579, %v554
      %v581 = vpop.permute.xlu0 %580
      %584 = vset.pattern.permute.xlu0 0
      %585 = vperm.xlu0 %584, %v555
      %v586 = vpop.permute.xlu0 %585
      %589 = vset.pattern.permute.xlu0 0
      %590 = vperm.xlu0 %589, %v556
      %v591 = vpop.permute.xlu0 %590
      %594 = vset.pattern.permute.xlu0 0
      %595 = vperm.xlu0 %594, %v557
      %v596 = vpop.permute.xlu0 %595
      %599 = vset.pattern.permute.xlu0 0
      %600 = vperm.xlu0 %599, %v558
      %v601 = vpop.permute.xlu0 %600
      %604 = vset.pattern.permute.xlu0 0
      %605 = vperm.xlu0 %604, %v559
      %v606 = vpop.permute.xlu0 %605
      %609 = vset.pattern.permute.xlu0 0
      %610 = vperm.xlu0 %609, %v560
      %v611 = vpop.permute.xlu0 %610
      %614 = vset.pattern.permute.xlu0 0
      %615 = vperm.xlu0 %614, %v561
      %v616 = vpop.permute.xlu0 %615
      %619 = vset.pattern.permute.xlu0 0
      %620 = vperm.xlu0 %619, %v562
      %v621 = vpop.permute.xlu0 %620
      %624 = vset.pattern.permute.xlu0 0
      %625 = vperm.xlu0 %624, %v563
      %v626 = vpop.permute.xlu0 %625
      %629 = vset.pattern.permute.xlu0 0
      %630 = vperm.xlu0 %629, %v564
      %v631 = vpop.permute.xlu0 %630
      %634 = vset.pattern.permute.xlu0 0
      %635 = vperm.xlu0 %634, %v565
      %v636 = vpop.permute.xlu0 %635
      %639 = vset.pattern.permute.xlu0 0
      %640 = vperm.xlu0 %639, %v566
      %v641 = vpop.permute.xlu0 %640
      %644 = vset.pattern.permute.xlu0 0
      %645 = vperm.xlu0 %644, %v567
      %v646 = vpop.permute.xlu0 %645
      %v648 = vmul.f32 %v536, %v571
      %v649 = vmul.f32 %v537, %v576
      %v650 = vmul.f32 %v538, %v581
      %v651 = vmul.f32 %v539, %v586
      %v652 = vmul.f32 %v540, %v591
      %v653 = vmul.f32 %v541, %v596
      %v654 = vmul.f32 %v542, %v601
      %v655 = vmul.f32 %v543, %v606
      %v656 = vmul.f32 %v544, %v611
      %v657 = vmul.f32 %v545, %v616
      %v658 = vmul.f32 %v546, %v621
      %v659 = vmul.f32 %v547, %v626
      %v660 = vmul.f32 %v548, %v631
      %v661 = vmul.f32 %v549, %v636
      %v662 = vmul.f32 %v550, %v641
      %v663 = vmul.f32 %v551, %v646
      %v664 = vadd.f32 %v648, %v649
      %v665 = vadd.f32 %v664, %v650
      %v666 = vadd.f32 %v665, %v651
      %v667 = vadd.f32 %v666, %v652
      %v668 = vadd.f32 %v667, %v653
      %v669 = vadd.f32 %v668, %v654
      %v670 = vadd.f32 %v669, %v655
      %v671 = vadd.f32 %v670, %v656
      %v672 = vadd.f32 %v671, %v657
      %v673 = vadd.f32 %v672, %v658
      %v674 = vadd.f32 %v673, %v659
      %v675 = vadd.f32 %v674, %v660
      %v676 = vadd.f32 %v675, %v661
      %v677 = vadd.f32 %v676, %v662
      %v678 = vadd.f32 %v677, %v663
      %v679 = vrot.slane %v678, 4
      %v680 = vadd.f32 %v678, %v679
      %v681 = vrot.slane %v680, 2
      %v682 = vadd.f32 %v680, %v681
      %v683 = vrot.slane %v682, 1
      %v684 = vadd.f32 %v682, %v683
      %v685 = vadd.f32 %v684, 0.0
      %v686 = vld [vmem:[%s1 + $0x40] sm:$0xf]
      %v687 = vld [vmem:[%s1 + $0x44] sm:$0xf]
      %v688 = vld [vmem:[%s1 + $0x48] sm:$0xf]
      %v689 = vld [vmem:[%s1 + $0x4c] sm:$0xf]
      %v690 = vld [vmem:[%s1 + $0x50] sm:$0xf]
      %v691 = vld [vmem:[%s1 + $0x54] sm:$0xf]
      %v692 = vld [vmem:[%s1 + $0x58] sm:$0xf]
      %v693 = vld [vmem:[%s1 + $0x5c] sm:$0xf]
      %v694 = vld [vmem:[%s1 + $0x60] sm:$0xf]
      %v695 = vld [vmem:[%s1 + $0x64] sm:$0xf]
      %v696 = vld [vmem:[%s1 + $0x68] sm:$0xf]
      %v697 = vld [vmem:[%s1 + $0x6c] sm:$0xf]
      %v698 = vld [vmem:[%s1 + $0x70] sm:$0xf]
      %v699 = vld [vmem:[%s1 + $0x74] sm:$0xf]
      %v700 = vld [vmem:[%s1 + $0x78] sm:$0xf]
      %v701 = vld [vmem:[%s1 + $0x7c] sm:$0xf]
      %v702 = vld [vmem:[%s2 + $0x80] sm:$0xff]
      %v703 = vld [vmem:[%s2 + $0x88] sm:$0xff]
      %v704 = vld [vmem:[%s2 + $0x90] sm:$0xff]
      %v705 = vld [vmem:[%s2 + $0x98] sm:$0xff]
      %v706 = vld [vmem:[%s2 + $0xa0] sm:$0xff]
      %v707 = vld [vmem:[%s2 + $0xa8] sm:$0xff]
      %v708 = vld [vmem:[%s2 + $0xb0] sm:$0xff]
      %v709 = vld [vmem:[%s2 + $0xb8] sm:$0xff]
      %v710 = vld [vmem:[%s2 + $0xc0] sm:$0xff]
      %v711 = vld [vmem:[%s2 + $0xc8] sm:$0xff]
      %v712 = vld [vmem:[%s2 + $0xd0] sm:$0xff]
      %v713 = vld [vmem:[%s2 + $0xd8] sm:$0xff]
      %v714 = vld [vmem:[%s2 + $0xe0] sm:$0xff]
      %v715 = vld [vmem:[%s2 + $0xe8] sm:$0xff]
      %v716 = vld [vmem:[%s2 + $0xf0] sm:$0xff]
      %v717 = vld [vmem:[%s2 + $0xf8] sm:$0xff]
      %719 = vset.pattern.permute.xlu0 0
      %720 = vperm.xlu0 %719, %v702
      %v721 = vpop.permute.xlu0 %720
      %724 = vset.pattern.permute.xlu0 0
      %725 = vperm.xlu0 %724, %v703
      %v726 = vpop.permute.xlu0 %725
      %729 = vset.pattern.permute.xlu0 0
      %730 = vperm.xlu0 %729, %v704
      %v731 = vpop.permute.xlu0 %730
      %734 = vset.pattern.permute.xlu0 0
      %735 = vperm.xlu0 %734, %v705
      %v736 = vpop.permute.xlu0 %735
      %739 = vset.pattern.permute.xlu0 0
      %740 = vperm.xlu0 %739, %v706
      %v741 = vpop.permute.xlu0 %740
      %744 = vset.pattern.permute.xlu0 0
      %745 = vperm.xlu0 %744, %v707
      %v746 = vpop.permute.xlu0 %745
      %749 = vset.pattern.permute.xlu0 0
      %750 = vperm.xlu0 %749, %v708
      %v751 = vpop.permute.xlu0 %750
      %754 = vset.pattern.permute.xlu0 0
      %755 = vperm.xlu0 %754, %v709
      %v756 = vpop.permute.xlu0 %755
      %759 = vset.pattern.permute.xlu0 0
      %760 = vperm.xlu0 %759, %v710
      %v761 = vpop.permute.xlu0 %760
      %764 = vset.pattern.permute.xlu0 0
      %765 = vperm.xlu0 %764, %v711
      %v766 = vpop.permute.xlu0 %765
      %769 = vset.pattern.permute.xlu0 0
      %770 = vperm.xlu0 %769, %v712
      %v771 = vpop.permute.xlu0 %770
      %774 = vset.pattern.permute.xlu0 0
      %775 = vperm.xlu0 %774, %v713
      %v776 = vpop.permute.xlu0 %775
      %779 = vset.pattern.permute.xlu0 0
      %780 = vperm.xlu0 %779, %v714
      %v781 = vpop.permute.xlu0 %780
      %784 = vset.pattern.permute.xlu0 0
      %785 = vperm.xlu0 %784, %v715
      %v786 = vpop.permute.xlu0 %785
      %789 = vset.pattern.permute.xlu0 0
      %790 = vperm.xlu0 %789, %v716
      %v791 = vpop.permute.xlu0 %790
      %794 = vset.pattern.permute.xlu0 0
      %795 = vperm.xlu0 %794, %v717
      %v796 = vpop.permute.xlu0 %795
      %v814 = vunpack.c.l.b16 %v686
      %v815 = vunpack.c.l.b16 %v687
      %v816 = vunpack.c.l.b16 %v688
      %v817 = vunpack.c.l.b16 %v689
      %v818 = vunpack.c.l.b16 %v690
      %v819 = vunpack.c.l.b16 %v691
      %v820 = vunpack.c.l.b16 %v692
      %v821 = vunpack.c.l.b16 %v693
      %v822 = vunpack.c.l.b16 %v694
      %v823 = vunpack.c.l.b16 %v695
      %v824 = vunpack.c.l.b16 %v696
      %v825 = vunpack.c.l.b16 %v697
      %v826 = vunpack.c.l.b16 %v698
      %v827 = vunpack.c.l.b16 %v699
      %v828 = vunpack.c.l.b16 %v700
      %v829 = vunpack.c.l.b16 %v701
      %v830 = vpack.c.b16 %v815, %v814
      %v831 = vpack.c.b16 %v817, %v816
      %v832 = vpack.c.b16 %v819, %v818
      %v833 = vpack.c.b16 %v821, %v820
      %v834 = vpack.c.b16 %v823, %v822
      %v835 = vpack.c.b16 %v825, %v824
      %v836 = vpack.c.b16 %v827, %v826
      %v837 = vpack.c.b16 %v829, %v828
      %v839 = vsel %vm410, %v830, 0
      %v842 = vsel %vm410, %v831, 0
      %v845 = vsel %vm410, %v832, 0
      %v848 = vsel %vm410, %v833, 0
      %v851 = vsel %vm410, %v834, 0
      %v854 = vsel %vm410, %v835, 0
      %v857 = vsel %vm410, %v836, 0
      %v860 = vsel %vm410, %v837, 0
      %862 = vmatprep.subr.bf16.mxu0 0
      %863 = vmatpush1.bf16.msra.mxu0 %v437
      %864 = vmatprep.subr.bf16.mxu0 0
      %865 = vmatpush1.bf16.msra.mxu0 0
      %866 = vmatprep.subr.bf16.mxu0 0
      %867 = vmatpush1.bf16.msra.mxu0 0
      %868 = vmatprep.subr.bf16.mxu0 0
      %869 = vmatpush1.bf16.msra.mxu0 0
      %870 = vmatprep.subr.bf16.mxu0 0
      %871 = vmatpush1.bf16.msra.mxu0 0
      %872 = vmatprep.subr.bf16.mxu0 0
      %873 = vmatpush1.bf16.msra.mxu0 0
      %874 = vmatprep.subr.bf16.mxu0 0
      %875 = vmatpush1.bf16.msra.mxu0 0
      %876 = vmatprep.subr.bf16.mxu0 0
      %877 = vmatpush1.bf16.msra.mxu0 0
      %878 = vmatprep.subr.bf16.mxu0 0
      %879 = vmatpush1.bf16.msra.mxu0 0
      %880 = vmatprep.subr.bf16.mxu0 0
      %881 = vmatpush1.bf16.msra.mxu0 0
      %882 = vmatprep.subr.bf16.mxu0 0
      %883 = vmatpush1.bf16.msra.mxu0 0
      %884 = vmatprep.subr.bf16.mxu0 0
      %885 = vmatpush1.bf16.msra.mxu0 0
      %886 = vmatprep.subr.bf16.mxu0 0
      %887 = vmatpush1.bf16.msra.mxu0 0
      %888 = vmatprep.subr.bf16.mxu0 0
      %889 = vmatpush1.bf16.msra.mxu0 0
      %890 = vmatprep.subr.bf16.mxu0 0
      %891 = vmatpush1.bf16.msra.mxu0 0
      %892 = vmatprep.subr.bf16.mxu0 0
      %893 = vmatpush1.bf16.msra.mxu0 0
      %894 = vmatprep.mubr.bf16.mxu0 0
      %895 = vmatmul.mubr.bf16.gmra.mrb[0].mxu0 %v839
      %v896 = vpop.f32.mrb[0].mxu0
      %v897 = vadd.f32 %v721, %v896
      %v898 = vpop.f32.mrb[0].mxu0
      %v899 = vpop.f32.mrb[0].mxu0
      %v900 = vadd.f32 %v726, %v899
      %v901 = vpop.f32.mrb[0].mxu0
      %902 = vmatprep.mubr.bf16.mxu0 0
      %903 = vmatmul.mubr.bf16.gmra.mrb[0].mxu0 %v842
      %v904 = vpop.f32.mrb[0].mxu0
      %v905 = vadd.f32 %v731, %v904
      %v906 = vpop.f32.mrb[0].mxu0
      %v907 = vpop.f32.mrb[0].mxu0
      %v908 = vadd.f32 %v736, %v907
      %v909 = vpop.f32.mrb[0].mxu0
      %910 = vmatprep.mubr.bf16.mxu0 0
      %911 = vmatmul.mubr.bf16.gmra.mrb[0].mxu0 %v845
      %v912 = vpop.f32.mrb[0].mxu0
      %v913 = vadd.f32 %v741, %v912
      %v914 = vpop.f32.mrb[0].mxu0
      %v915 = vpop.f32.mrb[0].mxu0
      %v916 = vadd.f32 %v746, %v915
      %v917 = vpop.f32.mrb[0].mxu0
      %918 = vmatprep.mubr.bf16.mxu0 0
      %919 = vmatmul.mubr.bf16.gmra.mrb[0].mxu0 %v848
      %v920 = vpop.f32.mrb[0].mxu0
      %v921 = vadd.f32 %v751, %v920
      %v922 = vpop.f32.mrb[0].mxu0
      %v923 = vpop.f32.mrb[0].mxu0
      %v924 = vadd.f32 %v756, %v923
      %v925 = vpop.f32.mrb[0].mxu0
      %926 = vmatprep.mubr.bf16.mxu0 0
      %927 = vmatmul.mubr.bf16.gmra.mrb[0].mxu0 %v851
      %v928 = vpop.f32.mrb[0].mxu0
      %v929 = vadd.f32 %v761, %v928
      %v930 = vpop.f32.mrb[0].mxu0
      %v931 = vpop.f32.mrb[0].mxu0
      %v932 = vadd.f32 %v766, %v931
      %v933 = vpop.f32.mrb[0].mxu0
      %934 = vmatprep.mubr.bf16.mxu0 0
      %935 = vmatmul.mubr.bf16.gmra.mrb[0].mxu0 %v854
      %v936 = vpop.f32.mrb[0].mxu0
      %v937 = vadd.f32 %v771, %v936
      %v938 = vpop.f32.mrb[0].mxu0
      %v939 = vpop.f32.mrb[0].mxu0
      %v940 = vadd.f32 %v776, %v939
      %v941 = vpop.f32.mrb[0].mxu0
      %942 = vmatprep.mubr.bf16.mxu0 0
      %943 = vmatmul.mubr.bf16.gmra.mrb[0].mxu0 %v857
      %v944 = vpop.f32.mrb[0].mxu0
      %v945 = vadd.f32 %v781, %v944
      %v946 = vpop.f32.mrb[0].mxu0
      %v947 = vpop.f32.mrb[0].mxu0
      %v948 = vadd.f32 %v786, %v947
      %v949 = vpop.f32.mrb[0].mxu0
      %950 = vmatprep.mubr.bf16.mxu0 0
      %951 = vmatmul.mubr.bf16.gmra.mrb[0].mxu0 %v860
      %v952 = vpop.f32.mrb[0].mxu0
      %v953 = vadd.f32 %v791, %v952
      %v954 = vpop.f32.mrb[0].mxu0
      %v955 = vpop.f32.mrb[0].mxu0
      %v956 = vadd.f32 %v796, %v955
      %v957 = vpop.f32.mrb[0].mxu0
      %958 = vdwg.mxu0
      %v959 = vmax.f32 %v897, 0.0
      %v960 = vmax.f32 %v900, 0.0
      %v961 = vmax.f32 %v905, 0.0
      %v962 = vmax.f32 %v908, 0.0
      %v963 = vmax.f32 %v913, 0.0
      %v964 = vmax.f32 %v916, 0.0
      %v965 = vmax.f32 %v921, 0.0
      %v966 = vmax.f32 %v924, 0.0
      %v967 = vmax.f32 %v929, 0.0
      %v968 = vmax.f32 %v932, 0.0
      %v969 = vmax.f32 %v937, 0.0
      %v970 = vmax.f32 %v940, 0.0
      %v971 = vmax.f32 %v945, 0.0
      %v972 = vmax.f32 %v948, 0.0
      %v973 = vmax.f32 %v953, 0.0
      %v974 = vmax.f32 %v956, 0.0
      %v975 = vld [vmem:[%s3 + $0x80] sm:$0xff]
      %v976 = vld [vmem:[%s3 + $0x88] sm:$0xff]
      %v977 = vld [vmem:[%s3 + $0x90] sm:$0xff]
      %v978 = vld [vmem:[%s3 + $0x98] sm:$0xff]
      %v979 = vld [vmem:[%s3 + $0xa0] sm:$0xff]
      %v980 = vld [vmem:[%s3 + $0xa8] sm:$0xff]
      %v981 = vld [vmem:[%s3 + $0xb0] sm:$0xff]
      %v982 = vld [vmem:[%s3 + $0xb8] sm:$0xff]
      %v983 = vld [vmem:[%s3 + $0xc0] sm:$0xff]
      %v984 = vld [vmem:[%s3 + $0xc8] sm:$0xff]
      %v985 = vld [vmem:[%s3 + $0xd0] sm:$0xff]
      %v986 = vld [vmem:[%s3 + $0xd8] sm:$0xff]
      %v987 = vld [vmem:[%s3 + $0xe0] sm:$0xff]
      %v988 = vld [vmem:[%s3 + $0xe8] sm:$0xff]
      %v989 = vld [vmem:[%s3 + $0xf0] sm:$0xff]
      %v990 = vld [vmem:[%s3 + $0xf8] sm:$0xff]
      %992 = vset.pattern.permute.xlu0 0
      %993 = vperm.xlu0 %992, %v975
      %v994 = vpop.permute.xlu0 %993
      %997 = vset.pattern.permute.xlu0 0
      %998 = vperm.xlu0 %997, %v976
      %v999 = vpop.permute.xlu0 %998
      %1002 = vset.pattern.permute.xlu0 0
      %1003 = vperm.xlu0 %1002, %v977
      %v1004 = vpop.permute.xlu0 %1003
      %1007 = vset.pattern.permute.xlu0 0
      %1008 = vperm.xlu0 %1007, %v978
      %v1009 = vpop.permute.xlu0 %1008
      %1012 = vset.pattern.permute.xlu0 0
      %1013 = vperm.xlu0 %1012, %v979
      %v1014 = vpop.permute.xlu0 %1013
      %1017 = vset.pattern.permute.xlu0 0
      %1018 = vperm.xlu0 %1017, %v980
      %v1019 = vpop.permute.xlu0 %1018
      %1022 = vset.pattern.permute.xlu0 0
      %1023 = vperm.xlu0 %1022, %v981
      %v1024 = vpop.permute.xlu0 %1023
      %1027 = vset.pattern.permute.xlu0 0
      %1028 = vperm.xlu0 %1027, %v982
      %v1029 = vpop.permute.xlu0 %1028
      %1032 = vset.pattern.permute.xlu0 0
      %1033 = vperm.xlu0 %1032, %v983
      %v1034 = vpop.permute.xlu0 %1033
      %1037 = vset.pattern.permute.xlu0 0
      %1038 = vperm.xlu0 %1037, %v984
      %v1039 = vpop.permute.xlu0 %1038
      %1042 = vset.pattern.permute.xlu0 0
      %1043 = vperm.xlu0 %1042, %v985
      %v1044 = vpop.permute.xlu0 %1043
      %1047 = vset.pattern.permute.xlu0 0
      %1048 = vperm.xlu0 %1047, %v986
      %v1049 = vpop.permute.xlu0 %1048
      %1052 = vset.pattern.permute.xlu0 0
      %1053 = vperm.xlu0 %1052, %v987
      %v1054 = vpop.permute.xlu0 %1053
      %1057 = vset.pattern.permute.xlu0 0
      %1058 = vperm.xlu0 %1057, %v988
      %v1059 = vpop.permute.xlu0 %1058
      %1062 = vset.pattern.permute.xlu0 0
      %1063 = vperm.xlu0 %1062, %v989
      %v1064 = vpop.permute.xlu0 %1063
      %1067 = vset.pattern.permute.xlu0 0
      %1068 = vperm.xlu0 %1067, %v990
      %v1069 = vpop.permute.xlu0 %1068
      %v1071 = vmul.f32 %v959, %v994
      %v1072 = vmul.f32 %v960, %v999
      %v1073 = vmul.f32 %v961, %v1004
      %v1074 = vmul.f32 %v962, %v1009
      %v1075 = vmul.f32 %v963, %v1014
      %v1076 = vmul.f32 %v964, %v1019
      %v1077 = vmul.f32 %v965, %v1024
      %v1078 = vmul.f32 %v966, %v1029
      %v1079 = vmul.f32 %v967, %v1034
      %v1080 = vmul.f32 %v968, %v1039
      %v1081 = vmul.f32 %v969, %v1044
      %v1082 = vmul.f32 %v970, %v1049
      %v1083 = vmul.f32 %v971, %v1054
      %v1084 = vmul.f32 %v972, %v1059
      %v1085 = vmul.f32 %v973, %v1064
      %v1086 = vmul.f32 %v974, %v1069
      %v1087 = vadd.f32 %v1071, %v1072
      %v1088 = vadd.f32 %v1087, %v1073
      %v1089 = vadd.f32 %v1088, %v1074
      %v1090 = vadd.f32 %v1089, %v1075
      %v1091 = vadd.f32 %v1090, %v1076
      %v1092 = vadd.f32 %v1091, %v1077
      %v1093 = vadd.f32 %v1092, %v1078
      %v1094 = vadd.f32 %v1093, %v1079
      %v1095 = vadd.f32 %v1094, %v1080
      %v1096 = vadd.f32 %v1095, %v1081
      %v1097 = vadd.f32 %v1096, %v1082
      %v1098 = vadd.f32 %v1097, %v1083
      %v1099 = vadd.f32 %v1098, %v1084
      %v1100 = vadd.f32 %v1099, %v1085
      %v1101 = vadd.f32 %v1100, %v1086
      %v1102 = vrot.slane %v1101, 4
      %v1103 = vadd.f32 %v1101, %v1102
      %v1104 = vrot.slane %v1103, 2
      %v1105 = vadd.f32 %v1103, %v1104
      %v1106 = vrot.slane %v1105, 1
      %v1107 = vadd.f32 %v1105, %v1106
      %v1108 = vadd.f32 %v685, %v1107
      %v1109 = vld [vmem:[%s1 + $0x80] sm:$0xf]
      %v1110 = vld [vmem:[%s1 + $0x84] sm:$0xf]
      %v1111 = vld [vmem:[%s1 + $0x88] sm:$0xf]
      %v1112 = vld [vmem:[%s1 + $0x8c] sm:$0xf]
      %v1113 = vld [vmem:[%s1 + $0x90] sm:$0xf]
      %v1114 = vld [vmem:[%s1 + $0x94] sm:$0xf]
      %v1115 = vld [vmem:[%s1 + $0x98] sm:$0xf]
      %v1116 = vld [vmem:[%s1 + $0x9c] sm:$0xf]
      %v1117 = vld [vmem:[%s1 + $0xa0] sm:$0xf]
      %v1118 = vld [vmem:[%s1 + $0xa4] sm:$0xf]
      %v1119 = vld [vmem:[%s1 + $0xa8] sm:$0xf]
      %v1120 = vld [vmem:[%s1 + $0xac] sm:$0xf]
      %v1121 = vld [vmem:[%s1 + $0xb0] sm:$0xf]
      %v1122 = vld [vmem:[%s1 + $0xb4] sm:$0xf]
      %v1123 = vld [vmem:[%s1 + $0xb8] sm:$0xf]
      %v1124 = vld [vmem:[%s1 + $0xbc] sm:$0xf]
      %v1125 = vld [vmem:[%s2 + $0x100] sm:$0xff]
      %v1126 = vld [vmem:[%s2 + $0x108] sm:$0xff]
      %v1127 = vld [vmem:[%s2 + $0x110] sm:$0xff]
      %v1128 = vld [vmem:[%s2 + $0x118] sm:$0xff]
      %v1129 = vld [vmem:[%s2 + $0x120] sm:$0xff]
      %v1130 = vld [vmem:[%s2 + $0x128] sm:$0xff]
      %v1131 = vld [vmem:[%s2 + $0x130] sm:$0xff]
      %v1132 = vld [vmem:[%s2 + $0x138] sm:$0xff]
      %v1133 = vld [vmem:[%s2 + $0x140] sm:$0xff]
      %v1134 = vld [vmem:[%s2 + $0x148] sm:$0xff]
      %v1135 = vld [vmem:[%s2 + $0x150] sm:$0xff]
      %v1136 = vld [vmem:[%s2 + $0x158] sm:$0xff]
      %v1137 = vld [vmem:[%s2 + $0x160] sm:$0xff]
      %v1138 = vld [vmem:[%s2 + $0x168] sm:$0xff]
      %v1139 = vld [vmem:[%s2 + $0x170] sm:$0xff]
      %v1140 = vld [vmem:[%s2 + $0x178] sm:$0xff]
      %1142 = vset.pattern.permute.xlu0 0
      %1143 = vperm.xlu0 %1142, %v1125
      %v1144 = vpop.permute.xlu0 %1143
      %1147 = vset.pattern.permute.xlu0 0
      %1148 = vperm.xlu0 %1147, %v1126
      %v1149 = vpop.permute.xlu0 %1148
      %1152 = vset.pattern.permute.xlu0 0
      %1153 = vperm.xlu0 %1152, %v1127
      %v1154 = vpop.permute.xlu0 %1153
      %1157 = vset.pattern.permute.xlu0 0
      %1158 = vperm.xlu0 %1157, %v1128
      %v1159 = vpop.permute.xlu0 %1158
      %1162 = vset.pattern.permute.xlu0 0
      %1163 = vperm.xlu0 %1162, %v1129
      %v1164 = vpop.permute.xlu0 %1163
      %1167 = vset.pattern.permute.xlu0 0
      %1168 = vperm.xlu0 %1167, %v1130
      %v1169 = vpop.permute.xlu0 %1168
      %1172 = vset.pattern.permute.xlu0 0
      %1173 = vperm.xlu0 %1172, %v1131
      %v1174 = vpop.permute.xlu0 %1173
      %1177 = vset.pattern.permute.xlu0 0
      %1178 = vperm.xlu0 %1177, %v1132
      %v1179 = vpop.permute.xlu0 %1178
      %1182 = vset.pattern.permute.xlu0 0
      %1183 = vperm.xlu0 %1182, %v1133
      %v1184 = vpop.permute.xlu0 %1183
      %1187 = vset.pattern.permute.xlu0 0
      %1188 = vperm.xlu0 %1187, %v1134
      %v1189 = vpop.permute.xlu0 %1188
      %1192 = vset.pattern.permute.xlu0 0
      %1193 = vperm.xlu0 %1192, %v1135
      %v1194 = vpop.permute.xlu0 %1193
      %1197 = vset.pattern.permute.xlu0 0
      %1198 = vperm.xlu0 %1197, %v1136
      %v1199 = vpop.permute.xlu0 %1198
      %1202 = vset.pattern.permute.xlu0 0
      %1203 = vperm.xlu0 %1202, %v1137
      %v1204 = vpop.permute.xlu0 %1203
      %1207 = vset.pattern.permute.xlu0 0
      %1208 = vperm.xlu0 %1207, %v1138
      %v1209 = vpop.permute.xlu0 %1208
      %1212 = vset.pattern.permute.xlu0 0
      %1213 = vperm.xlu0 %1212, %v1139
      %v1214 = vpop.permute.xlu0 %1213
      %1217 = vset.pattern.permute.xlu0 0
      %1218 = vperm.xlu0 %1217, %v1140
      %v1219 = vpop.permute.xlu0 %1218
      %v1237 = vunpack.c.l.b16 %v1109
      %v1238 = vunpack.c.l.b16 %v1110
      %v1239 = vunpack.c.l.b16 %v1111
      %v1240 = vunpack.c.l.b16 %v1112
      %v1241 = vunpack.c.l.b16 %v1113
      %v1242 = vunpack.c.l.b16 %v1114
      %v1243 = vunpack.c.l.b16 %v1115
      %v1244 = vunpack.c.l.b16 %v1116
      %v1245 = vunpack.c.l.b16 %v1117
      %v1246 = vunpack.c.l.b16 %v1118
      %v1247 = vunpack.c.l.b16 %v1119
      %v1248 = vunpack.c.l.b16 %v1120
      %v1249 = vunpack.c.l.b16 %v1121
      %v1250 = vunpack.c.l.b16 %v1122
      %v1251 = vunpack.c.l.b16 %v1123
      %v1252 = vunpack.c.l.b16 %v1124
      %v1253 = vpack.c.b16 %v1238, %v1237
      %v1254 = vpack.c.b16 %v1240, %v1239
      %v1255 = vpack.c.b16 %v1242, %v1241
      %v1256 = vpack.c.b16 %v1244, %v1243
      %v1257 = vpack.c.b16 %v1246, %v1245
      %v1258 = vpack.c.b16 %v1248, %v1247
      %v1259 = vpack.c.b16 %v1250, %v1249
      %v1260 = vpack.c.b16 %v1252, %v1251
      %v1262 = vsel %vm410, %v1253, 0
      %v1265 = vsel %vm410, %v1254, 0
      %v1268 = vsel %vm410, %v1255, 0
      %v1271 = vsel %vm410, %v1256, 0
      %v1274 = vsel %vm410, %v1257, 0
      %v1277 = vsel %vm410, %v1258, 0
      %v1280 = vsel %vm410, %v1259, 0
      %v1283 = vsel %vm410, %v1260, 0
      %1285 = vmatprep.subr.bf16.mxu0 0
      %1286 = vmatpush1.bf16.msra.mxu0 %v437
      %1287 = vmatprep.subr.bf16.mxu0 0
      %1288 = vmatpush1.bf16.msra.mxu0 0
      %1289 = vmatprep.subr.bf16.mxu0 0
      %1290 = vmatpush1.bf16.msra.mxu0 0
      %1291 = vmatprep.subr.bf16.mxu0 0
      %1292 = vmatpush1.bf16.msra.mxu0 0
      %1293 = vmatprep.subr.bf16.mxu0 0
      %1294 = vmatpush1.bf16.msra.mxu0 0
      %1295 = vmatprep.subr.bf16.mxu0 0
      %1296 = vmatpush1.bf16.msra.mxu0 0
      %1297 = vmatprep.subr.bf16.mxu0 0
      %1298 = vmatpush1.bf16.msra.mxu0 0
      %1299 = vmatprep.subr.bf16.mxu0 0
      %1300 = vmatpush1.bf16.msra.mxu0 0
      %1301 = vmatprep.subr.bf16.mxu0 0
      %1302 = vmatpush1.bf16.msra.mxu0 0
      %1303 = vmatprep.subr.bf16.mxu0 0
      %1304 = vmatpush1.bf16.msra.mxu0 0
      %1305 = vmatprep.subr.bf16.mxu0 0
      %1306 = vmatpush1.bf16.msra.mxu0 0
      %1307 = vmatprep.subr.bf16.mxu0 0
      %1308 = vmatpush1.bf16.msra.mxu0 0
      %1309 = vmatprep.subr.bf16.mxu0 0
      %1310 = vmatpush1.bf16.msra.mxu0 0
      %1311 = vmatprep.subr.bf16.mxu0 0
      %1312 = vmatpush1.bf16.msra.mxu0 0
      %1313 = vmatprep.subr.bf16.mxu0 0
      %1314 = vmatpush1.bf16.msra.mxu0 0
      %1315 = vmatprep.subr.bf16.mxu0 0
      %1316 = vmatpush1.bf16.msra.mxu0 0
      %1317 = vmatprep.mubr.bf16.mxu0 0
      %1318 = vmatmul.mubr.bf16.gmra.mrb[0].mxu0 %v1262
      %v1319 = vpop.f32.mrb[0].mxu0
      %v1320 = vadd.f32 %v1144, %v1319
      %v1321 = vpop.f32.mrb[0].mxu0
      %v1322 = vpop.f32.mrb[0].mxu0
      %v1323 = vadd.f32 %v1149, %v1322
      %v1324 = vpop.f32.mrb[0].mxu0
      %1325 = vmatprep.mubr.bf16.mxu0 0
      %1326 = vmatmul.mubr.bf16.gmra.mrb[0].mxu0 %v1265
      %v1327 = vpop.f32.mrb[0].mxu0
      %v1328 = vadd.f32 %v1154, %v1327
      %v1329 = vpop.f32.mrb[0].mxu0
      %v1330 = vpop.f32.mrb[0].mxu0
      %v1331 = vadd.f32 %v1159, %v1330
      %v1332 = vpop.f32.mrb[0].mxu0
      %1333 = vmatprep.mubr.bf16.mxu0 0
      %1334 = vmatmul.mubr.bf16.gmra.mrb[0].mxu0 %v1268
      %v1335 = vpop.f32.mrb[0].mxu0
      %v1336 = vadd.f32 %v1164, %v1335
      %v1337 = vpop.f32.mrb[0].mxu0
      %v1338 = vpop.f32.mrb[0].mxu0
      %v1339 = vadd.f32 %v1169, %v1338
      %v1340 = vpop.f32.mrb[0].mxu0
      %1341 = vmatprep.mubr.bf16.mxu0 0
      %1342 = vmatmul.mubr.bf16.gmra.mrb[0].mxu0 %v1271
      %v1343 = vpop.f32.mrb[0].mxu0
      %v1344 = vadd.f32 %v1174, %v1343
      %v1345 = vpop.f32.mrb[0].mxu0
      %v1346 = vpop.f32.mrb[0].mxu0
      %v1347 = vadd.f32 %v1179, %v1346
      %v1348 = vpop.f32.mrb[0].mxu0
      %1349 = vmatprep.mubr.bf16.mxu0 0
      %1350 = vmatmul.mubr.bf16.gmra.mrb[0].mxu0 %v1274
      %v1351 = vpop.f32.mrb[0].mxu0
      %v1352 = vadd.f32 %v1184, %v1351
      %v1353 = vpop.f32.mrb[0].mxu0
      %v1354 = vpop.f32.mrb[0].mxu0
      %v1355 = vadd.f32 %v1189, %v1354
      %v1356 = vpop.f32.mrb[0].mxu0
      %1357 = vmatprep.mubr.bf16.mxu0 0
      %1358 = vmatmul.mubr.bf16.gmra.mrb[0].mxu0 %v1277
      %v1359 = vpop.f32.mrb[0].mxu0
      %v1360 = vadd.f32 %v1194, %v1359
      %v1361 = vpop.f32.mrb[0].mxu0
      %v1362 = vpop.f32.mrb[0].mxu0
      %v1363 = vadd.f32 %v1199, %v1362
      %v1364 = vpop.f32.mrb[0].mxu0
      %1365 = vmatprep.mubr.bf16.mxu0 0
      %1366 = vmatmul.mubr.bf16.gmra.mrb[0].mxu0 %v1280
      %v1367 = vpop.f32.mrb[0].mxu0
      %v1368 = vadd.f32 %v1204, %v1367
      %v1369 = vpop.f32.mrb[0].mxu0
      %v1370 = vpop.f32.mrb[0].mxu0
      %v1371 = vadd.f32 %v1209, %v1370
      %v1372 = vpop.f32.mrb[0].mxu0
      %1373 = vmatprep.mubr.bf16.mxu0 0
      %1374 = vmatmul.mubr.bf16.gmra.mrb[0].mxu0 %v1283
      %v1375 = vpop.f32.mrb[0].mxu0
      %v1376 = vadd.f32 %v1214, %v1375
      %v1377 = vpop.f32.mrb[0].mxu0
      %v1378 = vpop.f32.mrb[0].mxu0
      %v1379 = vadd.f32 %v1219, %v1378
      %v1380 = vpop.f32.mrb[0].mxu0
      %1381 = vdwg.mxu0
      %v1382 = vmax.f32 %v1320, 0.0
      %v1383 = vmax.f32 %v1323, 0.0
      %v1384 = vmax.f32 %v1328, 0.0
      %v1385 = vmax.f32 %v1331, 0.0
      %v1386 = vmax.f32 %v1336, 0.0
      %v1387 = vmax.f32 %v1339, 0.0
      %v1388 = vmax.f32 %v1344, 0.0
      %v1389 = vmax.f32 %v1347, 0.0
      %v1390 = vmax.f32 %v1352, 0.0
      %v1391 = vmax.f32 %v1355, 0.0
      %v1392 = vmax.f32 %v1360, 0.0
      %v1393 = vmax.f32 %v1363, 0.0
      %v1394 = vmax.f32 %v1368, 0.0
      %v1395 = vmax.f32 %v1371, 0.0
      %v1396 = vmax.f32 %v1376, 0.0
      %v1397 = vmax.f32 %v1379, 0.0
      %v1398 = vld [vmem:[%s3 + $0x100] sm:$0xff]
      %v1399 = vld [vmem:[%s3 + $0x108] sm:$0xff]
      %v1400 = vld [vmem:[%s3 + $0x110] sm:$0xff]
      %v1401 = vld [vmem:[%s3 + $0x118] sm:$0xff]
      %v1402 = vld [vmem:[%s3 + $0x120] sm:$0xff]
      %v1403 = vld [vmem:[%s3 + $0x128] sm:$0xff]
      %v1404 = vld [vmem:[%s3 + $0x130] sm:$0xff]
      %v1405 = vld [vmem:[%s3 + $0x138] sm:$0xff]
      %v1406 = vld [vmem:[%s3 + $0x140] sm:$0xff]
      %v1407 = vld [vmem:[%s3 + $0x148] sm:$0xff]
      %v1408 = vld [vmem:[%s3 + $0x150] sm:$0xff]
      %v1409 = vld [vmem:[%s3 + $0x158] sm:$0xff]
      %v1410 = vld [vmem:[%s3 + $0x160] sm:$0xff]
      %v1411 = vld [vmem:[%s3 + $0x168] sm:$0xff]
      %v1412 = vld [vmem:[%s3 + $0x170] sm:$0xff]
      %v1413 = vld [vmem:[%s3 + $0x178] sm:$0xff]
      %1415 = vset.pattern.permute.xlu0 0
      %1416 = vperm.xlu0 %1415, %v1398
      %v1417 = vpop.permute.xlu0 %1416
      %1420 = vset.pattern.permute.xlu0 0
      %1421 = vperm.xlu0 %1420, %v1399
      %v1422 = vpop.permute.xlu0 %1421
      %1425 = vset.pattern.permute.xlu0 0
      %1426 = vperm.xlu0 %1425, %v1400
      %v1427 = vpop.permute.xlu0 %1426
      %1430 = vset.pattern.permute.xlu0 0
      %1431 = vperm.xlu0 %1430, %v1401
      %v1432 = vpop.permute.xlu0 %1431
      %1435 = vset.pattern.permute.xlu0 0
      %1436 = vperm.xlu0 %1435, %v1402
      %v1437 = vpop.permute.xlu0 %1436
      %1440 = vset.pattern.permute.xlu0 0
      %1441 = vperm.xlu0 %1440, %v1403
      %v1442 = vpop.permute.xlu0 %1441
      %1445 = vset.pattern.permute.xlu0 0
      %1446 = vperm.xlu0 %1445, %v1404
      %v1447 = vpop.permute.xlu0 %1446
      %1450 = vset.pattern.permute.xlu0 0
      %1451 = vperm.xlu0 %1450, %v1405
      %v1452 = vpop.permute.xlu0 %1451
      %1455 = vset.pattern.permute.xlu0 0
      %1456 = vperm.xlu0 %1455, %v1406
      %v1457 = vpop.permute.xlu0 %1456
      %1460 = vset.pattern.permute.xlu0 0
      %1461 = vperm.xlu0 %1460, %v1407
      %v1462 = vpop.permute.xlu0 %1461
      %1465 = vset.pattern.permute.xlu0 0
      %1466 = vperm.xlu0 %1465, %v1408
      %v1467 = vpop.permute.xlu0 %1466
      %1470 = vset.pattern.permute.xlu0 0
      %1471 = vperm.xlu0 %1470, %v1409
      %v1472 = vpop.permute.xlu0 %1471
      %1475 = vset.pattern.permute.xlu0 0
      %1476 = vperm.xlu0 %1475, %v1410
      %v1477 = vpop.permute.xlu0 %1476
      %1480 = vset.pattern.permute.xlu0 0
      %1481 = vperm.xlu0 %1480, %v1411
      %v1482 = vpop.permute.xlu0 %1481
      %1485 = vset.pattern.permute.xlu0 0
      %1486 = vperm.xlu0 %1485, %v1412
      %v1487 = vpop.permute.xlu0 %1486
      %1490 = vset.pattern.permute.xlu0 0
      %1491 = vperm.xlu0 %1490, %v1413
      %v1492 = vpop.permute.xlu0 %1491
      %v1494 = vmul.f32 %v1382, %v1417
      %v1495 = vmul.f32 %v1383, %v1422
      %v1496 = vmul.f32 %v1384, %v1427
      %v1497 = vmul.f32 %v1385, %v1432
      %v1498 = vmul.f32 %v1386, %v1437
      %v1499 = vmul.f32 %v1387, %v1442
      %v1500 = vmul.f32 %v1388, %v1447
      %v1501 = vmul.f32 %v1389, %v1452
      %v1502 = vmul.f32 %v1390, %v1457
      %v1503 = vmul.f32 %v1391, %v1462
      %v1504 = vmul.f32 %v1392, %v1467
      %v1505 = vmul.f32 %v1393, %v1472
      %v1506 = vmul.f32 %v1394, %v1477
      %v1507 = vmul.f32 %v1395, %v1482
      %v1508 = vmul.f32 %v1396, %v1487
      %v1509 = vmul.f32 %v1397, %v1492
      %v1510 = vadd.f32 %v1494, %v1495
      %v1511 = vadd.f32 %v1510, %v1496
      %v1512 = vadd.f32 %v1511, %v1497
      %v1513 = vadd.f32 %v1512, %v1498
      %v1514 = vadd.f32 %v1513, %v1499
      %v1515 = vadd.f32 %v1514, %v1500
      %v1516 = vadd.f32 %v1515, %v1501
      %v1517 = vadd.f32 %v1516, %v1502
      %v1518 = vadd.f32 %v1517, %v1503
      %v1519 = vadd.f32 %v1518, %v1504
      %v1520 = vadd.f32 %v1519, %v1505
      %v1521 = vadd.f32 %v1520, %v1506
      %v1522 = vadd.f32 %v1521, %v1507
      %v1523 = vadd.f32 %v1522, %v1508
      %v1524 = vadd.f32 %v1523, %v1509
      %v1525 = vrot.slane %v1524, 4
      %v1526 = vadd.f32 %v1524, %v1525
      %v1527 = vrot.slane %v1526, 2
      %v1528 = vadd.f32 %v1526, %v1527
      %v1529 = vrot.slane %v1528, 1
      %v1530 = vadd.f32 %v1528, %v1529
      %v1531 = vadd.f32 %v1108, %v1530
      %v1532 = vld [vmem:[%s1 + $0xc0] sm:$0xf]
      %v1533 = vld [vmem:[%s1 + $0xc4] sm:$0xf]
      %v1534 = vld [vmem:[%s1 + $0xc8] sm:$0xf]
      %v1535 = vld [vmem:[%s1 + $0xcc] sm:$0xf]
      %v1536 = vld [vmem:[%s1 + $0xd0] sm:$0xf]
      %v1537 = vld [vmem:[%s1 + $0xd4] sm:$0xf]
      %v1538 = vld [vmem:[%s1 + $0xd8] sm:$0xf]
      %v1539 = vld [vmem:[%s1 + $0xdc] sm:$0xf]
      %v1540 = vld [vmem:[%s1 + $0xe0] sm:$0xf]
      %v1541 = vld [vmem:[%s1 + $0xe4] sm:$0xf]
      %v1542 = vld [vmem:[%s1 + $0xe8] sm:$0xf]
      %v1543 = vld [vmem:[%s1 + $0xec] sm:$0xf]
      %v1544 = vld [vmem:[%s1 + $0xf0] sm:$0xf]
      %v1545 = vld [vmem:[%s1 + $0xf4] sm:$0xf]
      %v1546 = vld [vmem:[%s1 + $0xf8] sm:$0xf]
      %v1547 = vld [vmem:[%s1 + $0xfc] sm:$0xf]
      %v1548 = vld [vmem:[%s2 + $0x180] sm:$0xff]
      %v1549 = vld [vmem:[%s2 + $0x188] sm:$0xff]
      %v1550 = vld [vmem:[%s2 + $0x190] sm:$0xff]
      %v1551 = vld [vmem:[%s2 + $0x198] sm:$0xff]
      %v1552 = vld [vmem:[%s2 + $0x1a0] sm:$0xff]
      %v1553 = vld [vmem:[%s2 + $0x1a8] sm:$0xff]
      %v1554 = vld [vmem:[%s2 + $0x1b0] sm:$0xff]
      %v1555 = vld [vmem:[%s2 + $0x1b8] sm:$0xff]
      %v1556 = vld [vmem:[%s2 + $0x1c0] sm:$0xff]
      %v1557 = vld [vmem:[%s2 + $0x1c8] sm:$0xff]
      %v1558 = vld [vmem:[%s2 + $0x1d0] sm:$0xff]
      %v1559 = vld [vmem:[%s2 + $0x1d8] sm:$0xff]
      %v1560 = vld [vmem:[%s2 + $0x1e0] sm:$0xff]
      %v1561 = vld [vmem:[%s2 + $0x1e8] sm:$0xff]
      %v1562 = vld [vmem:[%s2 + $0x1f0] sm:$0xff]
      %v1563 = vld [vmem:[%s2 + $0x1f8] sm:$0xff]
      %1565 = vset.pattern.permute.xlu0 0
      %1566 = vperm.xlu0 %1565, %v1548
      %v1567 = vpop.permute.xlu0 %1566
      %1570 = vset.pattern.permute.xlu0 0
      %1571 = vperm.xlu0 %1570, %v1549
      %v1572 = vpop.permute.xlu0 %1571
      %1575 = vset.pattern.permute.xlu0 0
      %1576 = vperm.xlu0 %1575, %v1550
      %v1577 = vpop.permute.xlu0 %1576
      %1580 = vset.pattern.permute.xlu0 0
      %1581 = vperm.xlu0 %1580, %v1551
      %v1582 = vpop.permute.xlu0 %1581
      %1585 = vset.pattern.permute.xlu0 0
      %1586 = vperm.xlu0 %1585, %v1552
      %v1587 = vpop.permute.xlu0 %1586
      %1590 = vset.pattern.permute.xlu0 0
      %1591 = vperm.xlu0 %1590, %v1553
      %v1592 = vpop.permute.xlu0 %1591
      %1595 = vset.pattern.permute.xlu0 0
      %1596 = vperm.xlu0 %1595, %v1554
      %v1597 = vpop.permute.xlu0 %1596
      %1600 = vset.pattern.permute.xlu0 0
      %1601 = vperm.xlu0 %1600, %v1555
      %v1602 = vpop.permute.xlu0 %1601
      %1605 = vset.pattern.permute.xlu0 0
      %1606 = vperm.xlu0 %1605, %v1556
      %v1607 = vpop.permute.xlu0 %1606
      %1610 = vset.pattern.permute.xlu0 0
      %1611 = vperm.xlu0 %1610, %v1557
      %v1612 = vpop.permute.xlu0 %1611
      %1615 = vset.pattern.permute.xlu0 0
      %1616 = vperm.xlu0 %1615, %v1558
      %v1617 = vpop.permute.xlu0 %1616
      %1620 = vset.pattern.permute.xlu0 0
      %1621 = vperm.xlu0 %1620, %v1559
      %v1622 = vpop.permute.xlu0 %1621
      %1625 = vset.pattern.permute.xlu0 0
      %1626 = vperm.xlu0 %1625, %v1560
      %v1627 = vpop.permute.xlu0 %1626
      %1630 = vset.pattern.permute.xlu0 0
      %1631 = vperm.xlu0 %1630, %v1561
      %v1632 = vpop.permute.xlu0 %1631
      %1635 = vset.pattern.permute.xlu0 0
      %1636 = vperm.xlu0 %1635, %v1562
      %v1637 = vpop.permute.xlu0 %1636
      %1640 = vset.pattern.permute.xlu0 0
      %1641 = vperm.xlu0 %1640, %v1563
      %v1642 = vpop.permute.xlu0 %1641
      %v1660 = vunpack.c.l.b16 %v1532
      %v1661 = vunpack.c.l.b16 %v1533
      %v1662 = vunpack.c.l.b16 %v1534
      %v1663 = vunpack.c.l.b16 %v1535
      %v1664 = vunpack.c.l.b16 %v1536
      %v1665 = vunpack.c.l.b16 %v1537
      %v1666 = vunpack.c.l.b16 %v1538
      %v1667 = vunpack.c.l.b16 %v1539
      %v1668 = vunpack.c.l.b16 %v1540
      %v1669 = vunpack.c.l.b16 %v1541
      %v1670 = vunpack.c.l.b16 %v1542
      %v1671 = vunpack.c.l.b16 %v1543
      %v1672 = vunpack.c.l.b16 %v1544
      %v1673 = vunpack.c.l.b16 %v1545
      %v1674 = vunpack.c.l.b16 %v1546
      %v1675 = vunpack.c.l.b16 %v1547
      %v1676 = vpack.c.b16 %v1661, %v1660
      %v1677 = vpack.c.b16 %v1663, %v1662
      %v1678 = vpack.c.b16 %v1665, %v1664
      %v1679 = vpack.c.b16 %v1667, %v1666
      %v1680 = vpack.c.b16 %v1669, %v1668
      %v1681 = vpack.c.b16 %v1671, %v1670
      %v1682 = vpack.c.b16 %v1673, %v1672
      %v1683 = vpack.c.b16 %v1675, %v1674
      %v1685 = vsel %vm410, %v1676, 0
      %v1688 = vsel %vm410, %v1677, 0
      %v1691 = vsel %vm410, %v1678, 0
      %v1694 = vsel %vm410, %v1679, 0
      %v1697 = vsel %vm410, %v1680, 0
      %v1700 = vsel %vm410, %v1681, 0
      %v1703 = vsel %vm410, %v1682, 0
      %v1706 = vsel %vm410, %v1683, 0
      %1708 = vmatprep.subr.bf16.mxu0 0
      %1709 = vmatpush1.bf16.msra.mxu0 %v437
      %1710 = vmatprep.subr.bf16.mxu0 0
      %1711 = vmatpush1.bf16.msra.mxu0 0
      %1712 = vmatprep.subr.bf16.mxu0 0
      %1713 = vmatpush1.bf16.msra.mxu0 0
      %1714 = vmatprep.subr.bf16.mxu0 0
      %1715 = vmatpush1.bf16.msra.mxu0 0
      %1716 = vmatprep.subr.bf16.mxu0 0
      %1717 = vmatpush1.bf16.msra.mxu0 0
      %1718 = vmatprep.subr.bf16.mxu0 0
      %1719 = vmatpush1.bf16.msra.mxu0 0
      %1720 = vmatprep.subr.bf16.mxu0 0
      %1721 = vmatpush1.bf16.msra.mxu0 0
      %1722 = vmatprep.subr.bf16.mxu0 0
      %1723 = vmatpush1.bf16.msra.mxu0 0
      %1724 = vmatprep.subr.bf16.mxu0 0
      %1725 = vmatpush1.bf16.msra.mxu0 0
      %1726 = vmatprep.subr.bf16.mxu0 0
      %1727 = vmatpush1.bf16.msra.mxu0 0
      %1728 = vmatprep.subr.bf16.mxu0 0
      %1729 = vmatpush1.bf16.msra.mxu0 0
      %1730 = vmatprep.subr.bf16.mxu0 0
      %1731 = vmatpush1.bf16.msra.mxu0 0
      %1732 = vmatprep.subr.bf16.mxu0 0
      %1733 = vmatpush1.bf16.msra.mxu0 0
      %1734 = vmatprep.subr.bf16.mxu0 0
      %1735 = vmatpush1.bf16.msra.mxu0 0
      %1736 = vmatprep.subr.bf16.mxu0 0
      %1737 = vmatpush1.bf16.msra.mxu0 0
      %1738 = vmatprep.subr.bf16.mxu0 0
      %1739 = vmatpush1.bf16.msra.mxu0 0
      %1740 = vmatprep.mubr.bf16.mxu0 0
      %1741 = vmatmul.mubr.bf16.gmra.mrb[0].mxu0 %v1685
      %v1742 = vpop.f32.mrb[0].mxu0
      %v1743 = vadd.f32 %v1567, %v1742
      %v1744 = vpop.f32.mrb[0].mxu0
      %v1745 = vpop.f32.mrb[0].mxu0
      %v1746 = vadd.f32 %v1572, %v1745
      %v1747 = vpop.f32.mrb[0].mxu0
      %1748 = vmatprep.mubr.bf16.mxu0 0
      %1749 = vmatmul.mubr.bf16.gmra.mrb[0].mxu0 %v1688
      %v1750 = vpop.f32.mrb[0].mxu0
      %v1751 = vadd.f32 %v1577, %v1750
      %v1752 = vpop.f32.mrb[0].mxu0
      %v1753 = vpop.f32.mrb[0].mxu0
      %v1754 = vadd.f32 %v1582, %v1753
      %v1755 = vpop.f32.mrb[0].mxu0
      %1756 = vmatprep.mubr.bf16.mxu0 0
      %1757 = vmatmul.mubr.bf16.gmra.mrb[0].mxu0 %v1691
      %v1758 = vpop.f32.mrb[0].mxu0
      %v1759 = vadd.f32 %v1587, %v1758
      %v1760 = vpop.f32.mrb[0].mxu0
      %v1761 = vpop.f32.mrb[0].mxu0
      %v1762 = vadd.f32 %v1592, %v1761
      %v1763 = vpop.f32.mrb[0].mxu0
      %1764 = vmatprep.mubr.bf16.mxu0 0
      %1765 = vmatmul.mubr.bf16.gmra.mrb[0].mxu0 %v1694
      %v1766 = vpop.f32.mrb[0].mxu0
      %v1767 = vadd.f32 %v1597, %v1766
      %v1768 = vpop.f32.mrb[0].mxu0
      %v1769 = vpop.f32.mrb[0].mxu0
      %v1770 = vadd.f32 %v1602, %v1769
      %v1771 = vpop.f32.mrb[0].mxu0
      %1772 = vmatprep.mubr.bf16.mxu0 0
      %1773 = vmatmul.mubr.bf16.gmra.mrb[0].mxu0 %v1697
      %v1774 = vpop.f32.mrb[0].mxu0
      %v1775 = vadd.f32 %v1607, %v1774
      %v1776 = vpop.f32.mrb[0].mxu0
      %v1777 = vpop.f32.mrb[0].mxu0
      %v1778 = vadd.f32 %v1612, %v1777
      %v1779 = vpop.f32.mrb[0].mxu0
      %1780 = vmatprep.mubr.bf16.mxu0 0
      %1781 = vmatmul.mubr.bf16.gmra.mrb[0].mxu0 %v1700
      %v1782 = vpop.f32.mrb[0].mxu0
      %v1783 = vadd.f32 %v1617, %v1782
      %v1784 = vpop.f32.mrb[0].mxu0
      %v1785 = vpop.f32.mrb[0].mxu0
      %v1786 = vadd.f32 %v1622, %v1785
      %v1787 = vpop.f32.mrb[0].mxu0
      %1788 = vmatprep.mubr.bf16.mxu0 0
      %1789 = vmatmul.mubr.bf16.gmra.mrb[0].mxu0 %v1703
      %v1790 = vpop.f32.mrb[0].mxu0
      %v1791 = vadd.f32 %v1627, %v1790
      %v1792 = vpop.f32.mrb[0].mxu0
      %v1793 = vpop.f32.mrb[0].mxu0
      %v1794 = vadd.f32 %v1632, %v1793
      %v1795 = vpop.f32.mrb[0].mxu0
      %1796 = vmatprep.mubr.bf16.mxu0 0
      %1797 = vmatmul.mubr.bf16.gmra.mrb[0].mxu0 %v1706
      %v1798 = vpop.f32.mrb[0].mxu0
      %v1799 = vadd.f32 %v1637, %v1798
      %v1800 = vpop.f32.mrb[0].mxu0
      %v1801 = vpop.f32.mrb[0].mxu0
      %v1802 = vadd.f32 %v1642, %v1801
      %v1803 = vpop.f32.mrb[0].mxu0
      %1804 = vdwg.mxu0
      %v1805 = vmax.f32 %v1743, 0.0
      %v1806 = vmax.f32 %v1746, 0.0
      %v1807 = vmax.f32 %v1751, 0.0
      %v1808 = vmax.f32 %v1754, 0.0
      %v1809 = vmax.f32 %v1759, 0.0
      %v1810 = vmax.f32 %v1762, 0.0
      %v1811 = vmax.f32 %v1767, 0.0
      %v1812 = vmax.f32 %v1770, 0.0
      %v1813 = vmax.f32 %v1775, 0.0
      %v1814 = vmax.f32 %v1778, 0.0
      %v1815 = vmax.f32 %v1783, 0.0
      %v1816 = vmax.f32 %v1786, 0.0
      %v1817 = vmax.f32 %v1791, 0.0
      %v1818 = vmax.f32 %v1794, 0.0
      %v1819 = vmax.f32 %v1799, 0.0
      %v1820 = vmax.f32 %v1802, 0.0
      %v1821 = vld [vmem:[%s3 + $0x180] sm:$0xff]
      %v1822 = vld [vmem:[%s3 + $0x188] sm:$0xff]
      %v1823 = vld [vmem:[%s3 + $0x190] sm:$0xff]
      %v1824 = vld [vmem:[%s3 + $0x198] sm:$0xff]
      %v1825 = vld [vmem:[%s3 + $0x1a0] sm:$0xff]
      %v1826 = vld [vmem:[%s3 + $0x1a8] sm:$0xff]
      %v1827 = vld [vmem:[%s3 + $0x1b0] sm:$0xff]
      %v1828 = vld [vmem:[%s3 + $0x1b8] sm:$0xff]
      %v1829 = vld [vmem:[%s3 + $0x1c0] sm:$0xff]
      %v1830 = vld [vmem:[%s3 + $0x1c8] sm:$0xff]
      %v1831 = vld [vmem:[%s3 + $0x1d0] sm:$0xff]
      %v1832 = vld [vmem:[%s3 + $0x1d8] sm:$0xff]
      %v1833 = vld [vmem:[%s3 + $0x1e0] sm:$0xff]
      %v1834 = vld [vmem:[%s3 + $0x1e8] sm:$0xff]
      %v1835 = vld [vmem:[%s3 + $0x1f0] sm:$0xff]
      %v1836 = vld [vmem:[%s3 + $0x1f8] sm:$0xff]
      %1838 = vset.pattern.permute.xlu0 0
      %1839 = vperm.xlu0 %1838, %v1821
      %v1840 = vpop.permute.xlu0 %1839
      %1843 = vset.pattern.permute.xlu0 0
      %1844 = vperm.xlu0 %1843, %v1822
      %v1845 = vpop.permute.xlu0 %1844
      %1848 = vset.pattern.permute.xlu0 0
      %1849 = vperm.xlu0 %1848, %v1823
      %v1850 = vpop.permute.xlu0 %1849
      %1853 = vset.pattern.permute.xlu0 0
      %1854 = vperm.xlu0 %1853, %v1824
      %v1855 = vpop.permute.xlu0 %1854
      %1858 = vset.pattern.permute.xlu0 0
      %1859 = vperm.xlu0 %1858, %v1825
      %v1860 = vpop.permute.xlu0 %1859
      %1863 = vset.pattern.permute.xlu0 0
      %1864 = vperm.xlu0 %1863, %v1826
      %v1865 = vpop.permute.xlu0 %1864
      %1868 = vset.pattern.permute.xlu0 0
      %1869 = vperm.xlu0 %1868, %v1827
      %v1870 = vpop.permute.xlu0 %1869
      %1873 = vset.pattern.permute.xlu0 0
      %1874 = vperm.xlu0 %1873, %v1828
      %v1875 = vpop.permute.xlu0 %1874
      %1878 = vset.pattern.permute.xlu0 0
      %1879 = vperm.xlu0 %1878, %v1829
      %v1880 = vpop.permute.xlu0 %1879
      %1883 = vset.pattern.permute.xlu0 0
      %1884 = vperm.xlu0 %1883, %v1830
      %v1885 = vpop.permute.xlu0 %1884
      %1888 = vset.pattern.permute.xlu0 0
      %1889 = vperm.xlu0 %1888, %v1831
      %v1890 = vpop.permute.xlu0 %1889
      %1893 = vset.pattern.permute.xlu0 0
      %1894 = vperm.xlu0 %1893, %v1832
      %v1895 = vpop.permute.xlu0 %1894
      %1898 = vset.pattern.permute.xlu0 0
      %1899 = vperm.xlu0 %1898, %v1833
      %v1900 = vpop.permute.xlu0 %1899
      %1903 = vset.pattern.permute.xlu0 0
      %1904 = vperm.xlu0 %1903, %v1834
      %v1905 = vpop.permute.xlu0 %1904
      %1908 = vset.pattern.permute.xlu0 0
      %1909 = vperm.xlu0 %1908, %v1835
      %v1910 = vpop.permute.xlu0 %1909
      %1913 = vset.pattern.permute.xlu0 0
      %1914 = vperm.xlu0 %1913, %v1836
      %v1915 = vpop.permute.xlu0 %1914
      %v1917 = vmul.f32 %v1805, %v1840
      %v1918 = vmul.f32 %v1806, %v1845
      %v1919 = vmul.f32 %v1807, %v1850
      %v1920 = vmul.f32 %v1808, %v1855
      %v1921 = vmul.f32 %v1809, %v1860
      %v1922 = vmul.f32 %v1810, %v1865
      %v1923 = vmul.f32 %v1811, %v1870
      %v1924 = vmul.f32 %v1812, %v1875
      %v1925 = vmul.f32 %v1813, %v1880
      %v1926 = vmul.f32 %v1814, %v1885
      %v1927 = vmul.f32 %v1815, %v1890
      %v1928 = vmul.f32 %v1816, %v1895
      %v1929 = vmul.f32 %v1817, %v1900
      %v1930 = vmul.f32 %v1818, %v1905
      %v1931 = vmul.f32 %v1819, %v1910
      %v1932 = vmul.f32 %v1820, %v1915
      %v1933 = vadd.f32 %v1917, %v1918
      %v1934 = vadd.f32 %v1933, %v1919
      %v1935 = vadd.f32 %v1934, %v1920
      %v1936 = vadd.f32 %v1935, %v1921
      %v1937 = vadd.f32 %v1936, %v1922
      %v1938 = vadd.f32 %v1937, %v1923
      %v1939 = vadd.f32 %v1938, %v1924
      %v1940 = vadd.f32 %v1939, %v1925
      %v1941 = vadd.f32 %v1940, %v1926
      %v1942 = vadd.f32 %v1941, %v1927
      %v1943 = vadd.f32 %v1942, %v1928
      %v1944 = vadd.f32 %v1943, %v1929
      %v1945 = vadd.f32 %v1944, %v1930
      %v1946 = vadd.f32 %v1945, %v1931
      %v1947 = vadd.f32 %v1946, %v1932
      %v1948 = vrot.slane %v1947, 4
      %v1949 = vadd.f32 %v1947, %v1948
      %v1950 = vrot.slane %v1949, 2
      %v1951 = vadd.f32 %v1949, %v1950
      %v1952 = vrot.slane %v1951, 1
      %v1953 = vadd.f32 %v1951, %v1952
      %v1954 = vadd.f32 %v1531, %v1953
      %s1955 = sld [smem:[#allocation2]]
      %v1956 = vstv %s1955
      %v1957 = vadd.f32 %v1954, %v1956
      %1958 = vst [vmem:[%s254] sm:$0x1] %v1957
      %p1959 = scmp.lt.s32.totalorder %s21, 1
      %s1960 = scalar_select %p1959, %s21, 1
      %p1961 = scmp.lt.s32.totalorder %s22, 1
      %s1962 = scalar_select %p1961, %s22, 1
      %s1963 = smul.addr %s1960, 2
      %s1964 = sadd.s32 %s1962, %s1963
      %s1965 = scalar_lea.vmem %s5, %s1964
      // Predicated region
      $region41: #{da_feature_head.1} parent=39 // pred_check
        %p1966 = pneg %p161
      $region42: #{da_feature_head.1} parent=39 // pred_check_branch
        %1968 = sbr.rel (%p1966) target = $region44
      $region43: #{da_feature_head.1} parent=39 // pred_region
        _
      $region44: #{da_feature_head.1} parent=39 // pred_fallthru
        _
    $region40: #{da_feature_head.1} parent=5 // pred_fallthru
      _
    %p1969 = scmp.le.s32.totalorder 2, %s12
    // Predicated region
    $region45: #{da_feature_head.1} parent=5 // pred_check
      %p1970 = pneg %p1969
    $region46: #{da_feature_head.1} parent=5 // pred_check_branch
      %1972 = sbr.rel (%p1970) target = $region48
    $region47: #{da_feature_head.1} parent=5 // pred_region
      %s1973 = ssub.s32 %s12, 2
      // Predicated region
      $region49: #{da_feature_head.1} parent=47 // pred_check
        %p1974 = pneg %p167
      $region50: #{da_feature_head.1} parent=47 // pred_check_branch
        %1976 = sbr.rel (%p1974) target = $region52
      $region51: #{da_feature_head.1} parent=47 // pred_region
        %p1977 = scmp.lt.s32.totalorder %s23, 1
        %s1978 = scalar_select %p1977, %s23, 1
        %p1979 = scmp.lt.s32.totalorder %s24, 1
        %s1980 = scalar_select %p1979, %s24, 1
        %s1981 = smul.addr %s1978, 2
        %s1982 = sadd.s32 %s1980, %s1981
        %s1983 = scalar_lea.vmem %s5, %s1982
      $region52: #{da_feature_head.1} parent=47 // pred_fallthru
        _
    $region48: #{da_feature_head.1} parent=5 // pred_fallthru
      _
  $region6: #{da_feature_head.1} parent=0 // loop_footer
    %s16 = sadd.s32 1, %s12
  $region7: #{da_feature_head.1} parent=0 // loop_footer_branch
    %11 = sbr.rel target = $region3
  $region8: #{da_feature_head.1} parent=0 // loop_exit
    _

// kernel: da_feature_head.1
$region0: #{da_feature_head.1}
  #allocation0 [shape = 'u32[]', space=smem, size = 0x4, offset = 0x4, fixed_abs, tag = 'smem constant byte address 0x4 - core index']
  #allocation1 [shape = 'u32[144,128]{1,0:T(1,128)}', space=vmem, size = 0x12000, scoped, tag = 'internal scratch']
  #allocation2 [shape = 'f32[1,1]{1,0:T(1,128)S(6)}', space=smem, size = 0x200, scoped, tag = 'scoped memory for da_feature_head.1']
  %s0 = inlined_call_operand.vmem [shape: f32[2,4,256], index: 0, kind: input, shape index: {}]
  %s1 = inlined_call_operand.vmem [shape: bf16[512,4], index: 1, kind: input, shape index: {}]
  %s2 = inlined_call_operand.vmem [shape: f32[512,1], index: 2, kind: input, shape index: {}]
  %s3 = inlined_call_operand.vmem [shape: f32[512,1], index: 3, kind: input, shape index: {}]
  %s4 = inlined_call_operand.<no memory space> [shape: f32[1,1], index: 4, kind: input, shape index: {}]
  %s5 = inlined_call_operand.vmem [shape: f32[2,1,256], index: 5, kind: output, shape index: {}]
  %s6 = sld [smem:[#allocation0]]
  $region53: #{da_feature_head.1} parent=0
    _
  %s8 = ssub.s32 1, %s6
  %s9 = scalar_select 0, %s8, %s6
  %10 = sst [smem:[#allocation2]] %s4
  loop: start=0, step=1, limit=6
  $region2: #{da_feature_head.1} parent=0 // loop_pre_header
    _
  $region3: #{da_feature_head.1} parent=0 // loop_header
    %s12 = sphi 0, %s16
    %p13 = scmp.ge.s32.totalorder %s12, 6
    %s19 = sphi 0, %s31
    %s20 = sphi 0, %s27
    %s21 = sphi 0, %s19
    %s22 = sphi 0, %s20
    %s23 = sphi 0, %s21
    %s24 = sphi 0, %s22
    %s36 = sphi 0, %s38
    %s39 = sphi 0, %s36
    %s40 = sphi 0, %s39
    %s56 = sphi 0, %s40
    %s60 = sphi 0, %s60
    %s62 = sphi 0, %s60
    %s63 = sphi 0, %s62
    %s77 = sphi 0, %s63
    %s81 = sphi 0, %s81
    %s83 = sphi 0, %s81
    %s84 = sphi 0, %s83
    %s98 = sphi 0, %s84
    %s102 = sphi 0, %s102
    %s104 = sphi 0, %s102
    %s105 = sphi 0, %s104
    %s119 = sphi 0, %s105
    %s123 = sphi 0, %s123
    %s125 = sphi 0, %s123
    %s126 = sphi 0, %s125
    %s140 = sphi 0, %s126
    %s148 = sphi 0, %s150
    %s151 = sphi 0, %s148
    %s152 = sphi 0, %s151
    %s168 = sphi 0, %s152
  $region4: #{da_feature_head.1} parent=0 // loop_header_branch
    %15 = sbr.rel (%p13) target = $region8
  $region5: #{da_feature_head.1} parent=0 // loop_body
    %s17 = ssub.s32 %s12, 1
    %s18 = ssub.s32 %s12, 2
    %s25 = sadd.s32 1, %s20
    %p26 = scmp.ge.s32.totalorder %s25, 2
    %s27 = scalar_select %p26, 0, %s25
    %s28 = sadd.s32 1, %s19
    %s29 = scalar_select %p26, %s28, %s19
    %p30 = scmp.ge.s32.totalorder %s29, 2
    %s31 = scalar_select %p30, 0, %s29
    %s32 = ssub.s32 %s19, %s31
    %s33 = ssub.s32 %s20, %s27
    %s34 = sor.u32 %s32, %s33
    %p35 = scmp.eq.s32.totalorder %s34, 0
    %s37 = sadd.s32 %s36, 1
    %s38 = scalar_select %p35, %s36, %s37
    %p41 = pneg %p35
    %p42 = scmp.eq.s32.totalorder %s12, 3
    %p43 = por %p41, %p42
    %p44 = scmp.ne.s32.totalorder %s36, %s39
    %p45 = scmp.eq.s32.totalorder %s12, 0
    %p46 = por %p44, %p45
    %p47 = scmp.ne.s32.totalorder %s36, %s39
    %p48 = scmp.eq.s32.totalorder %s17, 3
    %p49 = por %p47, %p48
    %p50 = scmp.ne.s32.totalorder %s39, %s40
    %p51 = scmp.eq.s32.totalorder %s17, 0
    %p52 = por %p50, %p51
    %p53 = scmp.ne.s32.totalorder %s39, %s40
    %p54 = scmp.eq.s32.totalorder %s18, 3
    %p55 = por %p53, %p54
    %p57 = scmp.ne.s32.totalorder %s40, %s56
    %p58 = scmp.eq.s32.totalorder %s18, 0
    %p59 = por %p57, %p58
    %s61 = sadd.s32 %s60, 1
    %p64 = scmp.eq.s32.totalorder %s12, 3
    %p65 = scmp.ne.s32.totalorder %s60, %s62
    %p66 = scmp.eq.s32.totalorder %s12, 0
    %p67 = por %p65, %p66
    %p68 = scmp.ne.s32.totalorder %s60, %s62
    %p69 = scmp.eq.s32.totalorder %s17, 3
    %p70 = por %p68, %p69
    %p71 = scmp.ne.s32.totalorder %s62, %s63
    %p72 = scmp.eq.s32.totalorder %s17, 0
    %p73 = por %p71, %p72
    %p74 = scmp.ne.s32.totalorder %s62, %s63
    %p75 = scmp.eq.s32.totalorder %s18, 3
    %p76 = por %p74, %p75
    %p78 = scmp.ne.s32.totalorder %s63, %s77
    %p79 = scmp.eq.s32.totalorder %s18, 0
    %p80 = por %p78, %p79
    %s82 = sadd.s32 %s81, 1
    %p85 = scmp.eq.s32.totalorder %s12, 3
    %p86 = scmp.ne.s32.totalorder %s81, %s83
    %p87 = scmp.eq.s32.totalorder %s12, 0
    %p88 = por %p86, %p87
    %p89 = scmp.ne.s32.totalorder %s81, %s83
    %p90 = scmp.eq.s32.totalorder %s17, 3
    %p91 = por %p89, %p90
    %p92 = scmp.ne.s32.totalorder %s83, %s84
    %p93 = scmp.eq.s32.totalorder %s17, 0
    %p94 = por %p92, %p93
    %p95 = scmp.ne.s32.totalorder %s83, %s84
    %p96 = scmp.eq.s32.totalorder %s18, 3
    %p97 = por %p95, %p96
    %p99 = scmp.ne.s32.totalorder %s84, %s98
    %p100 = scmp.eq.s32.totalorder %s18, 0
    %p101 = por %p99, %p100
    %s103 = sadd.s32 %s102, 1
    %p106 = scmp.eq.s32.totalorder %s12, 3
    %p107 = scmp.ne.s32.totalorder %s102, %s104
    %p108 = scmp.eq.s32.totalorder %s12, 0
    %p109 = por %p107, %p108
    %p110 = scmp.ne.s32.totalorder %s102, %s104
    %p111 = scmp.eq.s32.totalorder %s17, 3
    %p112 = por %p110, %p111
    %p113 = scmp.ne.s32.totalorder %s104, %s105
    %p114 = scmp.eq.s32.totalorder %s17, 0
    %p115 = por %p113, %p114
    %p116 = scmp.ne.s32.totalorder %s104, %s105
    %p117 = scmp.eq.s32.totalorder %s18, 3
    %p118 = por %p116, %p117
    %p120 = scmp.ne.s32.totalorder %s105, %s119
    %p121 = scmp.eq.s32.totalorder %s18, 0
    %p122 = por %p120, %p121
    %s124 = sadd.s32 %s123, 1
    %p127 = scmp.eq.s32.totalorder %s12, 3
    %p128 = scmp.ne.s32.totalorder %s123, %s125
    %p129 = scmp.eq.s32.totalorder %s12, 0
    %p130 = por %p128, %p129
    %p131 = scmp.ne.s32.totalorder %s123, %s125
    %p132 = scmp.eq.s32.totalorder %s17, 3
    %p133 = por %p131, %p132
    %p134 = scmp.ne.s32.totalorder %s125, %s126
    %p135 = scmp.eq.s32.totalorder %s17, 0
    %p136 = por %p134, %p135
    %p137 = scmp.ne.s32.totalorder %s125, %s126
    %p138 = scmp.eq.s32.totalorder %s18, 3
    %p139 = por %p137, %p138
    %p141 = scmp.ne.s32.totalorder %s126, %s140
    %p142 = scmp.eq.s32.totalorder %s18, 0
    %p143 = por %p141, %p142
    %s144 = ssub.s32 %s19, %s31
    %s145 = ssub.s32 %s20, %s27
    %s146 = sor.u32 %s144, %s145
    %p147 = scmp.eq.s32.totalorder %s146, 0
    %s149 = sadd.s32 %s148, 1
    %s150 = scalar_select %p147, %s148, %s149
    %p153 = pneg %p147
    %p154 = scmp.eq.s32.totalorder %s12, 3
    %p155 = por %p153, %p154
    %p156 = scmp.ne.s32.totalorder %s148, %s151
    %p157 = scmp.eq.s32.totalorder %s12, 0
    %p158 = por %p156, %p157
    %p159 = scmp.ne.s32.totalorder %s148, %s151
    %p160 = scmp.eq.s32.totalorder %s17, 3
    %p161 = por %p159, %p160
    %p162 = scmp.ne.s32.totalorder %s151, %s152
    %p163 = scmp.eq.s32.totalorder %s17, 0
    %p164 = por %p162, %p163
    %p165 = scmp.ne.s32.totalorder %s151, %s152
    %p166 = scmp.eq.s32.totalorder %s18, 3
    %p167 = por %p165, %p166
    %p169 = scmp.ne.s32.totalorder %s152, %s168
    %p170 = scmp.eq.s32.totalorder %s18, 0
    %p171 = por %p169, %p170
    %p172 = scmp.le.s32.totalorder 1, %s12
    %p173 = scmp.lt.s32.totalorder %s12, 5
    %p174 = pnand %p172, %p173
    %p175 = pneg %p174
    // Predicated region
    $region9: #{da_feature_head.1} parent=5 // pred_check
      _
    $region10: #{da_feature_head.1} parent=5 // pred_check_branch
      %177 = sbr.rel (%p174) target = $region12
    $region11: #{da_feature_head.1} parent=5 // pred_region
      %s178 = ssub.s32 %s12, 1
      // Predicated region
      $region13: #{da_feature_head.1} parent=11 // pred_check
        %p179 = pneg %p73
      $region14: #{da_feature_head.1} parent=11 // pred_check_branch
        %181 = sbr.rel (%p179) target = $region16
      $region15: #{da_feature_head.1} parent=11 // pred_region
        _
      $region16: #{da_feature_head.1} parent=11 // pred_fallthru
        _
      // Predicated region
      $region17: #{da_feature_head.1} parent=11 // pred_check
        %p182 = pneg %p94
      $region18: #{da_feature_head.1} parent=11 // pred_check_branch
        %184 = sbr.rel (%p182) target = $region20
      $region19: #{da_feature_head.1} parent=11 // pred_region
        _
      $region20: #{da_feature_head.1} parent=11 // pred_fallthru
        _
      // Predicated region
      $region21: #{da_feature_head.1} parent=11 // pred_check
        %p185 = pneg %p115
      $region22: #{da_feature_head.1} parent=11 // pred_check_branch
        %187 = sbr.rel (%p185) target = $region24
      $region23: #{da_feature_head.1} parent=11 // pred_region
        _
      $region24: #{da_feature_head.1} parent=11 // pred_fallthru
        _
      // Predicated region
      $region25: #{da_feature_head.1} parent=11 // pred_check
        %p188 = pneg %p136
      $region26: #{da_feature_head.1} parent=11 // pred_check_branch
        %190 = sbr.rel (%p188) target = $region28
      $region27: #{da_feature_head.1} parent=11 // pred_region
        _
      $region28: #{da_feature_head.1} parent=11 // pred_fallthru
        _
    $region12: #{da_feature_head.1} parent=5 // pred_fallthru
      _
    %p191 = scmp.lt.s32.totalorder %s12, 4
    // Predicated region
    $region29: #{da_feature_head.1} parent=5 // pred_check
      %p192 = pneg %p191
    $region30: #{da_feature_head.1} parent=5 // pred_check_branch
      %194 = sbr.rel (%p192) target = $region32
    $region31: #{da_feature_head.1} parent=5 // pred_region
      // Predicated region
      $region33: #{da_feature_head.1} parent=31 // pred_check
        %p195 = pneg %p46
      $region34: #{da_feature_head.1} parent=31 // pred_check_branch
        %197 = sbr.rel (%p195) target = $region36
      $region35: #{da_feature_head.1} parent=31 // pred_region
        %p198 = scmp.lt.s32.totalorder %s19, 1
        %s199 = scalar_select %p198, %s19, 1
        %p200 = scmp.lt.s32.totalorder %s20, 1
        %s201 = scalar_select %p200, %s20, 1
        %s202 = smul.addr %s199, 2
        %s203 = sadd.s32 %s201, %s202
        %s204 = smul.addr %s203, 4
        %s205 = scalar_lea.vmem %s0, %s204
      $region36: #{da_feature_head.1} parent=31 // pred_fallthru
        _
    $region32: #{da_feature_head.1} parent=5 // pred_fallthru
      _
    %p206 = scmp.le.s32.totalorder 1, %s12
    %p207 = scmp.lt.s32.totalorder %s12, 5
    %p208 = pnand %p206, %p207
    %p209 = pneg %p208
    // Predicated region
    $region37: #{da_feature_head.1} parent=5 // pred_check
      _
    $region38: #{da_feature_head.1} parent=5 // pred_check_branch
      %211 = sbr.rel (%p208) target = $region40
    $region39: #{da_feature_head.1} parent=5 // pred_region
      %s212 = ssub.s32 %s12, 1
      %p213 = scmp.lt.s32.totalorder %s21, 1
      %s214 = scalar_select %p213, %s21, 1
      %p215 = scmp.lt.s32.totalorder %s22, 1
      %s216 = scalar_select %p215, %s22, 1
      %s217 = smul.addr %s214, 2
      %s218 = sadd.s32 %s216, %s217
      %s219 = smul.addr %s218, 4
      %s220 = scalar_lea.vmem %s0, %s219
      %p221 = pneg %p52
      %p222 = pneg %p49
      %p223 = pneg %p73
      %p224 = pneg %p70
      %p225 = pneg %p94
      %p226 = pneg %p91
      %p227 = pneg %p115
      %p228 = pneg %p112
      %p229 = pneg %p136
      %p230 = pneg %p133
      %p231 = pneg %p164
      %p232 = pneg %p161
      %p233 = scmp.lt.s32.totalorder %s21, 1
      %s234 = scalar_select %p233, %s21, 1
      %p235 = scmp.lt.s32.totalorder %s22, 1
      %s236 = scalar_select %p235, %s22, 1
      %s237 = smul.addr %s234, 2
      %s238 = sadd.s32 %s236, %s237
      %s239 = scalar_lea.vmem %s5, %s238
      %p240 = scmp.lt.s32.totalorder %s21, 1
      %s241 = scalar_select %p240, %s21, 1
      %p242 = scmp.lt.s32.totalorder %s22, 1
      %s243 = scalar_select %p242, %s22, 1
      %s244 = smul.addr %s241, 2
      %s245 = sadd.s32 %s243, %s244
      %s246 = smul.addr %s245, 4
      %s247 = scalar_lea.vmem %s0, %s246
      %p248 = scmp.lt.s32.totalorder %s21, 1
      %s249 = scalar_select %p248, %s21, 1
      %p250 = scmp.lt.s32.totalorder %s22, 1
      %s251 = scalar_select %p250, %s22, 1
      %s252 = smul.addr %s249, 2
      %s253 = sadd.s32 %s251, %s252
      %s254 = scalar_lea.vmem %s5, %s253
      %v256 = vld [vmem:[%s247] sm:$0xf]
      %v257 = vpack.c.bf16 %v256, %v256
      %v258 = vld [vmem:[%s1] sm:$0xf]
      %v259 = vld [vmem:[%s1 + $0x4] sm:$0xf]
      %v260 = vld [vmem:[%s1 + $0x8] sm:$0xf]
      %v261 = vld [vmem:[%s1 + $0xc] sm:$0xf]
      %v262 = vld [vmem:[%s1 + $0x10] sm:$0xf]
      %v263 = vld [vmem:[%s1 + $0x14] sm:$0xf]
      %v264 = vld [vmem:[%s1 + $0x18] sm:$0xf]
      %v265 = vld [vmem:[%s1 + $0x1c] sm:$0xf]
      %v266 = vld [vmem:[%s1 + $0x20] sm:$0xf]
      %v267 = vld [vmem:[%s1 + $0x24] sm:$0xf]
      %v268 = vld [vmem:[%s1 + $0x28] sm:$0xf]
      %v269 = vld [vmem:[%s1 + $0x2c] sm:$0xf]
      %v270 = vld [vmem:[%s1 + $0x30] sm:$0xf]
      %v271 = vld [vmem:[%s1 + $0x34] sm:$0xf]
      %v272 = vld [vmem:[%s1 + $0x38] sm:$0xf]
      %v273 = vld [vmem:[%s1 + $0x3c] sm:$0xf]
      %v274 = vld [vmem:[%s2] sm:$0xff]
      %v275 = vld [vmem:[%s2 + $0x8] sm:$0xff]
      %v276 = vld [vmem:[%s2 + $0x10] sm:$0xff]
      %v277 = vld [vmem:[%s2 + $0x18] sm:$0xff]
      %v278 = vld [vmem:[%s2 + $0x20] sm:$0xff]
      %v279 = vld [vmem:[%s2 + $0x28] sm:$0xff]
      %v280 = vld [vmem:[%s2 + $0x30] sm:$0xff]
      %v281 = vld [vmem:[%s2 + $0x38] sm:$0xff]
      %v282 = vld [vmem:[%s2 + $0x40] sm:$0xff]
      %v283 = vld [vmem:[%s2 + $0x48] sm:$0xff]
      %v284 = vld [vmem:[%s2 + $0x50] sm:$0xff]
      %v285 = vld [vmem:[%s2 + $0x58] sm:$0xff]
      %v286 = vld [vmem:[%s2 + $0x60] sm:$0xff]
      %v287 = vld [vmem:[%s2 + $0x68] sm:$0xff]
      %v288 = vld [vmem:[%s2 + $0x70] sm:$0xff]
      %v289 = vld [vmem:[%s2 + $0x78] sm:$0xff]
      %291 = vset.pattern.permute.xlu0 0
      %292 = vperm.xlu0 %291, %v274
      %v293 = vpop.permute.xlu0 %292
      %296 = vset.pattern.permute.xlu0 0
      %297 = vperm.xlu0 %296, %v275
      %v298 = vpop.permute.xlu0 %297
      %301 = vset.pattern.permute.xlu0 0
      %302 = vperm.xlu0 %301, %v276
      %v303 = vpop.permute.xlu0 %302
      %306 = vset.pattern.permute.xlu0 0
      %307 = vperm.xlu0 %306, %v277
      %v308 = vpop.permute.xlu0 %307
      %311 = vset.pattern.permute.xlu0 0
      %312 = vperm.xlu0 %311, %v278
      %v313 = vpop.permute.xlu0 %312
      %316 = vset.pattern.permute.xlu0 0
      %317 = vperm.xlu0 %316, %v279
      %v318 = vpop.permute.xlu0 %317
      %321 = vset.pattern.permute.xlu0 0
      %322 = vperm.xlu0 %321, %v280
      %v323 = vpop.permute.xlu0 %322
      %326 = vset.pattern.permute.xlu0 0
      %327 = vperm.xlu0 %326, %v281
      %v328 = vpop.permute.xlu0 %327
      %331 = vset.pattern.permute.xlu0 0
      %332 = vperm.xlu0 %331, %v282
      %v333 = vpop.permute.xlu0 %332
      %336 = vset.pattern.permute.xlu0 0
      %337 = vperm.xlu0 %336, %v283
      %v338 = vpop.permute.xlu0 %337
      %341 = vset.pattern.permute.xlu0 0
      %342 = vperm.xlu0 %341, %v284
      %v343 = vpop.permute.xlu0 %342
      %346 = vset.pattern.permute.xlu0 0
      %347 = vperm.xlu0 %346, %v285
      %v348 = vpop.permute.xlu0 %347
      %351 = vset.pattern.permute.xlu0 0
      %352 = vperm.xlu0 %351, %v286
      %v353 = vpop.permute.xlu0 %352
      %356 = vset.pattern.permute.xlu0 0
      %357 = vperm.xlu0 %356, %v287
      %v358 = vpop.permute.xlu0 %357
      %361 = vset.pattern.permute.xlu0 0
      %362 = vperm.xlu0 %361, %v288
      %v363 = vpop.permute.xlu0 %362
      %366 = vset.pattern.permute.xlu0 0
      %367 = vperm.xlu0 %366, %v289
      %v368 = vpop.permute.xlu0 %367
      %v386 = vunpack.c.l.b16 %v258
      %v387 = vunpack.c.l.b16 %v259
      %v388 = vunpack.c.l.b16 %v260
      %v389 = vunpack.c.l.b16 %v261
      %v390 = vunpack.c.l.b16 %v262
      %v391 = vunpack.c.l.b16 %v263
      %v392 = vunpack.c.l.b16 %v264
      %v393 = vunpack.c.l.b16 %v265
      %v394 = vunpack.c.l.b16 %v266
      %v395 = vunpack.c.l.b16 %v267
      %v396 = vunpack.c.l.b16 %v268
      %v397 = vunpack.c.l.b16 %v269
      %v398 = vunpack.c.l.b16 %v270
      %v399 = vunpack.c.l.b16 %v271
      %v400 = vunpack.c.l.b16 %v272
      %v401 = vunpack.c.l.b16 %v273
      %v402 = vpack.c.b16 %v387, %v386
      %v403 = vpack.c.b16 %v389, %v388
      %v404 = vpack.c.b16 %v391, %v390
      %v405 = vpack.c.b16 %v393, %v392
      %v406 = vpack.c.b16 %v395, %v394
      %v407 = vpack.c.b16 %v397, %v396
      %v408 = vpack.c.b16 %v399, %v398
      %v409 = vpack.c.b16 %v401, %v400
      %vm410 = vcmask 31744
      %v412 = vsel %vm410, %v402, 0
      %v415 = vsel %vm410, %v403, 0
      %v418 = vsel %vm410, %v404, 0
      %v421 = vsel %vm410, %v405, 0
      %v424 = vsel %vm410, %v406, 0
      %v427 = vsel %vm410, %v407, 0
      %v430 = vsel %vm410, %v408, 0
      %v433 = vsel %vm410, %v409, 0
      %vm435 = vcmask 1041408
      %v437 = vsel %vm435, %v257, 0
      %439 = vmatprep.subr.bf16.mxu0 0
      %440 = vmatpush1.bf16.msra.mxu0 %v437
      %441 = vmatprep.subr.bf16.mxu0 0
      %442 = vmatpush1.bf16.msra.mxu0 0
      %443 = vmatprep.subr.bf16.mxu0 0
      %444 = vmatpush1.bf16.msra.mxu0 0
      %445 = vmatprep.subr.bf16.mxu0 0
      %446 = vmatpush1.bf16.msra.mxu0 0
      %447 = vmatprep.subr.bf16.mxu0 0
      %448 = vmatpush1.bf16.msra.mxu0 0
      %449 = vmatprep.subr.bf16.mxu0 0
      %450 = vmatpush1.bf16.msra.mxu0 0
      %451 = vmatprep.subr.bf16.mxu0 0
      %452 = vmatpush1.bf16.msra.mxu0 0
      %453 = vmatprep.subr.bf16.mxu0 0
      %454 = vmatpush1.bf16.msra.mxu0 0
      %455 = vmatprep.subr.bf16.mxu0 0
      %456 = vmatpush1.bf16.msra.mxu0 0
      %457 = vmatprep.subr.bf16.mxu0 0
      %458 = vmatpush1.bf16.msra.mxu0 0
      %459 = vmatprep.subr.bf16.mxu0 0
      %460 = vmatpush1.bf16.msra.mxu0 0
      %461 = vmatprep.subr.bf16.mxu0 0
      %462 = vmatpush1.bf16.msra.mxu0 0
      %463 = vmatprep.subr.bf16.mxu0 0
      %464 = vmatpush1.bf16.msra.mxu0 0
      %465 = vmatprep.subr.bf16.mxu0 0
      %466 = vmatpush1.bf16.msra.mxu0 0
      %467 = vmatprep.subr.bf16.mxu0 0
      %468 = vmatpush1.bf16.msra.mxu0 0
      %469 = vmatprep.subr.bf16.mxu0 0
      %470 = vmatpush1.bf16.msra.mxu0 0
      %471 = vmatprep.mubr.bf16.mxu0 0
      %472 = vmatmul.mubr.bf16.gmra.mrb[0].mxu0 %v412
      %v473 = vpop.f32.mrb[0].mxu0
      %v474 = vadd.f32 %v293, %v473
      %v475 = vpop.f32.mrb[0].mxu0
      %v476 = vpop.f32.mrb[0].mxu0
      %v477 = vadd.f32 %v298, %v476
      %v478 = vpop.f32.mrb[0].mxu0
      %479 = vmatprep.mubr.bf16.mxu0 0
      %480 = vmatmul.mubr.bf16.gmra.mrb[0].mxu0 %v415
      %v481 = vpop.f32.mrb[0].mxu0
      %v482 = vadd.f32 %v303, %v481
      %v483 = vpop.f32.mrb[0].mxu0
      %v484 = vpop.f32.mrb[0].mxu0
      %v485 = vadd.f32 %v308, %v484
      %v486 = vpop.f32.mrb[0].mxu0
      %487 = vmatprep.mubr.bf16.mxu0 0
      %488 = vmatmul.mubr.bf16.gmra.mrb[0].mxu0 %v418
      %v489 = vpop.f32.mrb[0].mxu0
      %v490 = vadd.f32 %v313, %v489
      %v491 = vpop.f32.mrb[0].mxu0
      %v492 = vpop.f32.mrb[0].mxu0
      %v493 = vadd.f32 %v318, %v492
      %v494 = vpop.f32.mrb[0].mxu0
      %495 = vmatprep.mubr.bf16.mxu0 0
      %496 = vmatmul.mubr.bf16.gmra.mrb[0].mxu0 %v421
      %v497 = vpop.f32.mrb[0].mxu0
      %v498 = vadd.f32 %v323, %v497
      %v499 = vpop.f32.mrb[0].mxu0
      %v500 = vpop.f32.mrb[0].mxu0
      %v501 = vadd.f32 %v328, %v500
      %v502 = vpop.f32.mrb[0].mxu0
      %503 = vmatprep.mubr.bf16.mxu0 0
      %504 = vmatmul.mubr.bf16.gmra.mrb[0].mxu0 %v424
      %v505 = vpop.f32.mrb[0].mxu0
      %v506 = vadd.f32 %v333, %v505
      %v507 = vpop.f32.mrb[0].mxu0
      %v508 = vpop.f32.mrb[0].mxu0
      %v509 = vadd.f32 %v338, %v508
      %v510 = vpop.f32.mrb[0].mxu0
      %511 = vmatprep.mubr.bf16.mxu0 0
      %512 = vmatmul.mubr.bf16.gmra.mrb[0].mxu0 %v427
      %v513 = vpop.f32.mrb[0].mxu0
      %v514 = vadd.f32 %v343, %v513
      %v515 = vpop.f32.mrb[0].mxu0
      %v516 = vpop.f32.mrb[0].mxu0
      %v517 = vadd.f32 %v348, %v516
      %v518 = vpop.f32.mrb[0].mxu0
      %519 = vmatprep.mubr.bf16.mxu0 0
      %520 = vmatmul.mubr.bf16.gmra.mrb[0].mxu0 %v430
      %v521 = vpop.f32.mrb[0].mxu0
      %v522 = vadd.f32 %v353, %v521
      %v523 = vpop.f32.mrb[0].mxu0
      %v524 = vpop.f32.mrb[0].mxu0
      %v525 = vadd.f32 %v358, %v524
      %v526 = vpop.f32.mrb[0].mxu0
      %527 = vmatprep.mubr.bf16.mxu0 0
      %528 = vmatmul.mubr.bf16.gmra.mrb[0].mxu0 %v433
      %v529 = vpop.f32.mrb[0].mxu0
      %v530 = vadd.f32 %v363, %v529
      %v531 = vpop.f32.mrb[0].mxu0
      %v532 = vpop.f32.mrb[0].mxu0
      %v533 = vadd.f32 %v368, %v532
      %v534 = vpop.f32.mrb[0].mxu0
      %535 = vdwg.mxu0
      %v536 = vmax.f32 %v474, 0.0
      %v537 = vmax.f32 %v477, 0.0
      %v538 = vmax.f32 %v482, 0.0
      %v539 = vmax.f32 %v485, 0.0
      %v540 = vmax.f32 %v490, 0.0
      %v541 = vmax.f32 %v493, 0.0
      %v542 = vmax.f32 %v498, 0.0
      %v543 = vmax.f32 %v501, 0.0
      %v544 = vmax.f32 %v506, 0.0
      %v545 = vmax.f32 %v509, 0.0
      %v546 = vmax.f32 %v514, 0.0
      %v547 = vmax.f32 %v517, 0.0
      %v548 = vmax.f32 %v522, 0.0
      %v549 = vmax.f32 %v525, 0.0
      %v550 = vmax.f32 %v530, 0.0
      %v551 = vmax.f32 %v533, 0.0
      %v552 = vld [vmem:[%s3] sm:$0xff]
      %v553 = vld [vmem:[%s3 + $0x8] sm:$0xff]
      %v554 = vld [vmem:[%s3 + $0x10] sm:$0xff]
      %v555 = vld [vmem:[%s3 + $0x18] sm:$0xff]
      %v556 = vld [vmem:[%s3 + $0x20] sm:$0xff]
      %v557 = vld [vmem:[%s3 + $0x28] sm:$0xff]
      %v558 = vld [vmem:[%s3 + $0x30] sm:$0xff]
      %v559 = vld [vmem:[%s3 + $0x38] sm:$0xff]
      %v560 = vld [vmem:[%s3 + $0x40] sm:$0xff]
      %v561 = vld [vmem:[%s3 + $0x48] sm:$0xff]
      %v562 = vld [vmem:[%s3 + $0x50] sm:$0xff]
      %v563 = vld [vmem:[%s3 + $0x58] sm:$0xff]
      %v564 = vld [vmem:[%s3 + $0x60] sm:$0xff]
      %v565 = vld [vmem:[%s3 + $0x68] sm:$0xff]
      %v566 = vld [vmem:[%s3 + $0x70] sm:$0xff]
      %v567 = vld [vmem:[%s3 + $0x78] sm:$0xff]
      %569 = vset.pattern.permute.xlu0 0
      %570 = vperm.xlu0 %569, %v552
      %v571 = vpop.permute.xlu0 %570
      %574 = vset.pattern.permute.xlu0 0
      %575 = vperm.xlu0 %574, %v553
      %v576 = vpop.permute.xlu0 %575
      %579 = vset.pattern.permute.xlu0 0
      %580 = vperm.xlu0 %579, %v554
      %v581 = vpop.permute.xlu0 %580
      %584 = vset.pattern.permute.xlu0 0
      %585 = vperm.xlu0 %584, %v555
      %v586 = vpop.permute.xlu0 %585
      %589 = vset.pattern.permute.xlu0 0
      %590 = vperm.xlu0 %589, %v556
      %v591 = vpop.permute.xlu0 %590
      %594 = vset.pattern.permute.xlu0 0
      %595 = vperm.xlu0 %594, %v557
      %v596 = vpop.permute.xlu0 %595
      %599 = vset.pattern.permute.xlu0 0
      %600 = vperm.xlu0 %599, %v558
      %v601 = vpop.permute.xlu0 %600
      %604 = vset.pattern.permute.xlu0 0
      %605 = vperm.xlu0 %604, %v559
      %v606 = vpop.permute.xlu0 %605
      %609 = vset.pattern.permute.xlu0 0
      %610 = vperm.xlu0 %609, %v560
      %v611 = vpop.permute.xlu0 %610
      %614 = vset.pattern.permute.xlu0 0
      %615 = vperm.xlu0 %614, %v561
      %v616 = vpop.permute.xlu0 %615
      %619 = vset.pattern.permute.xlu0 0
      %620 = vperm.xlu0 %619, %v562
      %v621 = vpop.permute.xlu0 %620
      %624 = vset.pattern.permute.xlu0 0
      %625 = vperm.xlu0 %624, %v563
      %v626 = vpop.permute.xlu0 %625
      %629 = vset.pattern.permute.xlu0 0
      %630 = vperm.xlu0 %629, %v564
      %v631 = vpop.permute.xlu0 %630
      %634 = vset.pattern.permute.xlu0 0
      %635 = vperm.xlu0 %634, %v565
      %v636 = vpop.permute.xlu0 %635
      %639 = vset.pattern.permute.xlu0 0
      %640 = vperm.xlu0 %639, %v566
      %v641 = vpop.permute.xlu0 %640
      %644 = vset.pattern.permute.xlu0 0
      %645 = vperm.xlu0 %644, %v567
      %v646 = vpop.permute.xlu0 %645
      %v648 = vmul.f32 %v536, %v571
      %v649 = vmul.f32 %v537, %v576
      %v650 = vmul.f32 %v538, %v581
      %v651 = vmul.f32 %v539, %v586
      %v652 = vmul.f32 %v540, %v591
      %v653 = vmul.f32 %v541, %v596
      %v654 = vmul.f32 %v542, %v601
      %v655 = vmul.f32 %v543, %v606
      %v656 = vmul.f32 %v544, %v611
      %v657 = vmul.f32 %v545, %v616
      %v658 = vmul.f32 %v546, %v621
      %v659 = vmul.f32 %v547, %v626
      %v660 = vmul.f32 %v548, %v631
      %v661 = vmul.f32 %v549, %v636
      %v662 = vmul.f32 %v550, %v641
      %v663 = vmul.f32 %v551, %v646
      %v664 = vadd.f32 %v648, %v649
      %v665 = vadd.f32 %v664, %v650
      %v666 = vadd.f32 %v665, %v651
      %v667 = vadd.f32 %v666, %v652
      %v668 = vadd.f32 %v667, %v653
      %v669 = vadd.f32 %v668, %v654
      %v670 = vadd.f32 %v669, %v655
      %v671 = vadd.f32 %v670, %v656
      %v672 = vadd.f32 %v671, %v657
      %v673 = vadd.f32 %v672, %v658
      %v674 = vadd.f32 %v673, %v659
      %v675 = vadd.f32 %v674, %v660
      %v676 = vadd.f32 %v675, %v661
      %v677 = vadd.f32 %v676, %v662
      %v678 = vadd.f32 %v677, %v663
      %v679 = vrot.slane %v678, 4
      %v680 = vadd.f32 %v678, %v679
      %v681 = vrot.slane %v680, 2
      %v682 = vadd.f32 %v680, %v681
      %v683 = vrot.slane %v682, 1
      %v684 = vadd.f32 %v682, %v683
      %v685 = vadd.f32 %v684, 0.0
      %v686 = vld [vmem:[%s1 + $0x40] sm:$0xf]
      %v687 = vld [vmem:[%s1 + $0x44] sm:$0xf]
      %v688 = vld [vmem:[%s1 + $0x48] sm:$0xf]
      %v689 = vld [vmem:[%s1 + $0x4c] sm:$0xf]
      %v690 = vld [vmem:[%s1 + $0x50] sm:$0xf]
      %v691 = vld [vmem:[%s1 + $0x54] sm:$0xf]
      %v692 = vld [vmem:[%s1 + $0x58] sm:$0xf]
      %v693 = vld [vmem:[%s1 + $0x5c] sm:$0xf]
      %v694 = vld [vmem:[%s1 + $0x60] sm:$0xf]
      %v695 = vld [vmem:[%s1 + $0x64] sm:$0xf]
      %v696 = vld [vmem:[%s1 + $0x68] sm:$0xf]
      %v697 = vld [vmem:[%s1 + $0x6c] sm:$0xf]
      %v698 = vld [vmem:[%s1 + $0x70] sm:$0xf]
      %v699 = vld [vmem:[%s1 + $0x74] sm:$0xf]
      %v700 = vld [vmem:[%s1 + $0x78] sm:$0xf]
      %v701 = vld [vmem:[%s1 + $0x7c] sm:$0xf]
      %v702 = vld [vmem:[%s2 + $0x80] sm:$0xff]
      %v703 = vld [vmem:[%s2 + $0x88] sm:$0xff]
      %v704 = vld [vmem:[%s2 + $0x90] sm:$0xff]
      %v705 = vld [vmem:[%s2 + $0x98] sm:$0xff]
      %v706 = vld [vmem:[%s2 + $0xa0] sm:$0xff]
      %v707 = vld [vmem:[%s2 + $0xa8] sm:$0xff]
      %v708 = vld [vmem:[%s2 + $0xb0] sm:$0xff]
      %v709 = vld [vmem:[%s2 + $0xb8] sm:$0xff]
      %v710 = vld [vmem:[%s2 + $0xc0] sm:$0xff]
      %v711 = vld [vmem:[%s2 + $0xc8] sm:$0xff]
      %v712 = vld [vmem:[%s2 + $0xd0] sm:$0xff]
      %v713 = vld [vmem:[%s2 + $0xd8] sm:$0xff]
      %v714 = vld [vmem:[%s2 + $0xe0] sm:$0xff]
      %v715 = vld [vmem:[%s2 + $0xe8] sm:$0xff]
      %v716 = vld [vmem:[%s2 + $0xf0] sm:$0xff]
      %v717 = vld [vmem:[%s2 + $0xf8] sm:$0xff]
      %719 = vset.pattern.permute.xlu0 0
      %720 = vperm.xlu0 %719, %v702
      %v721 = vpop.permute.xlu0 %720
      %724 = vset.pattern.permute.xlu0 0
      %725 = vperm.xlu0 %724, %v703
      %v726 = vpop.permute.xlu0 %725
      %729 = vset.pattern.permute.xlu0 0
      %730 = vperm.xlu0 %729, %v704
      %v731 = vpop.permute.xlu0 %730
      %734 = vset.pattern.permute.xlu0 0
      %735 = vperm.xlu0 %734, %v705
      %v736 = vpop.permute.xlu0 %735
      %739 = vset.pattern.permute.xlu0 0
      %740 = vperm.xlu0 %739, %v706
      %v741 = vpop.permute.xlu0 %740
      %744 = vset.pattern.permute.xlu0 0
      %745 = vperm.xlu0 %744, %v707
      %v746 = vpop.permute.xlu0 %745
      %749 = vset.pattern.permute.xlu0 0
      %750 = vperm.xlu0 %749, %v708
      %v751 = vpop.permute.xlu0 %750
      %754 = vset.pattern.permute.xlu0 0
      %755 = vperm.xlu0 %754, %v709
      %v756 = vpop.permute.xlu0 %755
      %759 = vset.pattern.permute.xlu0 0
      %760 = vperm.xlu0 %759, %v710
      %v761 = vpop.permute.xlu0 %760
      %764 = vset.pattern.permute.xlu0 0
      %765 = vperm.xlu0 %764, %v711
      %v766 = vpop.permute.xlu0 %765
      %769 = vset.pattern.permute.xlu0 0
      %770 = vperm.xlu0 %769, %v712
      %v771 = vpop.permute.xlu0 %770
      %774 = vset.pattern.permute.xlu0 0
      %775 = vperm.xlu0 %774, %v713
      %v776 = vpop.permute.xlu0 %775
      %779 = vset.pattern.permute.xlu0 0
      %780 = vperm.xlu0 %779, %v714
      %v781 = vpop.permute.xlu0 %780
      %784 = vset.pattern.permute.xlu0 0
      %785 = vperm.xlu0 %784, %v715
      %v786 = vpop.permute.xlu0 %785
      %789 = vset.pattern.permute.xlu0 0
      %790 = vperm.xlu0 %789, %v716
      %v791 = vpop.permute.xlu0 %790
      %794 = vset.pattern.permute.xlu0 0
      %795 = vperm.xlu0 %794, %v717
      %v796 = vpop.permute.xlu0 %795
      %v814 = vunpack.c.l.b16 %v686
      %v815 = vunpack.c.l.b16 %v687
      %v816 = vunpack.c.l.b16 %v688
      %v817 = vunpack.c.l.b16 %v689
      %v818 = vunpack.c.l.b16 %v690
      %v819 = vunpack.c.l.b16 %v691
      %v820 = vunpack.c.l.b16 %v692
      %v821 = vunpack.c.l.b16 %v693
      %v822 = vunpack.c.l.b16 %v694
      %v823 = vunpack.c.l.b16 %v695
      %v824 = vunpack.c.l.b16 %v696
      %v825 = vunpack.c.l.b16 %v697
      %v826 = vunpack.c.l.b16 %v698
      %v827 = vunpack.c.l.b16 %v699
      %v828 = vunpack.c.l.b16 %v700
      %v829 = vunpack.c.l.b16 %v701
      %v830 = vpack.c.b16 %v815, %v814
      %v831 = vpack.c.b16 %v817, %v816
      %v832 = vpack.c.b16 %v819, %v818
      %v833 = vpack.c.b16 %v821, %v820
      %v834 = vpack.c.b16 %v823, %v822
      %v835 = vpack.c.b16 %v825, %v824
      %v836 = vpack.c.b16 %v827, %v826
      %v837 = vpack.c.b16 %v829, %v828
      %v839 = vsel %vm410, %v830, 0
      %v842 = vsel %vm410, %v831, 0
      %v845 = vsel %vm410, %v832, 0
      %v848 = vsel %vm410, %v833, 0
      %v851 = vsel %vm410, %v834, 0
      %v854 = vsel %vm410, %v835, 0
      %v857 = vsel %vm410, %v836, 0
      %v860 = vsel %vm410, %v837, 0
      %862 = vmatprep.subr.bf16.mxu0 0
      %863 = vmatpush1.bf16.msra.mxu0 %v437
      %864 = vmatprep.subr.bf16.mxu0 0
      %865 = vmatpush1.bf16.msra.mxu0 0
      %866 = vmatprep.subr.bf16.mxu0 0
      %867 = vmatpush1.bf16.msra.mxu0 0
      %868 = vmatprep.subr.bf16.mxu0 0
      %869 = vmatpush1.bf16.msra.mxu0 0
      %870 = vmatprep.subr.bf16.mxu0 0
      %871 = vmatpush1.bf16.msra.mxu0 0
      %872 = vmatprep.subr.bf16.mxu0 0
      %873 = vmatpush1.bf16.msra.mxu0 0
      %874 = vmatprep.subr.bf16.mxu0 0
      %875 = vmatpush1.bf16.msra.mxu0 0
      %876 = vmatprep.subr.bf16.mxu0 0
      %877 = vmatpush1.bf16.msra.mxu0 0
      %878 = vmatprep.subr.bf16.mxu0 0
      %879 = vmatpush1.bf16.msra.mxu0 0
      %880 = vmatprep.subr.bf16.mxu0 0
      %881 = vmatpush1.bf16.msra.mxu0 0
      %882 = vmatprep.subr.bf16.mxu0 0
      %883 = vmatpush1.bf16.msra.mxu0 0
      %884 = vmatprep.subr.bf16.mxu0 0
      %885 = vmatpush1.bf16.msra.mxu0 0
      %886 = vmatprep.subr.bf16.mxu0 0
      %887 = vmatpush1.bf16.msra.mxu0 0
      %888 = vmatprep.subr.bf16.mxu0 0
      %889 = vmatpush1.bf16.msra.mxu0 0
      %890 = vmatprep.subr.bf16.mxu0 0
      %891 = vmatpush1.bf16.msra.mxu0 0
      %892 = vmatprep.subr.bf16.mxu0 0
      %893 = vmatpush1.bf16.msra.mxu0 0
      %894 = vmatprep.mubr.bf16.mxu0 0
      %895 = vmatmul.mubr.bf16.gmra.mrb[0].mxu0 %v839
      %v896 = vpop.f32.mrb[0].mxu0
      %v897 = vadd.f32 %v721, %v896
      %v898 = vpop.f32.mrb[0].mxu0
      %v899 = vpop.f32.mrb[0].mxu0
      %v900 = vadd.f32 %v726, %v899
      %v901 = vpop.f32.mrb[0].mxu0
      %902 = vmatprep.mubr.bf16.mxu0 0
      %903 = vmatmul.mubr.bf16.gmra.mrb[0].mxu0 %v842
      %v904 = vpop.f32.mrb[0].mxu0
      %v905 = vadd.f32 %v731, %v904
      %v906 = vpop.f32.mrb[0].mxu0
      %v907 = vpop.f32.mrb[0].mxu0
      %v908 = vadd.f32 %v736, %v907
      %v909 = vpop.f32.mrb[0].mxu0
      %910 = vmatprep.mubr.bf16.mxu0 0
      %911 = vmatmul.mubr.bf16.gmra.mrb[0].mxu0 %v845
      %v912 = vpop.f32.mrb[0].mxu0
      %v913 = vadd.f32 %v741, %v912
      %v914 = vpop.f32.mrb[0].mxu0
      %v915 = vpop.f32.mrb[0].mxu0
      %v916 = vadd.f32 %v746, %v915
      %v917 = vpop.f32.mrb[0].mxu0
      %918 = vmatprep.mubr.bf16.mxu0 0
      %919 = vmatmul.mubr.bf16.gmra.mrb[0].mxu0 %v848
      %v920 = vpop.f32.mrb[0].mxu0
      %v921 = vadd.f32 %v751, %v920
      %v922 = vpop.f32.mrb[0].mxu0
      %v923 = vpop.f32.mrb[0].mxu0
      %v924 = vadd.f32 %v756, %v923
      %v925 = vpop.f32.mrb[0].mxu0
      %926 = vmatprep.mubr.bf16.mxu0 0
      %927 = vmatmul.mubr.bf16.gmra.mrb[0].mxu0 %v851
      %v928 = vpop.f32.mrb[0].mxu0
      %v929 = vadd.f32 %v761, %v928
      %v930 = vpop.f32.mrb[0].mxu0
      %v931 = vpop.f32.mrb[0].mxu0
      %v932 = vadd.f32 %v766, %v931
      %v933 = vpop.f32.mrb[0].mxu0
      %934 = vmatprep.mubr.bf16.mxu0 0
      %935 = vmatmul.mubr.bf16.gmra.mrb[0].mxu0 %v854
      %v936 = vpop.f32.mrb[0].mxu0
      %v937 = vadd.f32 %v771, %v936
      %v938 = vpop.f32.mrb[0].mxu0
      %v939 = vpop.f32.mrb[0].mxu0
      %v940 = vadd.f32 %v776, %v939
      %v941 = vpop.f32.mrb[0].mxu0
      %942 = vmatprep.mubr.bf16.mxu0 0
      %943 = vmatmul.mubr.bf16.gmra.mrb[0].mxu0 %v857
      %v944 = vpop.f32.mrb[0].mxu0
      %v945 = vadd.f32 %v781, %v944
      %v946 = vpop.f32.mrb[0].mxu0
      %v947 = vpop.f32.mrb[0].mxu0
      %v948 = vadd.f32 %v786, %v947
      %v949 = vpop.f32.mrb[0].mxu0
      %950 = vmatprep.mubr.bf16.mxu0 0
      %951 = vmatmul.mubr.bf16.gmra.mrb[0].mxu0 %v860
      %v952 = vpop.f32.mrb[0].mxu0
      %v953 = vadd.f32 %v791, %v952
      %v954 = vpop.f32.mrb[0].mxu0
      %v955 = vpop.f32.mrb[0].mxu0
      %v956 = vadd.f32 %v796, %v955
      %v957 = vpop.f32.mrb[0].mxu0
      %958 = vdwg.mxu0
      %v959 = vmax.f32 %v897, 0.0
      %v960 = vmax.f32 %v900, 0.0
      %v961 = vmax.f32 %v905, 0.0
      %v962 = vmax.f32 %v908, 0.0
      %v963 = vmax.f32 %v913, 0.0
      %v964 = vmax.f32 %v916, 0.0
      %v965 = vmax.f32 %v921, 0.0
      %v966 = vmax.f32 %v924, 0.0
      %v967 = vmax.f32 %v929, 0.0
      %v968 = vmax.f32 %v932, 0.0
      %v969 = vmax.f32 %v937, 0.0
      %v970 = vmax.f32 %v940, 0.0
      %v971 = vmax.f32 %v945, 0.0
      %v972 = vmax.f32 %v948, 0.0
      %v973 = vmax.f32 %v953, 0.0
      %v974 = vmax.f32 %v956, 0.0
      %v975 = vld [vmem:[%s3 + $0x80] sm:$0xff]
      %v976 = vld [vmem:[%s3 + $0x88] sm:$0xff]
      %v977 = vld [vmem:[%s3 + $0x90] sm:$0xff]
      %v978 = vld [vmem:[%s3 + $0x98] sm:$0xff]
      %v979 = vld [vmem:[%s3 + $0xa0] sm:$0xff]
      %v980 = vld [vmem:[%s3 + $0xa8] sm:$0xff]
      %v981 = vld [vmem:[%s3 + $0xb0] sm:$0xff]
      %v982 = vld [vmem:[%s3 + $0xb8] sm:$0xff]
      %v983 = vld [vmem:[%s3 + $0xc0] sm:$0xff]
      %v984 = vld [vmem:[%s3 + $0xc8] sm:$0xff]
      %v985 = vld [vmem:[%s3 + $0xd0] sm:$0xff]
      %v986 = vld [vmem:[%s3 + $0xd8] sm:$0xff]
      %v987 = vld [vmem:[%s3 + $0xe0] sm:$0xff]
      %v988 = vld [vmem:[%s3 + $0xe8] sm:$0xff]
      %v989 = vld [vmem:[%s3 + $0xf0] sm:$0xff]
      %v990 = vld [vmem:[%s3 + $0xf8] sm:$0xff]
      %992 = vset.pattern.permute.xlu0 0
      %993 = vperm.xlu0 %992, %v975
      %v994 = vpop.permute.xlu0 %993
      %997 = vset.pattern.permute.xlu0 0
      %998 = vperm.xlu0 %997, %v976
      %v999 = vpop.permute.xlu0 %998
      %1002 = vset.pattern.permute.xlu0 0
      %1003 = vperm.xlu0 %1002, %v977
      %v1004 = vpop.permute.xlu0 %1003
      %1007 = vset.pattern.permute.xlu0 0
      %1008 = vperm.xlu0 %1007, %v978
      %v1009 = vpop.permute.xlu0 %1008
      %1012 = vset.pattern.permute.xlu0 0
      %1013 = vperm.xlu0 %1012, %v979
      %v1014 = vpop.permute.xlu0 %1013
      %1017 = vset.pattern.permute.xlu0 0
      %1018 = vperm.xlu0 %1017, %v980
      %v1019 = vpop.permute.xlu0 %1018
      %1022 = vset.pattern.permute.xlu0 0
      %1023 = vperm.xlu0 %1022, %v981
      %v1024 = vpop.permute.xlu0 %1023
      %1027 = vset.pattern.permute.xlu0 0
      %1028 = vperm.xlu0 %1027, %v982
      %v1029 = vpop.permute.xlu0 %1028
      %1032 = vset.pattern.permute.xlu0 0
      %1033 = vperm.xlu0 %1032, %v983
      %v1034 = vpop.permute.xlu0 %1033
      %1037 = vset.pattern.permute.xlu0 0
      %1038 = vperm.xlu0 %1037, %v984
      %v1039 = vpop.permute.xlu0 %1038
      %1042 = vset.pattern.permute.xlu0 0
      %1043 = vperm.xlu0 %1042, %v985
      %v1044 = vpop.permute.xlu0 %1043
      %1047 = vset.pattern.permute.xlu0 0
      %1048 = vperm.xlu0 %1047, %v986
      %v1049 = vpop.permute.xlu0 %1048
      %1052 = vset.pattern.permute.xlu0 0
      %1053 = vperm.xlu0 %1052, %v987
      %v1054 = vpop.permute.xlu0 %1053
      %1057 = vset.pattern.permute.xlu0 0
      %1058 = vperm.xlu0 %1057, %v988
      %v1059 = vpop.permute.xlu0 %1058
      %1062 = vset.pattern.permute.xlu0 0
      %1063 = vperm.xlu0 %1062, %v989
      %v1064 = vpop.permute.xlu0 %1063
      %1067 = vset.pattern.permute.xlu0 0
      %1068 = vperm.xlu0 %1067, %v990
      %v1069 = vpop.permute.xlu0 %1068
      %v1071 = vmul.f32 %v959, %v994
      %v1072 = vmul.f32 %v960, %v999
      %v1073 = vmul.f32 %v961, %v1004
      %v1074 = vmul.f32 %v962, %v1009
      %v1075 = vmul.f32 %v963, %v1014
      %v1076 = vmul.f32 %v964, %v1019
      %v1077 = vmul.f32 %v965, %v1024
      %v1078 = vmul.f32 %v966, %v1029
      %v1079 = vmul.f32 %v967, %v1034
      %v1080 = vmul.f32 %v968, %v1039
      %v1081 = vmul.f32 %v969, %v1044
      %v1082 = vmul.f32 %v970, %v1049
      %v1083 = vmul.f32 %v971, %v1054
      %v1084 = vmul.f32 %v972, %v1059
      %v1085 = vmul.f32 %v973, %v1064
      %v1086 = vmul.f32 %v974, %v1069
      %v1087 = vadd.f32 %v1071, %v1072
      %v1088 = vadd.f32 %v1087, %v1073
      %v1089 = vadd.f32 %v1088, %v1074
      %v1090 = vadd.f32 %v1089, %v1075
      %v1091 = vadd.f32 %v1090, %v1076
      %v1092 = vadd.f32 %v1091, %v1077
      %v1093 = vadd.f32 %v1092, %v1078
      %v1094 = vadd.f32 %v1093, %v1079
      %v1095 = vadd.f32 %v1094, %v1080
      %v1096 = vadd.f32 %v1095, %v1081
      %v1097 = vadd.f32 %v1096, %v1082
      %v1098 = vadd.f32 %v1097, %v1083
      %v1099 = vadd.f32 %v1098, %v1084
      %v1100 = vadd.f32 %v1099, %v1085
      %v1101 = vadd.f32 %v1100, %v1086
      %v1102 = vrot.slane %v1101, 4
      %v1103 = vadd.f32 %v1101, %v1102
      %v1104 = vrot.slane %v1103, 2
      %v1105 = vadd.f32 %v1103, %v1104
      %v1106 = vrot.slane %v1105, 1
      %v1107 = vadd.f32 %v1105, %v1106
      %v1108 = vadd.f32 %v685, %v1107
      %v1109 = vld [vmem:[%s1 + $0x80] sm:$0xf]
      %v1110 = vld [vmem:[%s1 + $0x84] sm:$0xf]
      %v1111 = vld [vmem:[%s1 + $0x88] sm:$0xf]
      %v1112 = vld [vmem:[%s1 + $0x8c] sm:$0xf]
      %v1113 = vld [vmem:[%s1 + $0x90] sm:$0xf]
      %v1114 = vld [vmem:[%s1 + $0x94] sm:$0xf]
      %v1115 = vld [vmem:[%s1 + $0x98] sm:$0xf]
      %v1116 = vld [vmem:[%s1 + $0x9c] sm:$0xf]
      %v1117 = vld [vmem:[%s1 + $0xa0] sm:$0xf]
      %v1118 = vld [vmem:[%s1 + $0xa4] sm:$0xf]
      %v1119 = vld [vmem:[%s1 + $0xa8] sm:$0xf]
      %v1120 = vld [vmem:[%s1 + $0xac] sm:$0xf]
      %v1121 = vld [vmem:[%s1 + $0xb0] sm:$0xf]
      %v1122 = vld [vmem:[%s1 + $0xb4] sm:$0xf]
      %v1123 = vld [vmem:[%s1 + $0xb8] sm:$0xf]
      %v1124 = vld [vmem:[%s1 + $0xbc] sm:$0xf]
      %v1125 = vld [vmem:[%s2 + $0x100] sm:$0xff]
      %v1126 = vld [vmem:[%s2 + $0x108] sm:$0xff]
      %v1127 = vld [vmem:[%s2 + $0x110] sm:$0xff]
      %v1128 = vld [vmem:[%s2 + $0x118] sm:$0xff]
      %v1129 = vld [vmem:[%s2 + $0x120] sm:$0xff]
      %v1130 = vld [vmem:[%s2 + $0x128] sm:$0xff]
      %v1131 = vld [vmem:[%s2 + $0x130] sm:$0xff]
      %v1132 = vld [vmem:[%s2 + $0x138] sm:$0xff]
      %v1133 = vld [vmem:[%s2 + $0x140] sm:$0xff]
      %v1134 = vld [vmem:[%s2 + $0x148] sm:$0xff]
      %v1135 = vld [vmem:[%s2 + $0x150] sm:$0xff]
      %v1136 = vld [vmem:[%s2 + $0x158] sm:$0xff]
      %v1137 = vld [vmem:[%s2 + $0x160] sm:$0xff]
      %v1138 = vld [vmem:[%s2 + $0x168] sm:$0xff]
      %v1139 = vld [vmem:[%s2 + $0x170] sm:$0xff]
      %v1140 = vld [vmem:[%s2 + $0x178] sm:$0xff]
      %1142 = vset.pattern.permute.xlu0 0
      %1143 = vperm.xlu0 %1142, %v1125
      %v1144 = vpop.permute.xlu0 %1143
      %1147 = vset.pattern.permute.xlu0 0
      %1148 = vperm.xlu0 %1147, %v1126
      %v1149 = vpop.permute.xlu0 %1148
      %1152 = vset.pattern.permute.xlu0 0
      %1153 = vperm.xlu0 %1152, %v1127
      %v1154 = vpop.permute.xlu0 %1153
      %1157 = vset.pattern.permute.xlu0 0
      %1158 = vperm.xlu0 %1157, %v1128
      %v1159 = vpop.permute.xlu0 %1158
      %1162 = vset.pattern.permute.xlu0 0
      %1163 = vperm.xlu0 %1162, %v1129
      %v1164 = vpop.permute.xlu0 %1163
      %1167 = vset.pattern.permute.xlu0 0
      %1168 = vperm.xlu0 %1167, %v1130
      %v1169 = vpop.permute.xlu0 %1168
      %1172 = vset.pattern.permute.xlu0 0
      %1173 = vperm.xlu0 %1172, %v1131
      %v1174 = vpop.permute.xlu0 %1173
      %1177 = vset.pattern.permute.xlu0 0
      %1178 = vperm.xlu0 %1177, %v1132
      %v1179 = vpop.permute.xlu0 %1178
      %1182 = vset.pattern.permute.xlu0 0
      %1183 = vperm.xlu0 %1182, %v1133
      %v1184 = vpop.permute.xlu0 %1183
      %1187 = vset.pattern.permute.xlu0 0
      %1188 = vperm.xlu0 %1187, %v1134
      %v1189 = vpop.permute.xlu0 %1188
      %1192 = vset.pattern.permute.xlu0 0
      %1193 = vperm.xlu0 %1192, %v1135
      %v1194 = vpop.permute.xlu0 %1193
      %1197 = vset.pattern.permute.xlu0 0
      %1198 = vperm.xlu0 %1197, %v1136
      %v1199 = vpop.permute.xlu0 %1198
      %1202 = vset.pattern.permute.xlu0 0
      %1203 = vperm.xlu0 %1202, %v1137
      %v1204 = vpop.permute.xlu0 %1203
      %1207 = vset.pattern.permute.xlu0 0
      %1208 = vperm.xlu0 %1207, %v1138
      %v1209 = vpop.permute.xlu0 %1208
      %1212 = vset.pattern.permute.xlu0 0
      %1213 = vperm.xlu0 %1212, %v1139
      %v1214 = vpop.permute.xlu0 %1213
      %1217 = vset.pattern.permute.xlu0 0
      %1218 = vperm.xlu0 %1217, %v1140
      %v1219 = vpop.permute.xlu0 %1218
      %v1237 = vunpack.c.l.b16 %v1109
      %v1238 = vunpack.c.l.b16 %v1110
      %v1239 = vunpack.c.l.b16 %v1111
      %v1240 = vunpack.c.l.b16 %v1112
      %v1241 = vunpack.c.l.b16 %v1113
      %v1242 = vunpack.c.l.b16 %v1114
      %v1243 = vunpack.c.l.b16 %v1115
      %v1244 = vunpack.c.l.b16 %v1116
      %v1245 = vunpack.c.l.b16 %v1117
      %v1246 = vunpack.c.l.b16 %v1118
      %v1247 = vunpack.c.l.b16 %v1119
      %v1248 = vunpack.c.l.b16 %v1120
      %v1249 = vunpack.c.l.b16 %v1121
      %v1250 = vunpack.c.l.b16 %v1122
      %v1251 = vunpack.c.l.b16 %v1123
      %v1252 = vunpack.c.l.b16 %v1124
      %v1253 = vpack.c.b16 %v1238, %v1237
      %v1254 = vpack.c.b16 %v1240, %v1239
      %v1255 = vpack.c.b16 %v1242, %v1241
      %v1256 = vpack.c.b16 %v1244, %v1243
      %v1257 = vpack.c.b16 %v1246, %v1245
      %v1258 = vpack.c.b16 %v1248, %v1247
      %v1259 = vpack.c.b16 %v1250, %v1249
      %v1260 = vpack.c.b16 %v1252, %v1251
      %v1262 = vsel %vm410, %v1253, 0
      %v1265 = vsel %vm410, %v1254, 0
      %v1268 = vsel %vm410, %v1255, 0
      %v1271 = vsel %vm410, %v1256, 0
      %v1274 = vsel %vm410, %v1257, 0
      %v1277 = vsel %vm410, %v1258, 0
      %v1280 = vsel %vm410, %v1259, 0
      %v1283 = vsel %vm410, %v1260, 0
      %1285 = vmatprep.subr.bf16.mxu0 0
      %1286 = vmatpush1.bf16.msra.mxu0 %v437
      %1287 = vmatprep.subr.bf16.mxu0 0
      %1288 = vmatpush1.bf16.msra.mxu0 0
      %1289 = vmatprep.subr.bf16.mxu0 0
      %1290 = vmatpush1.bf16.msra.mxu0 0
      %1291 = vmatprep.subr.bf16.mxu0 0
      %1292 = vmatpush1.bf16.msra.mxu0 0
      %1293 = vmatprep.subr.bf16.mxu0 0
      %1294 = vmatpush1.bf16.msra.mxu0 0
      %1295 = vmatprep.subr.bf16.mxu0 0
      %1296 = vmatpush1.bf16.msra.mxu0 0
      %1297 = vmatprep.subr.bf16.mxu0 0
      %1298 = vmatpush1.bf16.msra.mxu0 0
      %1299 = vmatprep.subr.bf16.mxu0 0
      %1300 = vmatpush1.bf16.msra.mxu0 0
      %1301 = vmatprep.subr.bf16.mxu0 0
      %1302 = vmatpush1.bf16.msra.mxu0 0
      %1303 = vmatprep.subr.bf16.mxu0 0
      %1304 = vmatpush1.bf16.msra.mxu0 0
      %1305 = vmatprep.subr.bf16.mxu0 0
      %1306 = vmatpush1.bf16.msra.mxu0 0
      %1307 = vmatprep.subr.bf16.mxu0 0
      %1308 = vmatpush1.bf16.msra.mxu0 0
      %1309 = vmatprep.subr.bf16.mxu0 0
      %1310 = vmatpush1.bf16.msra.mxu0 0
      %1311 = vmatprep.subr.bf16.mxu0 0
      %1312 = vmatpush1.bf16.msra.mxu0 0
      %1313 = vmatprep.subr.bf16.mxu0 0
      %1314 = vmatpush1.bf16.msra.mxu0 0
      %1315 = vmatprep.subr.bf16.mxu0 0
      %1316 = vmatpush1.bf16.msra.mxu0 0
      %1317 = vmatprep.mubr.bf16.mxu0 0
      %1318 = vmatmul.mubr.bf16.gmra.mrb[0].mxu0 %v1262
      %v1319 = vpop.f32.mrb[0].mxu0
      %v1320 = vadd.f32 %v1144, %v1319
      %v1321 = vpop.f32.mrb[0].mxu0
      %v1322 = vpop.f32.mrb[0].mxu0
      %v1323 = vadd.f32 %v1149, %v1322
      %v1324 = vpop.f32.mrb[0].mxu0
      %1325 = vmatprep.mubr.bf16.mxu0 0
      %1326 = vmatmul.mubr.bf16.gmra.mrb[0].mxu0 %v1265
      %v1327 = vpop.f32.mrb[0].mxu0
      %v1328 = vadd.f32 %v1154, %v1327
      %v1329 = vpop.f32.mrb[0].mxu0
      %v1330 = vpop.f32.mrb[0].mxu0
      %v1331 = vadd.f32 %v1159, %v1330
      %v1332 = vpop.f32.mrb[0].mxu0
      %1333 = vmatprep.mubr.bf16.mxu0 0
      %1334 = vmatmul.mubr.bf16.gmra.mrb[0].mxu0 %v1268
      %v1335 = vpop.f32.mrb[0].mxu0
      %v1336 = vadd.f32 %v1164, %v1335
      %v1337 = vpop.f32.mrb[0].mxu0
      %v1338 = vpop.f32.mrb[0].mxu0
      %v1339 = vadd.f32 %v1169, %v1338
      %v1340 = vpop.f32.mrb[0].mxu0
      %1341 = vmatprep.mubr.bf16.mxu0 0
      %1342 = vmatmul.mubr.bf16.gmra.mrb[0].mxu0 %v1271
      %v1343 = vpop.f32.mrb[0].mxu0
      %v1344 = vadd.f32 %v1174, %v1343
      %v1345 = vpop.f32.mrb[0].mxu0
      %v1346 = vpop.f32.mrb[0].mxu0
      %v1347 = vadd.f32 %v1179, %v1346
      %v1348 = vpop.f32.mrb[0].mxu0
      %1349 = vmatprep.mubr.bf16.mxu0 0
      %1350 = vmatmul.mubr.bf16.gmra.mrb[0].mxu0 %v1274
      %v1351 = vpop.f32.mrb[0].mxu0
      %v1352 = vadd.f32 %v1184, %v1351
      %v1353 = vpop.f32.mrb[0].mxu0
      %v1354 = vpop.f32.mrb[0].mxu0
      %v1355 = vadd.f32 %v1189, %v1354
      %v1356 = vpop.f32.mrb[0].mxu0
      %1357 = vmatprep.mubr.bf16.mxu0 0
      %1358 = vmatmul.mubr.bf16.gmra.mrb[0].mxu0 %v1277
      %v1359 = vpop.f32.mrb[0].mxu0
      %v1360 = vadd.f32 %v1194, %v1359
      %v1361 = vpop.f32.mrb[0].mxu0
      %v1362 = vpop.f32.mrb[0].mxu0
      %v1363 = vadd.f32 %v1199, %v1362
      %v1364 = vpop.f32.mrb[0].mxu0
      %1365 = vmatprep.mubr.bf16.mxu0 0
      %1366 = vmatmul.mubr.bf16.gmra.mrb[0].mxu0 %v1280
      %v1367 = vpop.f32.mrb[0].mxu0
      %v1368 = vadd.f32 %v1204, %v1367
      %v1369 = vpop.f32.mrb[0].mxu0
      %v1370 = vpop.f32.mrb[0].mxu0
      %v1371 = vadd.f32 %v1209, %v1370
      %v1372 = vpop.f32.mrb[0].mxu0
      %1373 = vmatprep.mubr.bf16.mxu0 0
      %1374 = vmatmul.mubr.bf16.gmra.mrb[0].mxu0 %v1283
      %v1375 = vpop.f32.mrb[0].mxu0
      %v1376 = vadd.f32 %v1214, %v1375
      %v1377 = vpop.f32.mrb[0].mxu0
      %v1378 = vpop.f32.mrb[0].mxu0
      %v1379 = vadd.f32 %v1219, %v1378
      %v1380 = vpop.f32.mrb[0].mxu0
      %1381 = vdwg.mxu0
      %v1382 = vmax.f32 %v1320, 0.0
      %v1383 = vmax.f32 %v1323, 0.0
      %v1384 = vmax.f32 %v1328, 0.0
      %v1385 = vmax.f32 %v1331, 0.0
      %v1386 = vmax.f32 %v1336, 0.0
      %v1387 = vmax.f32 %v1339, 0.0
      %v1388 = vmax.f32 %v1344, 0.0
      %v1389 = vmax.f32 %v1347, 0.0
      %v1390 = vmax.f32 %v1352, 0.0
      %v1391 = vmax.f32 %v1355, 0.0
      %v1392 = vmax.f32 %v1360, 0.0
      %v1393 = vmax.f32 %v1363, 0.0
      %v1394 = vmax.f32 %v1368, 0.0
      %v1395 = vmax.f32 %v1371, 0.0
      %v1396 = vmax.f32 %v1376, 0.0
      %v1397 = vmax.f32 %v1379, 0.0
      %v1398 = vld [vmem:[%s3 + $0x100] sm:$0xff]
      %v1399 = vld [vmem:[%s3 + $0x108] sm:$0xff]
      %v1400 = vld [vmem:[%s3 + $0x110] sm:$0xff]
      %v1401 = vld [vmem:[%s3 + $0x118] sm:$0xff]
      %v1402 = vld [vmem:[%s3 + $0x120] sm:$0xff]
      %v1403 = vld [vmem:[%s3 + $0x128] sm:$0xff]
      %v1404 = vld [vmem:[%s3 + $0x130] sm:$0xff]
      %v1405 = vld [vmem:[%s3 + $0x138] sm:$0xff]
      %v1406 = vld [vmem:[%s3 + $0x140] sm:$0xff]
      %v1407 = vld [vmem:[%s3 + $0x148] sm:$0xff]
      %v1408 = vld [vmem:[%s3 + $0x150] sm:$0xff]
      %v1409 = vld [vmem:[%s3 + $0x158] sm:$0xff]
      %v1410 = vld [vmem:[%s3 + $0x160] sm:$0xff]
      %v1411 = vld [vmem:[%s3 + $0x168] sm:$0xff]
      %v1412 = vld [vmem:[%s3 + $0x170] sm:$0xff]
      %v1413 = vld [vmem:[%s3 + $0x178] sm:$0xff]
      %1415 = vset.pattern.permute.xlu0 0
      %1416 = vperm.xlu0 %1415, %v1398
      %v1417 = vpop.permute.xlu0 %1416
      %1420 = vset.pattern.permute.xlu0 0
      %1421 = vperm.xlu0 %1420, %v1399
      %v1422 = vpop.permute.xlu0 %1421
      %1425 = vset.pattern.permute.xlu0 0
      %1426 = vperm.xlu0 %1425, %v1400
      %v1427 = vpop.permute.xlu0 %1426
      %1430 = vset.pattern.permute.xlu0 0
      %1431 = vperm.xlu0 %1430, %v1401
      %v1432 = vpop.permute.xlu0 %1431
      %1435 = vset.pattern.permute.xlu0 0
      %1436 = vperm.xlu0 %1435, %v1402
      %v1437 = vpop.permute.xlu0 %1436
      %1440 = vset.pattern.permute.xlu0 0
      %1441 = vperm.xlu0 %1440, %v1403
      %v1442 = vpop.permute.xlu0 %1441
      %1445 = vset.pattern.permute.xlu0 0
      %1446 = vperm.xlu0 %1445, %v1404
      %v1447 = vpop.permute.xlu0 %1446
      %1450 = vset.pattern.permute.xlu0 0
      %1451 = vperm.xlu0 %1450, %v1405
      %v1452 = vpop.permute.xlu0 %1451
      %1455 = vset.pattern.permute.xlu0 0
      %1456 = vperm.xlu0 %1455, %v1406
      %v1457 = vpop.permute.xlu0 %1456
      %1460 = vset.pattern.permute.xlu0 0
      %1461 = vperm.xlu0 %1460, %v1407
      %v1462 = vpop.permute.xlu0 %1461
      %1465 = vset.pattern.permute.xlu0 0
      %1466 = vperm.xlu0 %1465, %v1408
      %v1467 = vpop.permute.xlu0 %1466
      %1470 = vset.pattern.permute.xlu0 0
      %1471 = vperm.xlu0 %1470, %v1409
      %v1472 = vpop.permute.xlu0 %1471
      %1475 = vset.pattern.permute.xlu0 0
      %1476 = vperm.xlu0 %1475, %v1410
      %v1477 = vpop.permute.xlu0 %1476
      %1480 = vset.pattern.permute.xlu0 0
      %1481 = vperm.xlu0 %1480, %v1411
      %v1482 = vpop.permute.xlu0 %1481
      %1485 = vset.pattern.permute.xlu0 0
      %1486 = vperm.xlu0 %1485, %v1412
      %v1487 = vpop.permute.xlu0 %1486
      %1490 = vset.pattern.permute.xlu0 0
      %1491 = vperm.xlu0 %1490, %v1413
      %v1492 = vpop.permute.xlu0 %1491
      %v1494 = vmul.f32 %v1382, %v1417
      %v1495 = vmul.f32 %v1383, %v1422
      %v1496 = vmul.f32 %v1384, %v1427
      %v1497 = vmul.f32 %v1385, %v1432
      %v1498 = vmul.f32 %v1386, %v1437
      %v1499 = vmul.f32 %v1387, %v1442
      %v1500 = vmul.f32 %v1388, %v1447
      %v1501 = vmul.f32 %v1389, %v1452
      %v1502 = vmul.f32 %v1390, %v1457
      %v1503 = vmul.f32 %v1391, %v1462
      %v1504 = vmul.f32 %v1392, %v1467
      %v1505 = vmul.f32 %v1393, %v1472
      %v1506 = vmul.f32 %v1394, %v1477
      %v1507 = vmul.f32 %v1395, %v1482
      %v1508 = vmul.f32 %v1396, %v1487
      %v1509 = vmul.f32 %v1397, %v1492
      %v1510 = vadd.f32 %v1494, %v1495
      %v1511 = vadd.f32 %v1510, %v1496
      %v1512 = vadd.f32 %v1511, %v1497
      %v1513 = vadd.f32 %v1512, %v1498
      %v1514 = vadd.f32 %v1513, %v1499
      %v1515 = vadd.f32 %v1514, %v1500
      %v1516 = vadd.f32 %v1515, %v1501
      %v1517 = vadd.f32 %v1516, %v1502
      %v1518 = vadd.f32 %v1517, %v1503
      %v1519 = vadd.f32 %v1518, %v1504
      %v1520 = vadd.f32 %v1519, %v1505
      %v1521 = vadd.f32 %v1520, %v1506
      %v1522 = vadd.f32 %v1521, %v1507
      %v1523 = vadd.f32 %v1522, %v1508
      %v1524 = vadd.f32 %v1523, %v1509
      %v1525 = vrot.slane %v1524, 4
      %v1526 = vadd.f32 %v1524, %v1525
      %v1527 = vrot.slane %v1526, 2
      %v1528 = vadd.f32 %v1526, %v1527
      %v1529 = vrot.slane %v1528, 1
      %v1530 = vadd.f32 %v1528, %v1529
      %v1531 = vadd.f32 %v1108, %v1530
      %v1532 = vld [vmem:[%s1 + $0xc0] sm:$0xf]
      %v1533 = vld [vmem:[%s1 + $0xc4] sm:$0xf]
      %v1534 = vld [vmem:[%s1 + $0xc8] sm:$0xf]
      %v1535 = vld [vmem:[%s1 + $0xcc] sm:$0xf]
      %v1536 = vld [vmem:[%s1 + $0xd0] sm:$0xf]
      %v1537 = vld [vmem:[%s1 + $0xd4] sm:$0xf]
      %v1538 = vld [vmem:[%s1 + $0xd8] sm:$0xf]
      %v1539 = vld [vmem:[%s1 + $0xdc] sm:$0xf]
      %v1540 = vld [vmem:[%s1 + $0xe0] sm:$0xf]
      %v1541 = vld [vmem:[%s1 + $0xe4] sm:$0xf]
      %v1542 = vld [vmem:[%s1 + $0xe8] sm:$0xf]
      %v1543 = vld [vmem:[%s1 + $0xec] sm:$0xf]
      %v1544 = vld [vmem:[%s1 + $0xf0] sm:$0xf]
      %v1545 = vld [vmem:[%s1 + $0xf4] sm:$0xf]
      %v1546 = vld [vmem:[%s1 + $0xf8] sm:$0xf]
      %v1547 = vld [vmem:[%s1 + $0xfc] sm:$0xf]
      %v1548 = vld [vmem:[%s2 + $0x180] sm:$0xff]
      %v1549 = vld [vmem:[%s2 + $0x188] sm:$0xff]
      %v1550 = vld [vmem:[%s2 + $0x190] sm:$0xff]
      %v1551 = vld [vmem:[%s2 + $0x198] sm:$0xff]
      %v1552 = vld [vmem:[%s2 + $0x1a0] sm:$0xff]
      %v1553 = vld [vmem:[%s2 + $0x1a8] sm:$0xff]
      %v1554 = vld [vmem:[%s2 + $0x1b0] sm:$0xff]
      %v1555 = vld [vmem:[%s2 + $0x1b8] sm:$0xff]
      %v1556 = vld [vmem:[%s2 + $0x1c0] sm:$0xff]
      %v1557 = vld [vmem:[%s2 + $0x1c8] sm:$0xff]
      %v1558 = vld [vmem:[%s2 + $0x1d0] sm:$0xff]
      %v1559 = vld [vmem:[%s2 + $0x1d8] sm:$0xff]
      %v1560 = vld [vmem:[%s2 + $0x1e0] sm:$0xff]
      %v1561 = vld [vmem:[%s2 + $0x1e8] sm:$0xff]
      %v1562 = vld [vmem:[%s2 + $0x1f0] sm:$0xff]
      %v1563 = vld [vmem:[%s2 + $0x1f8] sm:$0xff]
      %1565 = vset.pattern.permute.xlu0 0
      %1566 = vperm.xlu0 %1565, %v1548
      %v1567 = vpop.permute.xlu0 %1566
      %1570 = vset.pattern.permute.xlu0 0
      %1571 = vperm.xlu0 %1570, %v1549
      %v1572 = vpop.permute.xlu0 %1571
      %1575 = vset.pattern.permute.xlu0 0
      %1576 = vperm.xlu0 %1575, %v1550
      %v1577 = vpop.permute.xlu0 %1576
      %1580 = vset.pattern.permute.xlu0 0
      %1581 = vperm.xlu0 %1580, %v1551
      %v1582 = vpop.permute.xlu0 %1581
      %1585 = vset.pattern.permute.xlu0 0
      %1586 = vperm.xlu0 %1585, %v1552
      %v1587 = vpop.permute.xlu0 %1586
      %1590 = vset.pattern.permute.xlu0 0
      %1591 = vperm.xlu0 %1590, %v1553
      %v1592 = vpop.permute.xlu0 %1591
      %1595 = vset.pattern.permute.xlu0 0
      %1596 = vperm.xlu0 %1595, %v1554
      %v1597 = vpop.permute.xlu0 %1596
      %1600 = vset.pattern.permute.xlu0 0
      %1601 = vperm.xlu0 %1600, %v1555
      %v1602 = vpop.permute.xlu0 %1601
      %1605 = vset.pattern.permute.xlu0 0
      %1606 = vperm.xlu0 %1605, %v1556
      %v1607 = vpop.permute.xlu0 %1606
      %1610 = vset.pattern.permute.xlu0 0
      %1611 = vperm.xlu0 %1610, %v1557
      %v1612 = vpop.permute.xlu0 %1611
      %1615 = vset.pattern.permute.xlu0 0
      %1616 = vperm.xlu0 %1615, %v1558
      %v1617 = vpop.permute.xlu0 %1616
      %1620 = vset.pattern.permute.xlu0 0
      %1621 = vperm.xlu0 %1620, %v1559
      %v1622 = vpop.permute.xlu0 %1621
      %1625 = vset.pattern.permute.xlu0 0
      %1626 = vperm.xlu0 %1625, %v1560
      %v1627 = vpop.permute.xlu0 %1626
      %1630 = vset.pattern.permute.xlu0 0
      %1631 = vperm.xlu0 %1630, %v1561
      %v1632 = vpop.permute.xlu0 %1631
      %1635 = vset.pattern.permute.xlu0 0
      %1636 = vperm.xlu0 %1635, %v1562
      %v1637 = vpop.permute.xlu0 %1636
      %1640 = vset.pattern.permute.xlu0 0
      %1641 = vperm.xlu0 %1640, %v1563
      %v1642 = vpop.permute.xlu0 %1641
      %v1660 = vunpack.c.l.b16 %v1532
      %v1661 = vunpack.c.l.b16 %v1533
      %v1662 = vunpack.c.l.b16 %v1534
      %v1663 = vunpack.c.l.b16 %v1535
      %v1664 = vunpack.c.l.b16 %v1536
      %v1665 = vunpack.c.l.b16 %v1537
      %v1666 = vunpack.c.l.b16 %v1538
      %v1667 = vunpack.c.l.b16 %v1539
      %v1668 = vunpack.c.l.b16 %v1540
      %v1669 = vunpack.c.l.b16 %v1541
      %v1670 = vunpack.c.l.b16 %v1542
      %v1671 = vunpack.c.l.b16 %v1543
      %v1672 = vunpack.c.l.b16 %v1544
      %v1673 = vunpack.c.l.b16 %v1545
      %v1674 = vunpack.c.l.b16 %v1546
      %v1675 = vunpack.c.l.b16 %v1547
      %v1676 = vpack.c.b16 %v1661, %v1660
      %v1677 = vpack.c.b16 %v1663, %v1662
      %v1678 = vpack.c.b16 %v1665, %v1664
      %v1679 = vpack.c.b16 %v1667, %v1666
      %v1680 = vpack.c.b16 %v1669, %v1668
      %v1681 = vpack.c.b16 %v1671, %v1670
      %v1682 = vpack.c.b16 %v1673, %v1672
      %v1683 = vpack.c.b16 %v1675, %v1674
      %v1685 = vsel %vm410, %v1676, 0
      %v1688 = vsel %vm410, %v1677, 0
      %v1691 = vsel %vm410, %v1678, 0
      %v1694 = vsel %vm410, %v1679, 0
      %v1697 = vsel %vm410, %v1680, 0
      %v1700 = vsel %vm410, %v1681, 0
      %v1703 = vsel %vm410, %v1682, 0
      %v1706 = vsel %vm410, %v1683, 0
      %1708 = vmatprep.subr.bf16.mxu0 0
      %1709 = vmatpush1.bf16.msra.mxu0 %v437
      %1710 = vmatprep.subr.bf16.mxu0 0
      %1711 = vmatpush1.bf16.msra.mxu0 0
      %1712 = vmatprep.subr.bf16.mxu0 0
      %1713 = vmatpush1.bf16.msra.mxu0 0
      %1714 = vmatprep.subr.bf16.mxu0 0
      %1715 = vmatpush1.bf16.msra.mxu0 0
      %1716 = vmatprep.subr.bf16.mxu0 0
      %1717 = vmatpush1.bf16.msra.mxu0 0
      %1718 = vmatprep.subr.bf16.mxu0 0
      %1719 = vmatpush1.bf16.msra.mxu0 0
      %1720 = vmatprep.subr.bf16.mxu0 0
      %1721 = vmatpush1.bf16.msra.mxu0 0
      %1722 = vmatprep.subr.bf16.mxu0 0
      %1723 = vmatpush1.bf16.msra.mxu0 0
      %1724 = vmatprep.subr.bf16.mxu0 0
      %1725 = vmatpush1.bf16.msra.mxu0 0
      %1726 = vmatprep.subr.bf16.mxu0 0
      %1727 = vmatpush1.bf16.msra.mxu0 0
      %1728 = vmatprep.subr.bf16.mxu0 0
      %1729 = vmatpush1.bf16.msra.mxu0 0
      %1730 = vmatprep.subr.bf16.mxu0 0
      %1731 = vmatpush1.bf16.msra.mxu0 0
      %1732 = vmatprep.subr.bf16.mxu0 0
      %1733 = vmatpush1.bf16.msra.mxu0 0
      %1734 = vmatprep.subr.bf16.mxu0 0
      %1735 = vmatpush1.bf16.msra.mxu0 0
      %1736 = vmatprep.subr.bf16.mxu0 0
      %1737 = vmatpush1.bf16.msra.mxu0 0
      %1738 = vmatprep.subr.bf16.mxu0 0
      %1739 = vmatpush1.bf16.msra.mxu0 0
      %1740 = vmatprep.mubr.bf16.mxu0 0
      %1741 = vmatmul.mubr.bf16.gmra.mrb[0].mxu0 %v1685
      %v1742 = vpop.f32.mrb[0].mxu0
      %v1743 = vadd.f32 %v1567, %v1742
      %v1744 = vpop.f32.mrb[0].mxu0
      %v1745 = vpop.f32.mrb[0].mxu0
      %v1746 = vadd.f32 %v1572, %v1745
      %v1747 = vpop.f32.mrb[0].mxu0
      %1748 = vmatprep.mubr.bf16.mxu0 0
      %1749 = vmatmul.mubr.bf16.gmra.mrb[0].mxu0 %v1688
      %v1750 = vpop.f32.mrb[0].mxu0
      %v1751 = vadd.f32 %v1577, %v1750
      %v1752 = vpop.f32.mrb[0].mxu0
      %v1753 = vpop.f32.mrb[0].mxu0
      %v1754 = vadd.f32 %v1582, %v1753
      %v1755 = vpop.f32.mrb[0].mxu0
      %1756 = vmatprep.mubr.bf16.mxu0 0
      %1757 = vmatmul.mubr.bf16.gmra.mrb[0].mxu0 %v1691
      %v1758 = vpop.f32.mrb[0].mxu0
      %v1759 = vadd.f32 %v1587, %v1758
      %v1760 = vpop.f32.mrb[0].mxu0
      %v1761 = vpop.f32.mrb[0].mxu0
      %v1762 = vadd.f32 %v1592, %v1761
      %v1763 = vpop.f32.mrb[0].mxu0
      %1764 = vmatprep.mubr.bf16.mxu0 0
      %1765 = vmatmul.mubr.bf16.gmra.mrb[0].mxu0 %v1694
      %v1766 = vpop.f32.mrb[0].mxu0
      %v1767 = vadd.f32 %v1597, %v1766
      %v1768 = vpop.f32.mrb[0].mxu0
      %v1769 = vpop.f32.mrb[0].mxu0
      %v1770 = vadd.f32 %v1602, %v1769
      %v1771 = vpop.f32.mrb[0].mxu0
      %1772 = vmatprep.mubr.bf16.mxu0 0
      %1773 = vmatmul.mubr.bf16.gmra.mrb[0].mxu0 %v1697
      %v1774 = vpop.f32.mrb[0].mxu0
      %v1775 = vadd.f32 %v1607, %v1774
      %v1776 = vpop.f32.mrb[0].mxu0
      %v1777 = vpop.f32.mrb[0].mxu0
      %v1778 = vadd.f32 %v1612, %v1777
      %v1779 = vpop.f32.mrb[0].mxu0
      %1780 = vmatprep.mubr.bf16.mxu0 0
      %1781 = vmatmul.mubr.bf16.gmra.mrb[0].mxu0 %v1700
      %v1782 = vpop.f32.mrb[0].mxu0
      %v1783 = vadd.f32 %v1617, %v1782
      %v1784 = vpop.f32.mrb[0].mxu0
      %v1785 = vpop.f32.mrb[0].mxu0
      %v1786 = vadd.f32 %v1622, %v1785
      %v1787 = vpop.f32.mrb[0].mxu0
      %1788 = vmatprep.mubr.bf16.mxu0 0
      %1789 = vmatmul.mubr.bf16.gmra.mrb[0].mxu0 %v1703
      %v1790 = vpop.f32.mrb[0].mxu0
      %v1791 = vadd.f32 %v1627, %v1790
      %v1792 = vpop.f32.mrb[0].mxu0
      %v1793 = vpop.f32.mrb[0].mxu0
      %v1794 = vadd.f32 %v1632, %v1793
      %v1795 = vpop.f32.mrb[0].mxu0
      %1796 = vmatprep.mubr.bf16.mxu0 0
      %1797 = vmatmul.mubr.bf16.gmra.mrb[0].mxu0 %v1706
      %v1798 = vpop.f32.mrb[0].mxu0
      %v1799 = vadd.f32 %v1637, %v1798
      %v1800 = vpop.f32.mrb[0].mxu0
      %v1801 = vpop.f32.mrb[0].mxu0
      %v1802 = vadd.f32 %v1642, %v1801
      %v1803 = vpop.f32.mrb[0].mxu0
      %1804 = vdwg.mxu0
      %v1805 = vmax.f32 %v1743, 0.0
      %v1806 = vmax.f32 %v1746, 0.0
      %v1807 = vmax.f32 %v1751, 0.0
      %v1808 = vmax.f32 %v1754, 0.0
      %v1809 = vmax.f32 %v1759, 0.0
      %v1810 = vmax.f32 %v1762, 0.0
      %v1811 = vmax.f32 %v1767, 0.0
      %v1812 = vmax.f32 %v1770, 0.0
      %v1813 = vmax.f32 %v1775, 0.0
      %v1814 = vmax.f32 %v1778, 0.0
      %v1815 = vmax.f32 %v1783, 0.0
      %v1816 = vmax.f32 %v1786, 0.0
      %v1817 = vmax.f32 %v1791, 0.0
      %v1818 = vmax.f32 %v1794, 0.0
      %v1819 = vmax.f32 %v1799, 0.0
      %v1820 = vmax.f32 %v1802, 0.0
      %v1821 = vld [vmem:[%s3 + $0x180] sm:$0xff]
      %v1822 = vld [vmem:[%s3 + $0x188] sm:$0xff]
      %v1823 = vld [vmem:[%s3 + $0x190] sm:$0xff]
      %v1824 = vld [vmem:[%s3 + $0x198] sm:$0xff]
      %v1825 = vld [vmem:[%s3 + $0x1a0] sm:$0xff]
      %v1826 = vld [vmem:[%s3 + $0x1a8] sm:$0xff]
      %v1827 = vld [vmem:[%s3 + $0x1b0] sm:$0xff]
      %v1828 = vld [vmem:[%s3 + $0x1b8] sm:$0xff]
      %v1829 = vld [vmem:[%s3 + $0x1c0] sm:$0xff]
      %v1830 = vld [vmem:[%s3 + $0x1c8] sm:$0xff]
      %v1831 = vld [vmem:[%s3 + $0x1d0] sm:$0xff]
      %v1832 = vld [vmem:[%s3 + $0x1d8] sm:$0xff]
      %v1833 = vld [vmem:[%s3 + $0x1e0] sm:$0xff]
      %v1834 = vld [vmem:[%s3 + $0x1e8] sm:$0xff]
      %v1835 = vld [vmem:[%s3 + $0x1f0] sm:$0xff]
      %v1836 = vld [vmem:[%s3 + $0x1f8] sm:$0xff]
      %1838 = vset.pattern.permute.xlu0 0
      %1839 = vperm.xlu0 %1838, %v1821
      %v1840 = vpop.permute.xlu0 %1839
      %1843 = vset.pattern.permute.xlu0 0
      %1844 = vperm.xlu0 %1843, %v1822
      %v1845 = vpop.permute.xlu0 %1844
      %1848 = vset.pattern.permute.xlu0 0
      %1849 = vperm.xlu0 %1848, %v1823
      %v1850 = vpop.permute.xlu0 %1849
      %1853 = vset.pattern.permute.xlu0 0
      %1854 = vperm.xlu0 %1853, %v1824
      %v1855 = vpop.permute.xlu0 %1854
      %1858 = vset.pattern.permute.xlu0 0
      %1859 = vperm.xlu0 %1858, %v1825
      %v1860 = vpop.permute.xlu0 %1859
      %1863 = vset.pattern.permute.xlu0 0
      %1864 = vperm.xlu0 %1863, %v1826
      %v1865 = vpop.permute.xlu0 %1864
      %1868 = vset.pattern.permute.xlu0 0
      %1869 = vperm.xlu0 %1868, %v1827
      %v1870 = vpop.permute.xlu0 %1869
      %1873 = vset.pattern.permute.xlu0 0
      %1874 = vperm.xlu0 %1873, %v1828
      %v1875 = vpop.permute.xlu0 %1874
      %1878 = vset.pattern.permute.xlu0 0
      %1879 = vperm.xlu0 %1878, %v1829
      %v1880 = vpop.permute.xlu0 %1879
      %1883 = vset.pattern.permute.xlu0 0
      %1884 = vperm.xlu0 %1883, %v1830
      %v1885 = vpop.permute.xlu0 %1884
      %1888 = vset.pattern.permute.xlu0 0
      %1889 = vperm.xlu0 %1888, %v1831
      %v1890 = vpop.permute.xlu0 %1889
      %1893 = vset.pattern.permute.xlu0 0
      %1894 = vperm.xlu0 %1893, %v1832
      %v1895 = vpop.permute.xlu0 %1894
      %1898 = vset.pattern.permute.xlu0 0
      %1899 = vperm.xlu0 %1898, %v1833
      %v1900 = vpop.permute.xlu0 %1899
      %1903 = vset.pattern.permute.xlu0 0
      %1904 = vperm.xlu0 %1903, %v1834
      %v1905 = vpop.permute.xlu0 %1904
      %1908 = vset.pattern.permute.xlu0 0
      %1909 = vperm.xlu0 %1908, %v1835
      %v1910 = vpop.permute.xlu0 %1909
      %1913 = vset.pattern.permute.xlu0 0
      %1914 = vperm.xlu0 %1913, %v1836
      %v1915 = vpop.permute.xlu0 %1914
      %v1917 = vmul.f32 %v1805, %v1840
      %v1918 = vmul.f32 %v1806, %v1845
      %v1919 = vmul.f32 %v1807, %v1850
      %v1920 = vmul.f32 %v1808, %v1855
      %v1921 = vmul.f32 %v1809, %v1860
      %v1922 = vmul.f32 %v1810, %v1865
      %v1923 = vmul.f32 %v1811, %v1870
      %v1924 = vmul.f32 %v1812, %v1875
      %v1925 = vmul.f32 %v1813, %v1880
      %v1926 = vmul.f32 %v1814, %v1885
      %v1927 = vmul.f32 %v1815, %v1890
      %v1928 = vmul.f32 %v1816, %v1895
      %v1929 = vmul.f32 %v1817, %v1900
      %v1930 = vmul.f32 %v1818, %v1905
      %v1931 = vmul.f32 %v1819, %v1910
      %v1932 = vmul.f32 %v1820, %v1915
      %v1933 = vadd.f32 %v1917, %v1918
      %v1934 = vadd.f32 %v1933, %v1919
      %v1935 = vadd.f32 %v1934, %v1920
      %v1936 = vadd.f32 %v1935, %v1921
      %v1937 = vadd.f32 %v1936, %v1922
      %v1938 = vadd.f32 %v1937, %v1923
      %v1939 = vadd.f32 %v1938, %v1924
      %v1940 = vadd.f32 %v1939, %v1925
      %v1941 = vadd.f32 %v1940, %v1926
      %v1942 = vadd.f32 %v1941, %v1927
      %v1943 = vadd.f32 %v1942, %v1928
      %v1944 = vadd.f32 %v1943, %v1929
      %v1945 = vadd.f32 %v1944, %v1930
      %v1946 = vadd.f32 %v1945, %v1931
      %v1947 = vadd.f32 %v1946, %v1932
      %v1948 = vrot.slane %v1947, 4
      %v1949 = vadd.f32 %v1947, %v1948
      %v1950 = vrot.slane %v1949, 2
      %v1951 = vadd.f32 %v1949, %v1950
      %v1952 = vrot.slane %v1951, 1
      %v1953 = vadd.f32 %v1951, %v1952
      %v1954 = vadd.f32 %v1531, %v1953
      %s1955 = sld [smem:[#allocation2]]
      %v1956 = vstv %s1955
      %v1957 = vadd.f32 %v1954, %v1956
      %1958 = vst [vmem:[%s254] sm:$0x1] %v1957
      %p1959 = scmp.lt.s32.totalorder %s21, 1
      %s1960 = scalar_select %p1959, %s21, 1
      %p1961 = scmp.lt.s32.totalorder %s22, 1
      %s1962 = scalar_select %p1961, %s22, 1
      %s1963 = smul.addr %s1960, 2
      %s1964 = sadd.s32 %s1962, %s1963
      %s1965 = scalar_lea.vmem %s5, %s1964
      // Predicated region
      $region41: #{da_feature_head.1} parent=39 // pred_check
        %p1966 = pneg %p161
      $region42: #{da_feature_head.1} parent=39 // pred_check_branch
        %1968 = sbr.rel (%p1966) target = $region44
      $region43: #{da_feature_head.1} parent=39 // pred_region
        _
      $region44: #{da_feature_head.1} parent=39 // pred_fallthru
        _
    $region40: #{da_feature_head.1} parent=5 // pred_fallthru
      _
    %p1969 = scmp.le.s32.totalorder 2, %s12
    // Predicated region
    $region45: #{da_feature_head.1} parent=5 // pred_check
      %p1970 = pneg %p1969
    $region46: #{da_feature_head.1} parent=5 // pred_check_branch
      %1972 = sbr.rel (%p1970) target = $region48
    $region47: #{da_feature_head.1} parent=5 // pred_region
      %s1973 = ssub.s32 %s12, 2
      // Predicated region
      $region49: #{da_feature_head.1} parent=47 // pred_check
        %p1974 = pneg %p167
      $region50: #{da_feature_head.1} parent=47 // pred_check_branch
        %1976 = sbr.rel (%p1974) target = $region52
      $region51: #{da_feature_head.1} parent=47 // pred_region
        %p1977 = scmp.lt.s32.totalorder %s23, 1
        %s1978 = scalar_select %p1977, %s23, 1
        %p1979 = scmp.lt.s32.totalorder %s24, 1
        %s1980 = scalar_select %p1979, %s24, 1
        %s1981 = smul.addr %s1978, 2
        %s1982 = sadd.s32 %s1980, %s1981
        %s1983 = scalar_lea.vmem %s5, %s1982
      $region52: #{da_feature_head.1} parent=47 // pred_fallthru
        _
    $region48: #{da_feature_head.1} parent=5 // pred_fallthru
      _
  $region6: #{da_feature_head.1} parent=0 // loop_footer
    %s16 = sadd.s32 1, %s12
  $region7: #{da_feature_head.1} parent=0 // loop_footer_branch
    %11 = sbr.rel target = $region3
  $region8: #{da_feature_head.1} parent=0 // loop_exit
    _

</llo_original>
